<compile_context>
chip_gen: v5e
topology: v5e:2x2
jax: 0.10.0
libtpu: 0.0.40
codegen_flags: <defaults>
</compile_context>

<pallas_src>
import math

import jax
import jax.numpy as jnp
from jax import lax
from jax.experimental import pallas as pl
from jax.experimental.pallas import tpu as pltpu

# ----------------------------- model dimensions ------------------------------
B, S = 2, 8            # batch, sequence length
H = 128                # hidden size (DistilBERT: 768 -> scaled to 128)
NH, DH = 4, 32         # num heads, head dim (NH*DH == H)
FFN = 4 * H            # feed-forward width
L = 2                  # transformer layers (DistilBERT: 6 -> scaled to 2)
VOCAB = 100
MAX_POS = 16
N_COLOR = 9            # len(color_palette)
N_SHAPE = 4
HEAD_PAD = 128         # fused color||shape head padded to a lane-dense width
LN_EPS = 1e-12         # DistilBERT LayerNorm eps
NEG = -1e9             # additive mask value for padded positions
BS = B * S
BH = NH * B            # batched-attention leading dim (index = head*B + batch)


# ------------------------------ in-kernel math -------------------------------
def _layernorm(x, g, b):
    # single-pass variance (E[x^2] - mu^2): two back-to-back lane reductions,
    # no (x - mu)^2 temporary.
    mu = jnp.mean(x, axis=-1, keepdims=True)
    var = jnp.mean(x * x, axis=-1, keepdims=True) - mu * mu
    return (x - mu) * lax.rsqrt(var + LN_EPS) * g + b


def _gelu(x):
    # exact (erf-based) GELU, as used by DistilBERT.
    # (a tanh-approx variant would ride the EUP slot on v5e, at small numeric cost)
    return 0.5 * x * (1.0 + lax.erf(x * (1.0 / math.sqrt(2.0))))


def _softmax(x):
    # NOTE: a fully-masked row would be 0/0 here; inputs always keep CLS unmasked.
    m = jnp.max(x, axis=-1, keepdims=True)
    e = jnp.exp(x - m)
    return e * pl.reciprocal(jnp.sum(e, axis=-1, keepdims=True), approx=True)


# --------------------------------- kernel ------------------------------------
def bert_heads_kernel(
    x_ref,       # (B*S, H)      f32 word+pos embeddings (pre-LayerNorm), flattened
    maskb_ref,   # (NH*B, S, S)  f32 additive attention-mask bias (0 or NEG)
    eg_ref, eb_ref,                       # (1, H) embedding LayerNorm gamma/beta
    wqkv_ref, bqkv_ref,                   # (L, H, 3H) bf16, (L, 1, 3H) f32 (QKV fused,
                                          #  softmax scale folded into the Q block)
    wo_ref, bo_ref,                       # (L, H, H) bf16, (L, 1, H) f32
    ln1g_ref, ln1b_ref,                   # (L, 1, H)
    w1_ref, b1_ref,                       # (L, H, FFN) bf16, (L, 1, FFN)
    w2_ref, b2_ref,                       # (L, FFN, H) bf16, (L, 1, H)
    ln2g_ref, ln2b_ref,                   # (L, 1, H)
    wh_ref, bh_ref,                       # (H, HEAD_PAD) bf16, (1, HEAD_PAD) fused heads
    out_ref,                              # out: (B*S, HEAD_PAD) f32 (lane+sublane dense)
):
    # embedding LayerNorm on the whole (B*S, H) tile
    h = _layernorm(x_ref[...], eg_ref[...], eb_ref[...])            # f32 (16, 128)
    maskb = maskb_ref[...]                                          # hoisted once

    for l in range(L):                                              # static layer loop
        hb = h.astype(jnp.bfloat16)

        # one fused lane-dense (B*S,H)x(H,3H) projection (scale already folded into Q)
        qkv = (jnp.dot(hb, wqkv_ref[l], preferred_element_type=jnp.float32)
               + bqkv_ref[l])                                       # (16, 384) f32

        def to_heads(base):
            # regroup lane blocks into a (NH*B, S, DH) batched-head tensor
            # (batch index = head*B + b): per-head lane slice + leading-dim reshape
            # + leading-dim concat only — no transposes.
            return jnp.concatenate(
                [qkv[:, base + hd * DH: base + (hd + 1) * DH].reshape(B, S, DH)
                 for hd in range(NH)],
                axis=0).astype(jnp.bfloat16)

        q3, k3, v3 = to_heads(0), to_heads(H), to_heads(2 * H)      # (8, 8, 32) bf16

        # one batched score matmul + softmax + context matmul for all B*NH heads
        s = jnp.einsum("bqd,bkd->bqk", q3, k3,
                       preferred_element_type=jnp.float32)          # (8, 8, 8) f32
        p = _softmax(s + maskb)
        ctx3 = jnp.einsum("bqk,bkd->bqd", p.astype(jnp.bfloat16), v3,
                          preferred_element_type=jnp.float32)       # (8, 8, 32) f32

        # back to (B*S, H): leading-dim slices + one lane concat
        ctx = jnp.concatenate(
            [ctx3[hd * B:(hd + 1) * B].reshape(BS, DH) for hd in range(NH)],
            axis=-1)                                                # (16, 128) f32

        # single fused output projection (concat-heads @ Wo)
        attn_out = (jnp.dot(ctx.astype(jnp.bfloat16), wo_ref[l],
                            preferred_element_type=jnp.float32) + bo_ref[l])
        h = _layernorm(h + attn_out, ln1g_ref[l], ln1b_ref[l])      # post-LN

        # ------------------------------- FFN ---------------------------------
        ff = _gelu(jnp.dot(h.astype(jnp.bfloat16), w1_ref[l],
                           preferred_element_type=jnp.float32) + b1_ref[l])
        ff = jnp.dot(ff.astype(jnp.bfloat16), w2_ref[l],
                     preferred_element_type=jnp.float32) + b2_ref[l]
        h = _layernorm(h + ff, ln2g_ref[l], ln2b_ref[l])            # post-LN

    # fused, lane-padded color||shape head over the full tile -> one MXU matmul and a
    # full (16,128) unmasked store; CLS rows (b*S) are selected in the wrapper.
    out_ref[...] = (jnp.dot(h.astype(jnp.bfloat16), wh_ref[...],
                            preferred_element_type=jnp.float32) + bh_ref[...])


# ------------------------------ parameter init -------------------------------
def init_params(key):
    ks = iter(jax.random.split(key, 12))

    def nrm(shape):
        return 0.02 * jax.random.normal(next(ks), shape, jnp.float32)

    zeros = lambda s: jnp.zeros(s, jnp.float32)
    ones = lambda s: jnp.ones(s, jnp.float32)

    scale = 1.0 / math.sqrt(DH)
    # fused QKV weights; the 1/sqrt(DH) softmax scale is folded into the Q block
    # (the Q bias slice would also be scaled — it is zero here).
    wq = nrm((L, H, H)) * scale
    wk = nrm((L, H, H))
    wv = nrm((L, H, H))
    wqkv = jnp.concatenate([wq, wk, wv], axis=-1).astype(jnp.bfloat16)   # (L, H, 3H)
    bqkv = zeros((L, 1, 3 * H))

    # fused color||shape head, padded to HEAD_PAD lanes (cols 0:9 color, 9:13 shape)
    wc = nrm((H, N_COLOR))
    wsh = nrm((H, N_SHAPE))
    wh = jnp.zeros((H, HEAD_PAD), jnp.float32)
    wh = wh.at[:, :N_COLOR].set(wc).at[:, N_COLOR:N_COLOR + N_SHAPE].set(wsh)

    return dict(
        word_emb=nrm((VOCAB, H)),
        pos_emb=nrm((MAX_POS, H)),
        eg=ones((1, H)), eb=zeros((1, H)),
        wqkv=wqkv, bqkv=bqkv,
        wo=nrm((L, H, H)).astype(jnp.bfloat16), bo=zeros((L, 1, H)),
        ln1g=ones((L, 1, H)), ln1b=zeros((L, 1, H)),
        w1=nrm((L, H, FFN)).astype(jnp.bfloat16), b1=zeros((L, 1, FFN)),
        w2=nrm((L, FFN, H)).astype(jnp.bfloat16), b2=zeros((L, 1, H)),
        ln2g=ones((L, 1, H)), ln2b=zeros((L, 1, H)),
        wh=wh.astype(jnp.bfloat16), bh=zeros((1, HEAD_PAD)),
    )


# --------------------------------- wrapper -----------------------------------
def color_shape_forward(params, input_ids, attention_mask):
    # glue (plain JAX): embedding gather + position embeddings, mask -> additive bias
    pos = jnp.arange(S)
    x = params["word_emb"][input_ids] + params["pos_emb"][pos][None, :, :]   # (B,S,H)
    x = x.reshape(BS, H).astype(jnp.float32)                                 # (B*S,H)

    # additive mask bias, pre-broadcast to the batched-head (head*B + b, S, S) layout
    bias = (1.0 - attention_mask.astype(jnp.float32)) * NEG                  # (B, S)
    maskb = jnp.broadcast_to(bias[None, :, None, :], (NH, B, S, S)).reshape(BH, S, S)

    vmem = pltpu.MemorySpace.VMEM
    n_inputs = 18
    logits_all = pl.pallas_call(
        bert_heads_kernel,
        out_shape=jax.ShapeDtypeStruct((BS, HEAD_PAD), jnp.float32),
        in_specs=[pl.BlockSpec(memory_space=vmem)] * n_inputs,
        out_specs=pl.BlockSpec(memory_space=vmem),
    )(
        x, maskb,
        params["eg"], params["eb"],
        params["wqkv"], params["bqkv"],
        params["wo"], params["bo"],
        params["ln1g"], params["ln1b"],
        params["w1"], params["b1"],
        params["w2"], params["b2"],
        params["ln2g"], params["ln2b"],
        params["wh"], params["bh"],
    )
    logits = logits_all.reshape(B, S, HEAD_PAD)[:, 0, :]      # CLS rows ([:, 0])
    color = logits[:, :N_COLOR]
    shape_logits = logits[:, N_COLOR:N_COLOR + N_SHAPE]
    return color, shape_logits


# ----------------------------------- main -------------------------------------
if __name__ == "__main__":
    key = jax.random.PRNGKey(0)
    k_param, k_ids = jax.random.split(key)

    params = init_params(k_param)
    input_ids = jax.random.randint(k_ids, (B, S), 0, VOCAB, dtype=jnp.int32)
    attention_mask = jnp.array(
        [[1, 1, 1, 1, 1, 1, 1, 1],
         [1, 1, 1, 1, 1, 0, 0, 0]], dtype=jnp.int32)

    color, shape_logits = jax.jit(color_shape_forward)(params, input_ids, attention_mask)
    jax.block_until_ready((color, shape_logits))
    assert color.shape == (B, N_COLOR) and shape_logits.shape == (B, N_SHAPE)
    assert bool(jnp.isfinite(color).all()) and bool(jnp.isfinite(shape_logits).all())
    print("KERNEL_OK")
</pallas_src>

<mosaic_0001>
module attributes {stable_mosaic.version = 11 : i64} {
  func.func @bert_heads_kernel(%arg0: memref<16x128xf32, #tpu.memory_space<vmem>>, %arg1: memref<8x8x8xf32, #tpu.memory_space<vmem>>, %arg2: memref<1x128xf32, #tpu.memory_space<vmem>>, %arg3: memref<1x128xf32, #tpu.memory_space<vmem>>, %arg4: memref<2x128x384xbf16, #tpu.memory_space<vmem>>, %arg5: memref<2x1x384xf32, #tpu.memory_space<vmem>>, %arg6: memref<2x128x128xbf16, #tpu.memory_space<vmem>>, %arg7: memref<2x1x128xf32, #tpu.memory_space<vmem>>, %arg8: memref<2x1x128xf32, #tpu.memory_space<vmem>>, %arg9: memref<2x1x128xf32, #tpu.memory_space<vmem>>, %arg10: memref<2x128x512xbf16, #tpu.memory_space<vmem>>, %arg11: memref<2x1x512xf32, #tpu.memory_space<vmem>>, %arg12: memref<2x512x128xbf16, #tpu.memory_space<vmem>>, %arg13: memref<2x1x128xf32, #tpu.memory_space<vmem>>, %arg14: memref<2x1x128xf32, #tpu.memory_space<vmem>>, %arg15: memref<2x1x128xf32, #tpu.memory_space<vmem>>, %arg16: memref<128x128xbf16, #tpu.memory_space<vmem>>, %arg17: memref<1x128xf32, #tpu.memory_space<vmem>>, %arg18: memref<16x128xf32, #tpu.memory_space<vmem>>) attributes {dimension_semantics = [], scalar_prefetch = 0 : i64, scratch_operands = 0 : i64, tpu.core_type = #tpu.core_type<tc>} {
    %c0 = arith.constant 0 : index
    %c0_0 = arith.constant 0 : index
    %0 = vector.load %arg0[%c0, %c0_0] : memref<16x128xf32, #tpu.memory_space<vmem>>, vector<16x128xf32>
    %c0_1 = arith.constant 0 : index
    %c0_2 = arith.constant 0 : index
    %1 = vector.load %arg2[%c0_1, %c0_2] : memref<1x128xf32, #tpu.memory_space<vmem>>, vector<1x128xf32>
    %c0_3 = arith.constant 0 : index
    %c0_4 = arith.constant 0 : index
    %2 = vector.load %arg3[%c0_3, %c0_4] : memref<1x128xf32, #tpu.memory_space<vmem>>, vector<1x128xf32>
    %cst = arith.constant dense<0.000000e+00> : vector<16xf32>
    %3 = vector.multi_reduction <add>, %0, %cst [1] : vector<16x128xf32> to vector<16xf32>
    %4 = vector.shape_cast %3 : vector<16xf32> to vector<16x1xf32>
    %cst_5 = arith.constant 1.280000e+02 : f32
    %5 = vector.broadcast %cst_5 : f32 to vector<16x1xf32>
    %6 = arith.divf %4, %5 : vector<16x1xf32>
    %7 = arith.mulf %0, %0 : vector<16x128xf32>
    %cst_6 = arith.constant dense<0.000000e+00> : vector<16xf32>
    %8 = vector.multi_reduction <add>, %7, %cst_6 [1] : vector<16x128xf32> to vector<16xf32>
    %9 = vector.shape_cast %8 : vector<16xf32> to vector<16x1xf32>
    %cst_7 = arith.constant 1.280000e+02 : f32
    %10 = vector.broadcast %cst_7 : f32 to vector<16x1xf32>
    %11 = arith.divf %9, %10 : vector<16x1xf32>
    %12 = arith.mulf %6, %6 : vector<16x1xf32>
    %13 = arith.subf %11, %12 : vector<16x1xf32>
    %14 = vector.broadcast %6 : vector<16x1xf32> to vector<16x128xf32>
    %15 = arith.subf %0, %14 : vector<16x128xf32>
    %cst_8 = arith.constant 9.99999996E-13 : f32
    %16 = vector.broadcast %cst_8 : f32 to vector<16x1xf32>
    %17 = arith.addf %13, %16 : vector<16x1xf32>
    %18 = math.rsqrt %17 : vector<16x1xf32>
    %19 = vector.broadcast %18 : vector<16x1xf32> to vector<16x128xf32>
    %20 = arith.mulf %15, %19 : vector<16x128xf32>
    %21 = vector.broadcast %1 : vector<1x128xf32> to vector<16x128xf32>
    %22 = arith.mulf %20, %21 : vector<16x128xf32>
    %23 = vector.broadcast %2 : vector<1x128xf32> to vector<16x128xf32>
    %24 = arith.addf %22, %23 : vector<16x128xf32>
    %c0_9 = arith.constant 0 : index
    %c0_10 = arith.constant 0 : index
    %c0_11 = arith.constant 0 : index
    %25 = vector.load %arg1[%c0_9, %c0_10, %c0_11] : memref<8x8x8xf32, #tpu.memory_space<vmem>>, vector<8x8x8xf32>
    %26 = arith.truncf %24 : vector<16x128xf32> to vector<16x128xbf16>
    %c0_12 = arith.constant 0 : index
    %c0_13 = arith.constant 0 : index
    %c0_14 = arith.constant 0 : index
    %27 = vector.load %arg4[%c0_12, %c0_13, %c0_14] : memref<2x128x384xbf16, #tpu.memory_space<vmem>>, vector<1x128x384xbf16>
    %28 = vector.shape_cast %27 : vector<1x128x384xbf16> to vector<128x384xbf16>
    %cst_15 = arith.constant dense<0.000000e+00> : vector<16x384xf32>
    %29 = tpu.matmul %26, %28, %cst_15 {dimension_numbers = #tpu.dot_dimension_numbers<[1], [0], [0], [1], [0, 0, 1, 1], [], []>} : vector<16x128xbf16>, vector<128x384xbf16>, vector<16x384xf32> -> vector<16x384xf32>
    %c0_16 = arith.constant 0 : index
    %c0_17 = arith.constant 0 : index
    %c0_18 = arith.constant 0 : index
    %30 = vector.load %arg5[%c0_16, %c0_17, %c0_18] : memref<2x1x384xf32, #tpu.memory_space<vmem>>, vector<1x1x384xf32>
    %31 = vector.shape_cast %30 : vector<1x1x384xf32> to vector<1x384xf32>
    %32 = vector.broadcast %31 : vector<1x384xf32> to vector<16x384xf32>
    %33 = arith.addf %29, %32 : vector<16x384xf32>
    %34 = vector.extract_strided_slice %33 {offsets = [0, 0], sizes = [16, 32], strides = [1, 1]} : vector<16x384xf32> to vector<16x32xf32>
    %35 = vector.shape_cast %34 : vector<16x32xf32> to vector<2x8x32xf32>
    %36 = vector.extract_strided_slice %33 {offsets = [0, 32], sizes = [16, 32], strides = [1, 1]} : vector<16x384xf32> to vector<16x32xf32>
    %37 = vector.shape_cast %36 : vector<16x32xf32> to vector<2x8x32xf32>
    %38 = vector.extract_strided_slice %33 {offsets = [0, 64], sizes = [16, 32], strides = [1, 1]} : vector<16x384xf32> to vector<16x32xf32>
    %39 = vector.shape_cast %38 : vector<16x32xf32> to vector<2x8x32xf32>
    %40 = vector.extract_strided_slice %33 {offsets = [0, 96], sizes = [16, 32], strides = [1, 1]} : vector<16x384xf32> to vector<16x32xf32>
    %41 = vector.shape_cast %40 : vector<16x32xf32> to vector<2x8x32xf32>
    %42 = tpu.concatenate %35, %37, %39, %41 in 0 : vector<2x8x32xf32>, vector<2x8x32xf32>, vector<2x8x32xf32>, vector<2x8x32xf32> -> vector<8x8x32xf32>
    %43 = arith.truncf %42 : vector<8x8x32xf32> to vector<8x8x32xbf16>
    %44 = vector.extract_strided_slice %33 {offsets = [0, 128], sizes = [16, 32], strides = [1, 1]} : vector<16x384xf32> to vector<16x32xf32>
    %45 = vector.shape_cast %44 : vector<16x32xf32> to vector<2x8x32xf32>
    %46 = vector.extract_strided_slice %33 {offsets = [0, 160], sizes = [16, 32], strides = [1, 1]} : vector<16x384xf32> to vector<16x32xf32>
    %47 = vector.shape_cast %46 : vector<16x32xf32> to vector<2x8x32xf32>
    %48 = vector.extract_strided_slice %33 {offsets = [0, 192], sizes = [16, 32], strides = [1, 1]} : vector<16x384xf32> to vector<16x32xf32>
    %49 = vector.shape_cast %48 : vector<16x32xf32> to vector<2x8x32xf32>
    %50 = vector.extract_strided_slice %33 {offsets = [0, 224], sizes = [16, 32], strides = [1, 1]} : vector<16x384xf32> to vector<16x32xf32>
    %51 = vector.shape_cast %50 : vector<16x32xf32> to vector<2x8x32xf32>
    %52 = tpu.concatenate %45, %47, %49, %51 in 0 : vector<2x8x32xf32>, vector<2x8x32xf32>, vector<2x8x32xf32>, vector<2x8x32xf32> -> vector<8x8x32xf32>
    %53 = arith.truncf %52 : vector<8x8x32xf32> to vector<8x8x32xbf16>
    %54 = vector.extract_strided_slice %33 {offsets = [0, 256], sizes = [16, 32], strides = [1, 1]} : vector<16x384xf32> to vector<16x32xf32>
    %55 = vector.shape_cast %54 : vector<16x32xf32> to vector<2x8x32xf32>
    %56 = vector.extract_strided_slice %33 {offsets = [0, 288], sizes = [16, 32], strides = [1, 1]} : vector<16x384xf32> to vector<16x32xf32>
    %57 = vector.shape_cast %56 : vector<16x32xf32> to vector<2x8x32xf32>
    %58 = vector.extract_strided_slice %33 {offsets = [0, 320], sizes = [16, 32], strides = [1, 1]} : vector<16x384xf32> to vector<16x32xf32>
    %59 = vector.shape_cast %58 : vector<16x32xf32> to vector<2x8x32xf32>
    %60 = vector.extract_strided_slice %33 {offsets = [0, 352], sizes = [16, 32], strides = [1, 1]} : vector<16x384xf32> to vector<16x32xf32>
    %61 = vector.shape_cast %60 : vector<16x32xf32> to vector<2x8x32xf32>
    %62 = tpu.concatenate %55, %57, %59, %61 in 0 : vector<2x8x32xf32>, vector<2x8x32xf32>, vector<2x8x32xf32>, vector<2x8x32xf32> -> vector<8x8x32xf32>
    %63 = arith.truncf %62 : vector<8x8x32xf32> to vector<8x8x32xbf16>
    "tpu.trace_start"() <{level = 10 : i32, message = "bqd,bkd->bqk"}> : () -> ()
    %cst_19 = arith.constant dense<0.000000e+00> : vector<8x8x8xf32>
    %64 = tpu.matmul %43, %53, %cst_19 {dimension_numbers = #tpu.dot_dimension_numbers<[2], [2], [1], [1], [0, 0, 0, 1, 1, 1], [0], [0]>} : vector<8x8x32xbf16>, vector<8x8x32xbf16>, vector<8x8x8xf32> -> vector<8x8x8xf32>
    "tpu.trace_stop"() : () -> ()
    %65 = arith.addf %64, %25 : vector<8x8x8xf32>
    %cst_20 = arith.constant dense<0xFF800000> : vector<8x8xf32>
    %66 = vector.multi_reduction <maximumf>, %65, %cst_20 [2] : vector<8x8x8xf32> to vector<8x8xf32>
    %67 = vector.shape_cast %66 : vector<8x8xf32> to vector<8x8x1xf32>
    %68 = vector.broadcast %67 : vector<8x8x1xf32> to vector<8x8x8xf32>
    %69 = arith.subf %65, %68 : vector<8x8x8xf32>
    %70 = math.exp %69 : vector<8x8x8xf32>
    %cst_21 = arith.constant dense<0.000000e+00> : vector<8x8xf32>
    %71 = vector.multi_reduction <add>, %70, %cst_21 [2] : vector<8x8x8xf32> to vector<8x8xf32>
    %72 = vector.shape_cast %71 : vector<8x8xf32> to vector<8x8x1xf32>
    %73 = tpu.reciprocal %72 {approx = true} : vector<8x8x1xf32> -> vector<8x8x1xf32>
    %74 = vector.broadcast %73 : vector<8x8x1xf32> to vector<8x8x8xf32>
    %75 = arith.mulf %70, %74 : vector<8x8x8xf32>
    %76 = arith.truncf %75 : vector<8x8x8xf32> to vector<8x8x8xbf16>
    "tpu.trace_start"() <{level = 10 : i32, message = "bqk,bkd->bqd"}> : () -> ()
    %cst_22 = arith.constant dense<0.000000e+00> : vector<8x8x32xf32>
    %77 = tpu.matmul %76, %63, %cst_22 {dimension_numbers = #tpu.dot_dimension_numbers<[2], [1], [1], [2], [0, 0, 0, 1, 1, 2], [0], [0]>} : vector<8x8x8xbf16>, vector<8x8x32xbf16>, vector<8x8x32xf32> -> vector<8x8x32xf32>
    "tpu.trace_stop"() : () -> ()
    %78 = vector.extract_strided_slice %77 {offsets = [0, 0, 0], sizes = [2, 8, 32], strides = [1, 1, 1]} : vector<8x8x32xf32> to vector<2x8x32xf32>
    %79 = vector.shape_cast %78 : vector<2x8x32xf32> to vector<16x32xf32>
    %80 = vector.extract_strided_slice %77 {offsets = [2, 0, 0], sizes = [2, 8, 32], strides = [1, 1, 1]} : vector<8x8x32xf32> to vector<2x8x32xf32>
    %81 = vector.shape_cast %80 : vector<2x8x32xf32> to vector<16x32xf32>
    %82 = vector.extract_strided_slice %77 {offsets = [4, 0, 0], sizes = [2, 8, 32], strides = [1, 1, 1]} : vector<8x8x32xf32> to vector<2x8x32xf32>
    %83 = vector.shape_cast %82 : vector<2x8x32xf32> to vector<16x32xf32>
    %84 = vector.extract_strided_slice %77 {offsets = [6, 0, 0], sizes = [2, 8, 32], strides = [1, 1, 1]} : vector<8x8x32xf32> to vector<2x8x32xf32>
    %85 = vector.shape_cast %84 : vector<2x8x32xf32> to vector<16x32xf32>
    %86 = tpu.concatenate %79, %81, %83, %85 in 1 : vector<16x32xf32>, vector<16x32xf32>, vector<16x32xf32>, vector<16x32xf32> -> vector<16x128xf32>
    %87 = arith.truncf %86 : vector<16x128xf32> to vector<16x128xbf16>
    %c0_23 = arith.constant 0 : index
    %c0_24 = arith.constant 0 : index
    %c0_25 = arith.constant 0 : index
    %88 = vector.load %arg6[%c0_23, %c0_24, %c0_25] : memref<2x128x128xbf16, #tpu.memory_space<vmem>>, vector<1x128x128xbf16>
    %89 = vector.shape_cast %88 : vector<1x128x128xbf16> to vector<128x128xbf16>
    %cst_26 = arith.constant dense<0.000000e+00> : vector<16x128xf32>
    %90 = tpu.matmul %87, %89, %cst_26 {dimension_numbers = #tpu.dot_dimension_numbers<[1], [0], [0], [1], [0, 0, 1, 1], [], []>} : vector<16x128xbf16>, vector<128x128xbf16>, vector<16x128xf32> -> vector<16x128xf32>
    %c0_27 = arith.constant 0 : index
    %c0_28 = arith.constant 0 : index
    %c0_29 = arith.constant 0 : index
    %91 = vector.load %arg7[%c0_27, %c0_28, %c0_29] : memref<2x1x128xf32, #tpu.memory_space<vmem>>, vector<1x1x128xf32>
    %92 = vector.shape_cast %91 : vector<1x1x128xf32> to vector<1x128xf32>
    %93 = vector.broadcast %92 : vector<1x128xf32> to vector<16x128xf32>
    %94 = arith.addf %90, %93 : vector<16x128xf32>
    %95 = arith.addf %24, %94 : vector<16x128xf32>
    %c0_30 = arith.constant 0 : index
    %c0_31 = arith.constant 0 : index
    %c0_32 = arith.constant 0 : index
    %96 = vector.load %arg8[%c0_30, %c0_31, %c0_32] : memref<2x1x128xf32, #tpu.memory_space<vmem>>, vector<1x1x128xf32>
    %97 = vector.shape_cast %96 : vector<1x1x128xf32> to vector<1x128xf32>
    %c0_33 = arith.constant 0 : index
    %c0_34 = arith.constant 0 : index
    %c0_35 = arith.constant 0 : index
    %98 = vector.load %arg9[%c0_33, %c0_34, %c0_35] : memref<2x1x128xf32, #tpu.memory_space<vmem>>, vector<1x1x128xf32>
    %99 = vector.shape_cast %98 : vector<1x1x128xf32> to vector<1x128xf32>
    %cst_36 = arith.constant dense<0.000000e+00> : vector<16xf32>
    %100 = vector.multi_reduction <add>, %95, %cst_36 [1] : vector<16x128xf32> to vector<16xf32>
    %101 = vector.shape_cast %100 : vector<16xf32> to vector<16x1xf32>
    %cst_37 = arith.constant 1.280000e+02 : f32
    %102 = vector.broadcast %cst_37 : f32 to vector<16x1xf32>
    %103 = arith.divf %101, %102 : vector<16x1xf32>
    %104 = arith.mulf %95, %95 : vector<16x128xf32>
    %cst_38 = arith.constant dense<0.000000e+00> : vector<16xf32>
    %105 = vector.multi_reduction <add>, %104, %cst_38 [1] : vector<16x128xf32> to vector<16xf32>
    %106 = vector.shape_cast %105 : vector<16xf32> to vector<16x1xf32>
    %cst_39 = arith.constant 1.280000e+02 : f32
    %107 = vector.broadcast %cst_39 : f32 to vector<16x1xf32>
    %108 = arith.divf %106, %107 : vector<16x1xf32>
    %109 = arith.mulf %103, %103 : vector<16x1xf32>
    %110 = arith.subf %108, %109 : vector<16x1xf32>
    %111 = vector.broadcast %103 : vector<16x1xf32> to vector<16x128xf32>
    %112 = arith.subf %95, %111 : vector<16x128xf32>
    %cst_40 = arith.constant 9.99999996E-13 : f32
    %113 = vector.broadcast %cst_40 : f32 to vector<16x1xf32>
    %114 = arith.addf %110, %113 : vector<16x1xf32>
    %115 = math.rsqrt %114 : vector<16x1xf32>
    %116 = vector.broadcast %115 : vector<16x1xf32> to vector<16x128xf32>
    %117 = arith.mulf %112, %116 : vector<16x128xf32>
    %118 = vector.broadcast %97 : vector<1x128xf32> to vector<16x128xf32>
    %119 = arith.mulf %117, %118 : vector<16x128xf32>
    %120 = vector.broadcast %99 : vector<1x128xf32> to vector<16x128xf32>
    %121 = arith.addf %119, %120 : vector<16x128xf32>
    %122 = arith.truncf %121 : vector<16x128xf32> to vector<16x128xbf16>
    %c0_41 = arith.constant 0 : index
    %c0_42 = arith.constant 0 : index
    %c0_43 = arith.constant 0 : index
    %123 = vector.load %arg10[%c0_41, %c0_42, %c0_43] : memref<2x128x512xbf16, #tpu.memory_space<vmem>>, vector<1x128x512xbf16>
    %124 = vector.shape_cast %123 : vector<1x128x512xbf16> to vector<128x512xbf16>
    %cst_44 = arith.constant dense<0.000000e+00> : vector<16x512xf32>
    %125 = tpu.matmul %122, %124, %cst_44 {dimension_numbers = #tpu.dot_dimension_numbers<[1], [0], [0], [1], [0, 0, 1, 1], [], []>} : vector<16x128xbf16>, vector<128x512xbf16>, vector<16x512xf32> -> vector<16x512xf32>
    %c0_45 = arith.constant 0 : index
    %c0_46 = arith.constant 0 : index
    %c0_47 = arith.constant 0 : index
    %126 = vector.load %arg11[%c0_45, %c0_46, %c0_47] : memref<2x1x512xf32, #tpu.memory_space<vmem>>, vector<1x1x512xf32>
    %127 = vector.shape_cast %126 : vector<1x1x512xf32> to vector<1x512xf32>
    %128 = vector.broadcast %127 : vector<1x512xf32> to vector<16x512xf32>
    %129 = arith.addf %125, %128 : vector<16x512xf32>
    %cst_48 = arith.constant 5.000000e-01 : f32
    %130 = vector.broadcast %cst_48 : f32 to vector<16x512xf32>
    %131 = arith.mulf %130, %129 : vector<16x512xf32>
    %cst_49 = arith.constant 0.707106769 : f32
    %132 = vector.broadcast %cst_49 : f32 to vector<16x512xf32>
    %133 = arith.mulf %129, %132 : vector<16x512xf32>
    %134 = math.erf %133 : vector<16x512xf32>
    %cst_50 = arith.constant 1.000000e+00 : f32
    %135 = vector.broadcast %cst_50 : f32 to vector<16x512xf32>
    %136 = arith.addf %135, %134 : vector<16x512xf32>
    %137 = arith.mulf %131, %136 : vector<16x512xf32>
    %138 = arith.truncf %137 : vector<16x512xf32> to vector<16x512xbf16>
    %c0_51 = arith.constant 0 : index
    %c0_52 = arith.constant 0 : index
    %c0_53 = arith.constant 0 : index
    %139 = vector.load %arg12[%c0_51, %c0_52, %c0_53] : memref<2x512x128xbf16, #tpu.memory_space<vmem>>, vector<1x512x128xbf16>
    %140 = vector.shape_cast %139 : vector<1x512x128xbf16> to vector<512x128xbf16>
    %cst_54 = arith.constant dense<0.000000e+00> : vector<16x128xf32>
    %141 = tpu.matmul %138, %140, %cst_54 {dimension_numbers = #tpu.dot_dimension_numbers<[1], [0], [0], [1], [0, 0, 1, 1], [], []>} : vector<16x512xbf16>, vector<512x128xbf16>, vector<16x128xf32> -> vector<16x128xf32>
    %c0_55 = arith.constant 0 : index
    %c0_56 = arith.constant 0 : index
    %c0_57 = arith.constant 0 : index
    %142 = vector.load %arg13[%c0_55, %c0_56, %c0_57] : memref<2x1x128xf32, #tpu.memory_space<vmem>>, vector<1x1x128xf32>
    %143 = vector.shape_cast %142 : vector<1x1x128xf32> to vector<1x128xf32>
    %144 = vector.broadcast %143 : vector<1x128xf32> to vector<16x128xf32>
    %145 = arith.addf %141, %144 : vector<16x128xf32>
    %146 = arith.addf %121, %145 : vector<16x128xf32>
    %c0_58 = arith.constant 0 : index
    %c0_59 = arith.constant 0 : index
    %c0_60 = arith.constant 0 : index
    %147 = vector.load %arg14[%c0_58, %c0_59, %c0_60] : memref<2x1x128xf32, #tpu.memory_space<vmem>>, vector<1x1x128xf32>
    %148 = vector.shape_cast %147 : vector<1x1x128xf32> to vector<1x128xf32>
    %c0_61 = arith.constant 0 : index
    %c0_62 = arith.constant 0 : index
    %c0_63 = arith.constant 0 : index
    %149 = vector.load %arg15[%c0_61, %c0_62, %c0_63] : memref<2x1x128xf32, #tpu.memory_space<vmem>>, vector<1x1x128xf32>
    %150 = vector.shape_cast %149 : vector<1x1x128xf32> to vector<1x128xf32>
    %cst_64 = arith.constant dense<0.000000e+00> : vector<16xf32>
    %151 = vector.multi_reduction <add>, %146, %cst_64 [1] : vector<16x128xf32> to vector<16xf32>
    %152 = vector.shape_cast %151 : vector<16xf32> to vector<16x1xf32>
    %cst_65 = arith.constant 1.280000e+02 : f32
    %153 = vector.broadcast %cst_65 : f32 to vector<16x1xf32>
    %154 = arith.divf %152, %153 : vector<16x1xf32>
    %155 = arith.mulf %146, %146 : vector<16x128xf32>
    %cst_66 = arith.constant dense<0.000000e+00> : vector<16xf32>
    %156 = vector.multi_reduction <add>, %155, %cst_66 [1] : vector<16x128xf32> to vector<16xf32>
    %157 = vector.shape_cast %156 : vector<16xf32> to vector<16x1xf32>
    %cst_67 = arith.constant 1.280000e+02 : f32
    %158 = vector.broadcast %cst_67 : f32 to vector<16x1xf32>
    %159 = arith.divf %157, %158 : vector<16x1xf32>
    %160 = arith.mulf %154, %154 : vector<16x1xf32>
    %161 = arith.subf %159, %160 : vector<16x1xf32>
    %162 = vector.broadcast %154 : vector<16x1xf32> to vector<16x128xf32>
    %163 = arith.subf %146, %162 : vector<16x128xf32>
    %cst_68 = arith.constant 9.99999996E-13 : f32
    %164 = vector.broadcast %cst_68 : f32 to vector<16x1xf32>
    %165 = arith.addf %161, %164 : vector<16x1xf32>
    %166 = math.rsqrt %165 : vector<16x1xf32>
    %167 = vector.broadcast %166 : vector<16x1xf32> to vector<16x128xf32>
    %168 = arith.mulf %163, %167 : vector<16x128xf32>
    %169 = vector.broadcast %148 : vector<1x128xf32> to vector<16x128xf32>
    %170 = arith.mulf %168, %169 : vector<16x128xf32>
    %171 = vector.broadcast %150 : vector<1x128xf32> to vector<16x128xf32>
    %172 = arith.addf %170, %171 : vector<16x128xf32>
    %173 = arith.truncf %172 : vector<16x128xf32> to vector<16x128xbf16>
    %c1 = arith.constant 1 : index
    %c0_69 = arith.constant 0 : index
    %c0_70 = arith.constant 0 : index
    %174 = vector.load %arg4[%c1, %c0_69, %c0_70] : memref<2x128x384xbf16, #tpu.memory_space<vmem>>, vector<1x128x384xbf16>
    %175 = vector.shape_cast %174 : vector<1x128x384xbf16> to vector<128x384xbf16>
    %cst_71 = arith.constant dense<0.000000e+00> : vector<16x384xf32>
    %176 = tpu.matmul %173, %175, %cst_71 {dimension_numbers = #tpu.dot_dimension_numbers<[1], [0], [0], [1], [0, 0, 1, 1], [], []>} : vector<16x128xbf16>, vector<128x384xbf16>, vector<16x384xf32> -> vector<16x384xf32>
    %c1_72 = arith.constant 1 : index
    %c0_73 = arith.constant 0 : index
    %c0_74 = arith.constant 0 : index
    %177 = vector.load %arg5[%c1_72, %c0_73, %c0_74] : memref<2x1x384xf32, #tpu.memory_space<vmem>>, vector<1x1x384xf32>
    %178 = vector.shape_cast %177 : vector<1x1x384xf32> to vector<1x384xf32>
    %179 = vector.broadcast %178 : vector<1x384xf32> to vector<16x384xf32>
    %180 = arith.addf %176, %179 : vector<16x384xf32>
    %181 = vector.extract_strided_slice %180 {offsets = [0, 0], sizes = [16, 32], strides = [1, 1]} : vector<16x384xf32> to vector<16x32xf32>
    %182 = vector.shape_cast %181 : vector<16x32xf32> to vector<2x8x32xf32>
    %183 = vector.extract_strided_slice %180 {offsets = [0, 32], sizes = [16, 32], strides = [1, 1]} : vector<16x384xf32> to vector<16x32xf32>
    %184 = vector.shape_cast %183 : vector<16x32xf32> to vector<2x8x32xf32>
    %185 = vector.extract_strided_slice %180 {offsets = [0, 64], sizes = [16, 32], strides = [1, 1]} : vector<16x384xf32> to vector<16x32xf32>
    %186 = vector.shape_cast %185 : vector<16x32xf32> to vector<2x8x32xf32>
    %187 = vector.extract_strided_slice %180 {offsets = [0, 96], sizes = [16, 32], strides = [1, 1]} : vector<16x384xf32> to vector<16x32xf32>
    %188 = vector.shape_cast %187 : vector<16x32xf32> to vector<2x8x32xf32>
    %189 = tpu.concatenate %182, %184, %186, %188 in 0 : vector<2x8x32xf32>, vector<2x8x32xf32>, vector<2x8x32xf32>, vector<2x8x32xf32> -> vector<8x8x32xf32>
    %190 = arith.truncf %189 : vector<8x8x32xf32> to vector<8x8x32xbf16>
    %191 = vector.extract_strided_slice %180 {offsets = [0, 128], sizes = [16, 32], strides = [1, 1]} : vector<16x384xf32> to vector<16x32xf32>
    %192 = vector.shape_cast %191 : vector<16x32xf32> to vector<2x8x32xf32>
    %193 = vector.extract_strided_slice %180 {offsets = [0, 160], sizes = [16, 32], strides = [1, 1]} : vector<16x384xf32> to vector<16x32xf32>
    %194 = vector.shape_cast %193 : vector<16x32xf32> to vector<2x8x32xf32>
    %195 = vector.extract_strided_slice %180 {offsets = [0, 192], sizes = [16, 32], strides = [1, 1]} : vector<16x384xf32> to vector<16x32xf32>
    %196 = vector.shape_cast %195 : vector<16x32xf32> to vector<2x8x32xf32>
    %197 = vector.extract_strided_slice %180 {offsets = [0, 224], sizes = [16, 32], strides = [1, 1]} : vector<16x384xf32> to vector<16x32xf32>
    %198 = vector.shape_cast %197 : vector<16x32xf32> to vector<2x8x32xf32>
    %199 = tpu.concatenate %192, %194, %196, %198 in 0 : vector<2x8x32xf32>, vector<2x8x32xf32>, vector<2x8x32xf32>, vector<2x8x32xf32> -> vector<8x8x32xf32>
    %200 = arith.truncf %199 : vector<8x8x32xf32> to vector<8x8x32xbf16>
    %201 = vector.extract_strided_slice %180 {offsets = [0, 256], sizes = [16, 32], strides = [1, 1]} : vector<16x384xf32> to vector<16x32xf32>
    %202 = vector.shape_cast %201 : vector<16x32xf32> to vector<2x8x32xf32>
    %203 = vector.extract_strided_slice %180 {offsets = [0, 288], sizes = [16, 32], strides = [1, 1]} : vector<16x384xf32> to vector<16x32xf32>
    %204 = vector.shape_cast %203 : vector<16x32xf32> to vector<2x8x32xf32>
    %205 = vector.extract_strided_slice %180 {offsets = [0, 320], sizes = [16, 32], strides = [1, 1]} : vector<16x384xf32> to vector<16x32xf32>
    %206 = vector.shape_cast %205 : vector<16x32xf32> to vector<2x8x32xf32>
    %207 = vector.extract_strided_slice %180 {offsets = [0, 352], sizes = [16, 32], strides = [1, 1]} : vector<16x384xf32> to vector<16x32xf32>
    %208 = vector.shape_cast %207 : vector<16x32xf32> to vector<2x8x32xf32>
    %209 = tpu.concatenate %202, %204, %206, %208 in 0 : vector<2x8x32xf32>, vector<2x8x32xf32>, vector<2x8x32xf32>, vector<2x8x32xf32> -> vector<8x8x32xf32>
    %210 = arith.truncf %209 : vector<8x8x32xf32> to vector<8x8x32xbf16>
    "tpu.trace_start"() <{level = 10 : i32, message = "bqd,bkd->bqk"}> : () -> ()
    %cst_75 = arith.constant dense<0.000000e+00> : vector<8x8x8xf32>
    %211 = tpu.matmul %190, %200, %cst_75 {dimension_numbers = #tpu.dot_dimension_numbers<[2], [2], [1], [1], [0, 0, 0, 1, 1, 1], [0], [0]>} : vector<8x8x32xbf16>, vector<8x8x32xbf16>, vector<8x8x8xf32> -> vector<8x8x8xf32>
    "tpu.trace_stop"() : () -> ()
    %212 = arith.addf %211, %25 : vector<8x8x8xf32>
    %cst_76 = arith.constant dense<0xFF800000> : vector<8x8xf32>
    %213 = vector.multi_reduction <maximumf>, %212, %cst_76 [2] : vector<8x8x8xf32> to vector<8x8xf32>
    %214 = vector.shape_cast %213 : vector<8x8xf32> to vector<8x8x1xf32>
    %215 = vector.broadcast %214 : vector<8x8x1xf32> to vector<8x8x8xf32>
    %216 = arith.subf %212, %215 : vector<8x8x8xf32>
    %217 = math.exp %216 : vector<8x8x8xf32>
    %cst_77 = arith.constant dense<0.000000e+00> : vector<8x8xf32>
    %218 = vector.multi_reduction <add>, %217, %cst_77 [2] : vector<8x8x8xf32> to vector<8x8xf32>
    %219 = vector.shape_cast %218 : vector<8x8xf32> to vector<8x8x1xf32>
    %220 = tpu.reciprocal %219 {approx = true} : vector<8x8x1xf32> -> vector<8x8x1xf32>
    %221 = vector.broadcast %220 : vector<8x8x1xf32> to vector<8x8x8xf32>
    %222 = arith.mulf %217, %221 : vector<8x8x8xf32>
    %223 = arith.truncf %222 : vector<8x8x8xf32> to vector<8x8x8xbf16>
    "tpu.trace_start"() <{level = 10 : i32, message = "bqk,bkd->bqd"}> : () -> ()
    %cst_78 = arith.constant dense<0.000000e+00> : vector<8x8x32xf32>
    %224 = tpu.matmul %223, %210, %cst_78 {dimension_numbers = #tpu.dot_dimension_numbers<[2], [1], [1], [2], [0, 0, 0, 1, 1, 2], [0], [0]>} : vector<8x8x8xbf16>, vector<8x8x32xbf16>, vector<8x8x32xf32> -> vector<8x8x32xf32>
    "tpu.trace_stop"() : () -> ()
    %225 = vector.extract_strided_slice %224 {offsets = [0, 0, 0], sizes = [2, 8, 32], strides = [1, 1, 1]} : vector<8x8x32xf32> to vector<2x8x32xf32>
    %226 = vector.shape_cast %225 : vector<2x8x32xf32> to vector<16x32xf32>
    %227 = vector.extract_strided_slice %224 {offsets = [2, 0, 0], sizes = [2, 8, 32], strides = [1, 1, 1]} : vector<8x8x32xf32> to vector<2x8x32xf32>
    %228 = vector.shape_cast %227 : vector<2x8x32xf32> to vector<16x32xf32>
    %229 = vector.extract_strided_slice %224 {offsets = [4, 0, 0], sizes = [2, 8, 32], strides = [1, 1, 1]} : vector<8x8x32xf32> to vector<2x8x32xf32>
    %230 = vector.shape_cast %229 : vector<2x8x32xf32> to vector<16x32xf32>
    %231 = vector.extract_strided_slice %224 {offsets = [6, 0, 0], sizes = [2, 8, 32], strides = [1, 1, 1]} : vector<8x8x32xf32> to vector<2x8x32xf32>
    %232 = vector.shape_cast %231 : vector<2x8x32xf32> to vector<16x32xf32>
    %233 = tpu.concatenate %226, %228, %230, %232 in 1 : vector<16x32xf32>, vector<16x32xf32>, vector<16x32xf32>, vector<16x32xf32> -> vector<16x128xf32>
    %234 = arith.truncf %233 : vector<16x128xf32> to vector<16x128xbf16>
    %c1_79 = arith.constant 1 : index
    %c0_80 = arith.constant 0 : index
    %c0_81 = arith.constant 0 : index
    %235 = vector.load %arg6[%c1_79, %c0_80, %c0_81] : memref<2x128x128xbf16, #tpu.memory_space<vmem>>, vector<1x128x128xbf16>
    %236 = vector.shape_cast %235 : vector<1x128x128xbf16> to vector<128x128xbf16>
    %cst_82 = arith.constant dense<0.000000e+00> : vector<16x128xf32>
    %237 = tpu.matmul %234, %236, %cst_82 {dimension_numbers = #tpu.dot_dimension_numbers<[1], [0], [0], [1], [0, 0, 1, 1], [], []>} : vector<16x128xbf16>, vector<128x128xbf16>, vector<16x128xf32> -> vector<16x128xf32>
    %c1_83 = arith.constant 1 : index
    %c0_84 = arith.constant 0 : index
    %c0_85 = arith.constant 0 : index
    %238 = vector.load %arg7[%c1_83, %c0_84, %c0_85] : memref<2x1x128xf32, #tpu.memory_space<vmem>>, vector<1x1x128xf32>
    %239 = vector.shape_cast %238 : vector<1x1x128xf32> to vector<1x128xf32>
    %240 = vector.broadcast %239 : vector<1x128xf32> to vector<16x128xf32>
    %241 = arith.addf %237, %240 : vector<16x128xf32>
    %242 = arith.addf %172, %241 : vector<16x128xf32>
    %c1_86 = arith.constant 1 : index
    %c0_87 = arith.constant 0 : index
    %c0_88 = arith.constant 0 : index
    %243 = vector.load %arg8[%c1_86, %c0_87, %c0_88] : memref<2x1x128xf32, #tpu.memory_space<vmem>>, vector<1x1x128xf32>
    %244 = vector.shape_cast %243 : vector<1x1x128xf32> to vector<1x128xf32>
    %c1_89 = arith.constant 1 : index
    %c0_90 = arith.constant 0 : index
    %c0_91 = arith.constant 0 : index
    %245 = vector.load %arg9[%c1_89, %c0_90, %c0_91] : memref<2x1x128xf32, #tpu.memory_space<vmem>>, vector<1x1x128xf32>
    %246 = vector.shape_cast %245 : vector<1x1x128xf32> to vector<1x128xf32>
    %cst_92 = arith.constant dense<0.000000e+00> : vector<16xf32>
    %247 = vector.multi_reduction <add>, %242, %cst_92 [1] : vector<16x128xf32> to vector<16xf32>
    %248 = vector.shape_cast %247 : vector<16xf32> to vector<16x1xf32>
    %cst_93 = arith.constant 1.280000e+02 : f32
    %249 = vector.broadcast %cst_93 : f32 to vector<16x1xf32>
    %250 = arith.divf %248, %249 : vector<16x1xf32>
    %251 = arith.mulf %242, %242 : vector<16x128xf32>
    %cst_94 = arith.constant dense<0.000000e+00> : vector<16xf32>
    %252 = vector.multi_reduction <add>, %251, %cst_94 [1] : vector<16x128xf32> to vector<16xf32>
    %253 = vector.shape_cast %252 : vector<16xf32> to vector<16x1xf32>
    %cst_95 = arith.constant 1.280000e+02 : f32
    %254 = vector.broadcast %cst_95 : f32 to vector<16x1xf32>
    %255 = arith.divf %253, %254 : vector<16x1xf32>
    %256 = arith.mulf %250, %250 : vector<16x1xf32>
    %257 = arith.subf %255, %256 : vector<16x1xf32>
    %258 = vector.broadcast %250 : vector<16x1xf32> to vector<16x128xf32>
    %259 = arith.subf %242, %258 : vector<16x128xf32>
    %cst_96 = arith.constant 9.99999996E-13 : f32
    %260 = vector.broadcast %cst_96 : f32 to vector<16x1xf32>
    %261 = arith.addf %257, %260 : vector<16x1xf32>
    %262 = math.rsqrt %261 : vector<16x1xf32>
    %263 = vector.broadcast %262 : vector<16x1xf32> to vector<16x128xf32>
    %264 = arith.mulf %259, %263 : vector<16x128xf32>
    %265 = vector.broadcast %244 : vector<1x128xf32> to vector<16x128xf32>
    %266 = arith.mulf %264, %265 : vector<16x128xf32>
    %267 = vector.broadcast %246 : vector<1x128xf32> to vector<16x128xf32>
    %268 = arith.addf %266, %267 : vector<16x128xf32>
    %269 = arith.truncf %268 : vector<16x128xf32> to vector<16x128xbf16>
    %c1_97 = arith.constant 1 : index
    %c0_98 = arith.constant 0 : index
    %c0_99 = arith.constant 0 : index
    %270 = vector.load %arg10[%c1_97, %c0_98, %c0_99] : memref<2x128x512xbf16, #tpu.memory_space<vmem>>, vector<1x128x512xbf16>
    %271 = vector.shape_cast %270 : vector<1x128x512xbf16> to vector<128x512xbf16>
    %cst_100 = arith.constant dense<0.000000e+00> : vector<16x512xf32>
    %272 = tpu.matmul %269, %271, %cst_100 {dimension_numbers = #tpu.dot_dimension_numbers<[1], [0], [0], [1], [0, 0, 1, 1], [], []>} : vector<16x128xbf16>, vector<128x512xbf16>, vector<16x512xf32> -> vector<16x512xf32>
    %c1_101 = arith.constant 1 : index
    %c0_102 = arith.constant 0 : index
    %c0_103 = arith.constant 0 : index
    %273 = vector.load %arg11[%c1_101, %c0_102, %c0_103] : memref<2x1x512xf32, #tpu.memory_space<vmem>>, vector<1x1x512xf32>
    %274 = vector.shape_cast %273 : vector<1x1x512xf32> to vector<1x512xf32>
    %275 = vector.broadcast %274 : vector<1x512xf32> to vector<16x512xf32>
    %276 = arith.addf %272, %275 : vector<16x512xf32>
    %cst_104 = arith.constant 5.000000e-01 : f32
    %277 = vector.broadcast %cst_104 : f32 to vector<16x512xf32>
    %278 = arith.mulf %277, %276 : vector<16x512xf32>
    %cst_105 = arith.constant 0.707106769 : f32
    %279 = vector.broadcast %cst_105 : f32 to vector<16x512xf32>
    %280 = arith.mulf %276, %279 : vector<16x512xf32>
    %281 = math.erf %280 : vector<16x512xf32>
    %cst_106 = arith.constant 1.000000e+00 : f32
    %282 = vector.broadcast %cst_106 : f32 to vector<16x512xf32>
    %283 = arith.addf %282, %281 : vector<16x512xf32>
    %284 = arith.mulf %278, %283 : vector<16x512xf32>
    %285 = arith.truncf %284 : vector<16x512xf32> to vector<16x512xbf16>
    %c1_107 = arith.constant 1 : index
    %c0_108 = arith.constant 0 : index
    %c0_109 = arith.constant 0 : index
    %286 = vector.load %arg12[%c1_107, %c0_108, %c0_109] : memref<2x512x128xbf16, #tpu.memory_space<vmem>>, vector<1x512x128xbf16>
    %287 = vector.shape_cast %286 : vector<1x512x128xbf16> to vector<512x128xbf16>
    %cst_110 = arith.constant dense<0.000000e+00> : vector<16x128xf32>
    %288 = tpu.matmul %285, %287, %cst_110 {dimension_numbers = #tpu.dot_dimension_numbers<[1], [0], [0], [1], [0, 0, 1, 1], [], []>} : vector<16x512xbf16>, vector<512x128xbf16>, vector<16x128xf32> -> vector<16x128xf32>
    %c1_111 = arith.constant 1 : index
    %c0_112 = arith.constant 0 : index
    %c0_113 = arith.constant 0 : index
    %289 = vector.load %arg13[%c1_111, %c0_112, %c0_113] : memref<2x1x128xf32, #tpu.memory_space<vmem>>, vector<1x1x128xf32>
    %290 = vector.shape_cast %289 : vector<1x1x128xf32> to vector<1x128xf32>
    %291 = vector.broadcast %290 : vector<1x128xf32> to vector<16x128xf32>
    %292 = arith.addf %288, %291 : vector<16x128xf32>
    %293 = arith.addf %268, %292 : vector<16x128xf32>
    %c1_114 = arith.constant 1 : index
    %c0_115 = arith.constant 0 : index
    %c0_116 = arith.constant 0 : index
    %294 = vector.load %arg14[%c1_114, %c0_115, %c0_116] : memref<2x1x128xf32, #tpu.memory_space<vmem>>, vector<1x1x128xf32>
    %295 = vector.shape_cast %294 : vector<1x1x128xf32> to vector<1x128xf32>
    %c1_117 = arith.constant 1 : index
    %c0_118 = arith.constant 0 : index
    %c0_119 = arith.constant 0 : index
    %296 = vector.load %arg15[%c1_117, %c0_118, %c0_119] : memref<2x1x128xf32, #tpu.memory_space<vmem>>, vector<1x1x128xf32>
    %297 = vector.shape_cast %296 : vector<1x1x128xf32> to vector<1x128xf32>
    %cst_120 = arith.constant dense<0.000000e+00> : vector<16xf32>
    %298 = vector.multi_reduction <add>, %293, %cst_120 [1] : vector<16x128xf32> to vector<16xf32>
    %299 = vector.shape_cast %298 : vector<16xf32> to vector<16x1xf32>
    %cst_121 = arith.constant 1.280000e+02 : f32
    %300 = vector.broadcast %cst_121 : f32 to vector<16x1xf32>
    %301 = arith.divf %299, %300 : vector<16x1xf32>
    %302 = arith.mulf %293, %293 : vector<16x128xf32>
    %cst_122 = arith.constant dense<0.000000e+00> : vector<16xf32>
    %303 = vector.multi_reduction <add>, %302, %cst_122 [1] : vector<16x128xf32> to vector<16xf32>
    %304 = vector.shape_cast %303 : vector<16xf32> to vector<16x1xf32>
    %cst_123 = arith.constant 1.280000e+02 : f32
    %305 = vector.broadcast %cst_123 : f32 to vector<16x1xf32>
    %306 = arith.divf %304, %305 : vector<16x1xf32>
    %307 = arith.mulf %301, %301 : vector<16x1xf32>
    %308 = arith.subf %306, %307 : vector<16x1xf32>
    %309 = vector.broadcast %301 : vector<16x1xf32> to vector<16x128xf32>
    %310 = arith.subf %293, %309 : vector<16x128xf32>
    %cst_124 = arith.constant 9.99999996E-13 : f32
    %311 = vector.broadcast %cst_124 : f32 to vector<16x1xf32>
    %312 = arith.addf %308, %311 : vector<16x1xf32>
    %313 = math.rsqrt %312 : vector<16x1xf32>
    %314 = vector.broadcast %313 : vector<16x1xf32> to vector<16x128xf32>
    %315 = arith.mulf %310, %314 : vector<16x128xf32>
    %316 = vector.broadcast %295 : vector<1x128xf32> to vector<16x128xf32>
    %317 = arith.mulf %315, %316 : vector<16x128xf32>
    %318 = vector.broadcast %297 : vector<1x128xf32> to vector<16x128xf32>
    %319 = arith.addf %317, %318 : vector<16x128xf32>
    %320 = arith.truncf %319 : vector<16x128xf32> to vector<16x128xbf16>
    %c0_125 = arith.constant 0 : index
    %c0_126 = arith.constant 0 : index
    %321 = vector.load %arg16[%c0_125, %c0_126] : memref<128x128xbf16, #tpu.memory_space<vmem>>, vector<128x128xbf16>
    %cst_127 = arith.constant dense<0.000000e+00> : vector<16x128xf32>
    %322 = tpu.matmul %320, %321, %cst_127 {dimension_numbers = #tpu.dot_dimension_numbers<[1], [0], [0], [1], [0, 0, 1, 1], [], []>} : vector<16x128xbf16>, vector<128x128xbf16>, vector<16x128xf32> -> vector<16x128xf32>
    %c0_128 = arith.constant 0 : index
    %c0_129 = arith.constant 0 : index
    %323 = vector.load %arg17[%c0_128, %c0_129] : memref<1x128xf32, #tpu.memory_space<vmem>>, vector<1x128xf32>
    %324 = vector.broadcast %323 : vector<1x128xf32> to vector<16x128xf32>
    %325 = arith.addf %322, %324 : vector<16x128xf32>
    %c0_130 = arith.constant 0 : index
    %c0_131 = arith.constant 0 : index
    %326 = vector.load %arg18[%c0_130, %c0_131] : memref<16x128xf32, #tpu.memory_space<vmem>>, vector<16x128xf32>
    tpu.vector_store %arg18[%c0_130, %c0_131], %325 {strides = array<i32>} : memref<16x128xf32, #tpu.memory_space<vmem>>, vector<16x128xf32>,
    return
  }
}

</mosaic_0001>

<llo_original>
// kernel: color_shape_forward.1
$region0: #{color_shape_forward.1}
  #allocation0 [shape = 'u32[]', space=smem, size = 0x4, offset = 0x4, fixed_abs, tag = 'smem constant byte address 0x4 - core index']
  #allocation1 [shape = 'u32[72,128]{1,0:T(1,128)}', space=vmem, size = 0x9000, scoped, tag = 'internal scratch']
  %s0 = inlined_call_operand.vmem [shape: f32[16,128], index: 0, kind: input, shape index: {}]
  %s1 = inlined_call_operand.vmem [shape: f32[8,8,8], index: 1, kind: input, shape index: {}]
  %s2 = inlined_call_operand.vmem [shape: f32[1,128], index: 2, kind: input, shape index: {}]
  %s3 = inlined_call_operand.vmem [shape: f32[1,128], index: 3, kind: input, shape index: {}]
  %s4 = inlined_call_operand.hbm [shape: bf16[2,128,384], index: 4, kind: input, shape index: {}]
  %s5 = inlined_call_operand.vmem [shape: f32[2,1,384], index: 5, kind: input, shape index: {}]
  %s6 = inlined_call_operand.vmem [shape: bf16[2,128,128], index: 6, kind: input, shape index: {}]
  %s7 = inlined_call_operand.vmem [shape: f32[2,1,128], index: 7, kind: input, shape index: {}]
  %s8 = inlined_call_operand.vmem [shape: f32[2,1,128], index: 8, kind: input, shape index: {}]
  %s9 = inlined_call_operand.vmem [shape: f32[2,1,128], index: 9, kind: input, shape index: {}]
  %s10 = inlined_call_operand.hbm [shape: bf16[2,128,512], index: 10, kind: input, shape index: {}]
  %s11 = inlined_call_operand.vmem [shape: f32[2,1,512], index: 11, kind: input, shape index: {}]
  %s12 = inlined_call_operand.hbm [shape: bf16[2,512,128], index: 12, kind: input, shape index: {}]
  %s13 = inlined_call_operand.vmem [shape: f32[2,1,128], index: 13, kind: input, shape index: {}]
  %s14 = inlined_call_operand.vmem [shape: f32[2,1,128], index: 14, kind: input, shape index: {}]
  %s15 = inlined_call_operand.vmem [shape: f32[2,1,128], index: 15, kind: input, shape index: {}]
  %s16 = inlined_call_operand.vmem [shape: bf16[128,128], index: 16, kind: input, shape index: {}]
  %s17 = inlined_call_operand.vmem [shape: f32[1,128], index: 17, kind: input, shape index: {}]
  %s18 = inlined_call_operand.vmem [shape: f32[16,128], index: 18, kind: output, shape index: {}]
  %s19 = sld [smem:[#allocation0]]
  $region94: #{color_shape_forward.1} parent=0
    _
  %s21 = ssub.s32 1, %s19
  %s22 = scalar_select 0, %s21, %s19
  $region1: #{color_shape_forward.1} parent=0
    #allocation2 [shape = 'u8[196608]{0}', space=vmem, size = 0x30000, scoped, tag = 'input window, operand 4, single buffered']
    #allocation3 [shape = 's32[1]{0}', space=sflag, size = 0x4, scoped, tag = 'scoped memory for color_shape_forward.1']
    #allocation4 [shape = 'u8[262144]{0}', space=vmem, size = 0x40000, scoped, tag = 'input window, operand 10, single buffered']
    #allocation5 [shape = 's32[1]{0}', space=sflag, size = 0x4, scoped, tag = 'scoped memory for color_shape_forward.1']
    #allocation6 [shape = 'u8[262144]{0}', space=vmem, size = 0x40000, scoped, tag = 'input window, operand 12, single buffered']
    %23 = vsyncpa [#allocation3], 0
    %24 = vsyncpa [#allocation5], 0
    // Predicated region
    $region2: #{color_shape_forward.1} parent=1 // pred_check
      _
    $region3: #{color_shape_forward.1} parent=1 // pred_check_branch
      %26 = sbr.rel (0) target = $region5
    $region4: #{color_shape_forward.1} parent=1 // pred_region
      _
    $region5: #{color_shape_forward.1} parent=1 // pred_fallthru
      _
    // Predicated region
    $region6: #{color_shape_forward.1} parent=1 // pred_check
      _
    $region7: #{color_shape_forward.1} parent=1 // pred_check_branch
      %28 = sbr.rel (0) target = $region9
    $region8: #{color_shape_forward.1} parent=1 // pred_region
      _
    $region9: #{color_shape_forward.1} parent=1 // pred_fallthru
      _
    // Predicated region
    $region10: #{color_shape_forward.1} parent=1 // pred_check
      _
    $region11: #{color_shape_forward.1} parent=1 // pred_check_branch
      %30 = sbr.rel (0) target = $region13
    $region12: #{color_shape_forward.1} parent=1 // pred_region
      _
    $region13: #{color_shape_forward.1} parent=1 // pred_fallthru
      _
    // Predicated region
    $region14: #{color_shape_forward.1} parent=1 // pred_check
      _
    $region15: #{color_shape_forward.1} parent=1 // pred_check_branch
      %32 = sbr.rel (0) target = $region17
    $region16: #{color_shape_forward.1} parent=1 // pred_region
      _
    $region17: #{color_shape_forward.1} parent=1 // pred_fallthru
      _
    // Predicated region
    $region18: #{color_shape_forward.1} parent=1 // pred_check
      _
    $region19: #{color_shape_forward.1} parent=1 // pred_check_branch
      %34 = sbr.rel (0) target = $region21
    $region20: #{color_shape_forward.1} parent=1 // pred_region
      %36 = vsyncadd [#allocation3], 0
      %s37 = sshll.u32 %s4, 4
      %s38 = int_to_ptr.hbm [resolvable:$true] %s37
      %s39 = sshll.u32 [#allocation2], 4
      %s40 = int_to_ptr.vmem [resolvable:$true] %s39
      %45 = dma.hbm_to_vmem [thread:$0]  %s38, 6144, %s40, [#allocation3], 192, 192, 12
    $region21: #{color_shape_forward.1} parent=1 // pred_fallthru
      _
    // Predicated region
    $region22: #{color_shape_forward.1} parent=1 // pred_check
      _
    $region23: #{color_shape_forward.1} parent=1 // pred_check_branch
      %47 = sbr.rel (0) target = $region25
    $region24: #{color_shape_forward.1} parent=1 // pred_region
      _
    $region25: #{color_shape_forward.1} parent=1 // pred_fallthru
      _
    // Predicated region
    $region26: #{color_shape_forward.1} parent=1 // pred_check
      _
    $region27: #{color_shape_forward.1} parent=1 // pred_check_branch
      %49 = sbr.rel (0) target = $region29
    $region28: #{color_shape_forward.1} parent=1 // pred_region
      _
    $region29: #{color_shape_forward.1} parent=1 // pred_fallthru
      _
    // Predicated region
    $region30: #{color_shape_forward.1} parent=1 // pred_check
      _
    $region31: #{color_shape_forward.1} parent=1 // pred_check_branch
      %51 = sbr.rel (0) target = $region33
    $region32: #{color_shape_forward.1} parent=1 // pred_region
      _
    $region33: #{color_shape_forward.1} parent=1 // pred_fallthru
      _
    // Predicated region
    $region34: #{color_shape_forward.1} parent=1 // pred_check
      _
    $region35: #{color_shape_forward.1} parent=1 // pred_check_branch
      %53 = sbr.rel (0) target = $region37
    $region36: #{color_shape_forward.1} parent=1 // pred_region
      _
    $region37: #{color_shape_forward.1} parent=1 // pred_fallthru
      _
    // Predicated region
    $region38: #{color_shape_forward.1} parent=1 // pred_check
      _
    $region39: #{color_shape_forward.1} parent=1 // pred_check_branch
      %55 = sbr.rel (0) target = $region41
    $region40: #{color_shape_forward.1} parent=1 // pred_region
      _
    $region41: #{color_shape_forward.1} parent=1 // pred_fallthru
      _
    // Predicated region
    $region42: #{color_shape_forward.1} parent=1 // pred_check
      _
    $region43: #{color_shape_forward.1} parent=1 // pred_check_branch
      %57 = sbr.rel (0) target = $region45
    $region44: #{color_shape_forward.1} parent=1 // pred_region
      %59 = vsyncadd [#allocation5], 0
      %s60 = sshll.u32 %s10, 4
      %s61 = int_to_ptr.hbm [resolvable:$true] %s60
      %s62 = sshll.u32 [#allocation4], 4
      %s63 = int_to_ptr.vmem [resolvable:$true] %s62
      %68 = dma.hbm_to_vmem [thread:$0]  %s61, 8192, %s63, [#allocation5], 256, 256, 16
    $region45: #{color_shape_forward.1} parent=1 // pred_fallthru
      _
    // Predicated region
    $region46: #{color_shape_forward.1} parent=1 // pred_check
      _
    $region47: #{color_shape_forward.1} parent=1 // pred_check_branch
      %70 = sbr.rel (0) target = $region49
    $region48: #{color_shape_forward.1} parent=1 // pred_region
      _
    $region49: #{color_shape_forward.1} parent=1 // pred_fallthru
      _
    // Predicated region
    $region50: #{color_shape_forward.1} parent=1 // pred_check
      _
    $region51: #{color_shape_forward.1} parent=1 // pred_check_branch
      %72 = sbr.rel (0) target = $region53
    $region52: #{color_shape_forward.1} parent=1 // pred_region
      %74 = vsyncadd [#allocation5], 0
      %s75 = sshll.u32 %s12, 4
      %s76 = int_to_ptr.hbm [resolvable:$true] %s75
      %s77 = sshll.u32 [#allocation6], 4
      %s78 = int_to_ptr.vmem [resolvable:$true] %s77
      %83 = dma.hbm_to_vmem [thread:$0]  %s76, 8192, %s78, [#allocation5], 64, 64, 4
    $region53: #{color_shape_forward.1} parent=1 // pred_fallthru
      _
    // Predicated region
    $region54: #{color_shape_forward.1} parent=1 // pred_check
      _
    $region55: #{color_shape_forward.1} parent=1 // pred_check_branch
      %85 = sbr.rel (0) target = $region57
    $region56: #{color_shape_forward.1} parent=1 // pred_region
      _
    $region57: #{color_shape_forward.1} parent=1 // pred_fallthru
      _
    // Predicated region
    $region58: #{color_shape_forward.1} parent=1 // pred_check
      _
    $region59: #{color_shape_forward.1} parent=1 // pred_check_branch
      %87 = sbr.rel (0) target = $region61
    $region60: #{color_shape_forward.1} parent=1 // pred_region
      _
    $region61: #{color_shape_forward.1} parent=1 // pred_fallthru
      _
    // Predicated region
    $region62: #{color_shape_forward.1} parent=1 // pred_check
      _
    $region63: #{color_shape_forward.1} parent=1 // pred_check_branch
      %89 = sbr.rel (0) target = $region65
    $region64: #{color_shape_forward.1} parent=1 // pred_region
      _
    $region65: #{color_shape_forward.1} parent=1 // pred_fallthru
      _
    // Predicated region
    $region66: #{color_shape_forward.1} parent=1 // pred_check
      _
    $region67: #{color_shape_forward.1} parent=1 // pred_check_branch
      %91 = sbr.rel (0) target = $region69
    $region68: #{color_shape_forward.1} parent=1 // pred_region
      _
    $region69: #{color_shape_forward.1} parent=1 // pred_fallthru
      _
    // Predicated region
    $region70: #{color_shape_forward.1} parent=1 // pred_check
      _
    $region71: #{color_shape_forward.1} parent=1 // pred_check_branch
      %93 = sbr.rel (0) target = $region73
    $region72: #{color_shape_forward.1} parent=1 // pred_region
      _
    $region73: #{color_shape_forward.1} parent=1 // pred_fallthru
      _
    // Predicated region
    $region74: #{color_shape_forward.1} parent=1 // pred_check
      _
    $region75: #{color_shape_forward.1} parent=1 // pred_check_branch
      %95 = sbr.rel (0) target = $region77
    $region76: #{color_shape_forward.1} parent=1 // pred_region
      %97 = dma.done [#allocation3], 6144
    $region77: #{color_shape_forward.1} parent=1 // pred_fallthru
      _
    // Predicated region
    $region78: #{color_shape_forward.1} parent=1 // pred_check
      _
    $region79: #{color_shape_forward.1} parent=1 // pred_check_branch
      %99 = sbr.rel (0) target = $region81
    $region80: #{color_shape_forward.1} parent=1 // pred_region
      %101 = dma.done [#allocation5], 8192
    $region81: #{color_shape_forward.1} parent=1 // pred_fallthru
      _
    // Predicated region
    $region82: #{color_shape_forward.1} parent=1 // pred_check
      _
    $region83: #{color_shape_forward.1} parent=1 // pred_check_branch
      %103 = sbr.rel (0) target = $region85
    $region84: #{color_shape_forward.1} parent=1 // pred_region
      %105 = dma.done [#allocation5], 8192
    $region85: #{color_shape_forward.1} parent=1 // pred_fallthru
      _
    %v107 = vld [vmem:[%s0] sm:$0xff]
    %v108 = vld [vmem:[%s0 + $0x8] sm:$0xff]
    %v109 = vld [vmem:[%s2] sm:$0x1]
    %v110 = vld [vmem:[%s3] sm:$0x1]
    %111 = vadd.xlane.f32.xlu0 %v107
    %v112 = vpop.xlane.xlu0 %111
    %113 = vadd.xlane.f32.xlu0 %v108
    %v114 = vpop.xlane.xlu0 %113
    %v115 = vrcp.pop 128.0
    %v116 = vmul.f32 128.0, %v115
    %v117 = vsub.f32 1.0, %v116
    %v118 = vmul.f32 %v115, %v117
    %v119 = vadd.f32 %v115, %v118
    %vm120 = vweird.f32 %v115
    %v121 = vsel %vm120, %v115, %v119
    %v122 = vmul.f32 %v112, %v121
    %v123 = vmul.f32 %v114, %v121
    %v124 = vmul.f32 %v107, %v107
    %v125 = vmul.f32 %v108, %v108
    %126 = vadd.xlane.f32.xlu0 %v124
    %v127 = vpop.xlane.xlu0 %126
    %128 = vadd.xlane.f32.xlu0 %v125
    %v129 = vpop.xlane.xlu0 %128
    %v130 = vmul.f32 %v127, %v121
    %v131 = vmul.f32 %v129, %v121
    %v132 = vmul.f32 %v122, %v122
    %v133 = vmul.f32 %v123, %v123
    %v134 = vsub.f32 %v130, %v132
    %v135 = vsub.f32 %v131, %v133
    %v136 = vsub.f32 %v107, %v122
    %v137 = vsub.f32 %v108, %v123
    %v138 = vadd.f32 %v134, 1e-12
    %v139 = vadd.f32 %v135, 1e-12
    %v140 = vrsqrt.pop %v138
    %v141 = vmul.f32 %v140, %v138
    %v142 = vmul.f32 %v141, %v140
    %v143 = vmul.f32 0.5, %v142
    %v144 = vsub.f32 1.5, %v143
    %v145 = vmul.f32 %v140, %v144
    %vm146 = vweird.f32 %v138
    %vm147 = vweird.f32 %v140
    %vm148 = vmor %vm146, %vm147
    %v149 = vsel %vm148, %v140, %v145
    %v150 = vrsqrt.pop %v139
    %v151 = vmul.f32 %v150, %v139
    %v152 = vmul.f32 %v151, %v150
    %v153 = vmul.f32 0.5, %v152
    %v154 = vsub.f32 1.5, %v153
    %v155 = vmul.f32 %v150, %v154
    %vm156 = vweird.f32 %v139
    %vm157 = vweird.f32 %v150
    %vm158 = vmor %vm156, %vm157
    %v159 = vsel %vm158, %v150, %v155
    %v160 = vmul.f32 %v136, %v149
    %v161 = vmul.f32 %v137, %v159
    %v163 = vperm.slane %v109, 0
    %v165 = vmul.f32 %v160, %v163
    %v166 = vmul.f32 %v161, %v163
    %v168 = vperm.slane %v110, 0
    %v170 = vadd.f32 %v165, %v168
    %v171 = vadd.f32 %v166, %v168
    %v172 = vld [vmem:[%s1] sm:$0xff]
    %v173 = vld [vmem:[%s1 + $0x8] sm:$0xff]
    %v174 = vld [vmem:[%s1 + $0x10] sm:$0xff]
    %v175 = vld [vmem:[%s1 + $0x18] sm:$0xff]
    %v176 = vld [vmem:[%s1 + $0x20] sm:$0xff]
    %v177 = vld [vmem:[%s1 + $0x28] sm:$0xff]
    %v178 = vld [vmem:[%s1 + $0x30] sm:$0xff]
    %v179 = vld [vmem:[%s1 + $0x38] sm:$0xff]
    %v180 = vpack.c.bf16 %v171, %v170
    %v181 = vld [vmem:[#allocation2] sm:$0xff]
    %v182 = vld [vmem:[#allocation2 + $0x8] sm:$0xf]
    %v183 = vld [vmem:[#allocation2 + $0xc] sm:$0xff]
    %v184 = vld [vmem:[#allocation2 + $0x14] sm:$0xf]
    %v185 = vld [vmem:[#allocation2 + $0x18] sm:$0xff]
    %v186 = vld [vmem:[#allocation2 + $0x20] sm:$0xf]
    %v187 = vld [vmem:[#allocation2 + $0x24] sm:$0xff]
    %v188 = vld [vmem:[#allocation2 + $0x2c] sm:$0xf]
    %v189 = vld [vmem:[#allocation2 + $0x30] sm:$0xff]
    %v190 = vld [vmem:[#allocation2 + $0x38] sm:$0xf]
    %v191 = vld [vmem:[#allocation2 + $0x3c] sm:$0xff]
    %v192 = vld [vmem:[#allocation2 + $0x44] sm:$0xf]
    %v193 = vld [vmem:[#allocation2 + $0x48] sm:$0xff]
    %v194 = vld [vmem:[#allocation2 + $0x50] sm:$0xf]
    %v195 = vld [vmem:[#allocation2 + $0x54] sm:$0xff]
    %v196 = vld [vmem:[#allocation2 + $0x5c] sm:$0xf]
    %v197 = vld [vmem:[#allocation2 + $0x60] sm:$0xff]
    %v198 = vld [vmem:[#allocation2 + $0x68] sm:$0xf]
    %v199 = vld [vmem:[#allocation2 + $0x6c] sm:$0xff]
    %v200 = vld [vmem:[#allocation2 + $0x74] sm:$0xf]
    %v201 = vld [vmem:[#allocation2 + $0x78] sm:$0xff]
    %v202 = vld [vmem:[#allocation2 + $0x80] sm:$0xf]
    %v203 = vld [vmem:[#allocation2 + $0x84] sm:$0xff]
    %v204 = vld [vmem:[#allocation2 + $0x8c] sm:$0xf]
    %v205 = vld [vmem:[#allocation2 + $0x90] sm:$0xff]
    %v206 = vld [vmem:[#allocation2 + $0x98] sm:$0xf]
    %v207 = vld [vmem:[#allocation2 + $0x9c] sm:$0xff]
    %v208 = vld [vmem:[#allocation2 + $0xa4] sm:$0xf]
    %v209 = vld [vmem:[#allocation2 + $0xa8] sm:$0xff]
    %v210 = vld [vmem:[#allocation2 + $0xb0] sm:$0xf]
    %v211 = vld [vmem:[#allocation2 + $0xb4] sm:$0xff]
    %v212 = vld [vmem:[#allocation2 + $0xbc] sm:$0xf]
    %v213 = vld [vmem:[%s5] sm:$0x7]
    %v215 = vperm.slane %v213, 0
    %v216 = vperm.slane %v213, 1
    %v217 = vperm.slane %v213, 2
    %v253 = vunpack.c.l.b16 %v181
    %v254 = vunpack.c.h.b16 %v181
    %v255 = vunpack.c.l.b16 %v182
    %v256 = vunpack.c.l.b16 %v183
    %v257 = vunpack.c.h.b16 %v183
    %v258 = vunpack.c.l.b16 %v184
    %v259 = vunpack.c.l.b16 %v185
    %v260 = vunpack.c.h.b16 %v185
    %v261 = vunpack.c.l.b16 %v186
    %v262 = vunpack.c.l.b16 %v187
    %v263 = vunpack.c.h.b16 %v187
    %v264 = vunpack.c.l.b16 %v188
    %v265 = vunpack.c.l.b16 %v189
    %v266 = vunpack.c.h.b16 %v189
    %v267 = vunpack.c.l.b16 %v190
    %v268 = vunpack.c.l.b16 %v191
    %v269 = vunpack.c.h.b16 %v191
    %v270 = vunpack.c.l.b16 %v192
    %v271 = vunpack.c.l.b16 %v193
    %v272 = vunpack.c.h.b16 %v193
    %v273 = vunpack.c.l.b16 %v194
    %v274 = vunpack.c.l.b16 %v195
    %v275 = vunpack.c.h.b16 %v195
    %v276 = vunpack.c.l.b16 %v196
    %v277 = vunpack.c.l.b16 %v197
    %v278 = vunpack.c.h.b16 %v197
    %v279 = vunpack.c.l.b16 %v198
    %v280 = vunpack.c.l.b16 %v199
    %v281 = vunpack.c.h.b16 %v199
    %v282 = vunpack.c.l.b16 %v200
    %v283 = vunpack.c.l.b16 %v201
    %v284 = vunpack.c.h.b16 %v201
    %v285 = vunpack.c.l.b16 %v202
    %v286 = vunpack.c.l.b16 %v203
    %v287 = vunpack.c.h.b16 %v203
    %v288 = vunpack.c.l.b16 %v204
    %v289 = vunpack.c.l.b16 %v205
    %v290 = vunpack.c.h.b16 %v205
    %v291 = vunpack.c.l.b16 %v206
    %v292 = vunpack.c.l.b16 %v207
    %v293 = vunpack.c.h.b16 %v207
    %v294 = vunpack.c.l.b16 %v208
    %v295 = vunpack.c.l.b16 %v209
    %v296 = vunpack.c.h.b16 %v209
    %v297 = vunpack.c.l.b16 %v210
    %v298 = vunpack.c.l.b16 %v211
    %v299 = vunpack.c.h.b16 %v211
    %v300 = vunpack.c.l.b16 %v212
    %v301 = vpack.c.b16 %v256, %v253
    %v302 = vpack.c.b16 %v257, %v254
    %v303 = vpack.c.b16 %v258, %v255
    %v304 = vpack.c.b16 %v262, %v259
    %v305 = vpack.c.b16 %v263, %v260
    %v306 = vpack.c.b16 %v264, %v261
    %v307 = vpack.c.b16 %v268, %v265
    %v308 = vpack.c.b16 %v269, %v266
    %v309 = vpack.c.b16 %v270, %v267
    %v310 = vpack.c.b16 %v274, %v271
    %v311 = vpack.c.b16 %v275, %v272
    %v312 = vpack.c.b16 %v276, %v273
    %v313 = vpack.c.b16 %v280, %v277
    %v314 = vpack.c.b16 %v281, %v278
    %v315 = vpack.c.b16 %v282, %v279
    %v316 = vpack.c.b16 %v286, %v283
    %v317 = vpack.c.b16 %v287, %v284
    %v318 = vpack.c.b16 %v288, %v285
    %v319 = vpack.c.b16 %v292, %v289
    %v320 = vpack.c.b16 %v293, %v290
    %v321 = vpack.c.b16 %v294, %v291
    %v322 = vpack.c.b16 %v298, %v295
    %v323 = vpack.c.b16 %v299, %v296
    %v324 = vpack.c.b16 %v300, %v297
    %349 = vmatpush.bf16.msra.mxu0 %v322
    %350 = vmatpush.bf16.msra.mxu0 %v319
    %351 = vmatpush.bf16.msra.mxu0 %v316
    %352 = vmatpush.bf16.msra.mxu0 %v313
    %353 = vmatpush.bf16.msra.mxu0 %v310
    %354 = vmatpush.bf16.msra.mxu0 %v307
    %355 = vmatpush.bf16.msra.mxu0 %v304
    %356 = vmatpush.bf16.msra.mxu0 %v301
    %357 = vmatmul.bf16.gmra.mxu0 %v180
    %v358 = vpop.f32.mrf.mxu0
    %v359 = vadd.f32 %v215, %v358
    %v360 = vpop.f32.mrf.mxu0
    %v361 = vadd.f32 %v215, %v360
    %362 = vdwg.mxu0
    %363 = vmatpush.bf16.msra.mxu0 %v323
    %364 = vmatpush.bf16.msra.mxu0 %v320
    %365 = vmatpush.bf16.msra.mxu0 %v317
    %366 = vmatpush.bf16.msra.mxu0 %v314
    %367 = vmatpush.bf16.msra.mxu0 %v311
    %368 = vmatpush.bf16.msra.mxu0 %v308
    %369 = vmatpush.bf16.msra.mxu0 %v305
    %370 = vmatpush.bf16.msra.mxu0 %v302
    %371 = vmatmul.bf16.gmra.mxu0 %v180
    %v372 = vpop.f32.mrf.mxu0
    %v373 = vadd.f32 %v216, %v372
    %v374 = vpop.f32.mrf.mxu0
    %v375 = vadd.f32 %v216, %v374
    %376 = vdwg.mxu0
    %377 = vmatpush.bf16.msra.mxu0 %v324
    %378 = vmatpush.bf16.msra.mxu0 %v321
    %379 = vmatpush.bf16.msra.mxu0 %v318
    %380 = vmatpush.bf16.msra.mxu0 %v315
    %381 = vmatpush.bf16.msra.mxu0 %v312
    %382 = vmatpush.bf16.msra.mxu0 %v309
    %383 = vmatpush.bf16.msra.mxu0 %v306
    %384 = vmatpush.bf16.msra.mxu0 %v303
    %385 = vmatmul.bf16.gmra.mxu0 %v180
    %v386 = vpop.f32.mrf.mxu0
    %v387 = vadd.f32 %v217, %v386
    %v388 = vpop.f32.mrf.mxu0
    %v389 = vadd.f32 %v217, %v388
    %390 = vdwg.mxu0
    %393 = vrot.lane.b32.xlu0 %v359, 96
    %v394 = vpop.permute.xlu0 %393
    %395 = vrot.lane.b32.xlu0 %v361, 96
    %v396 = vpop.permute.xlu0 %395
    %399 = vrot.lane.b32.xlu0 %v359, 64
    %v400 = vpop.permute.xlu0 %399
    %401 = vrot.lane.b32.xlu0 %v361, 64
    %v402 = vpop.permute.xlu0 %401
    %405 = vrot.lane.b32.xlu0 %v359, 32
    %v406 = vpop.permute.xlu0 %405
    %407 = vrot.lane.b32.xlu0 %v361, 32
    %v408 = vpop.permute.xlu0 %407
    %v411 = vpack.c.bf16 %v359, %v359
    %v412 = vpack.c.bf16 %v361, %v361
    %v413 = vpack.c.bf16 %v394, %v394
    %v414 = vpack.c.bf16 %v396, %v396
    %v415 = vpack.c.bf16 %v400, %v400
    %v416 = vpack.c.bf16 %v402, %v402
    %v417 = vpack.c.bf16 %v406, %v406
    %v418 = vpack.c.bf16 %v408, %v408
    %421 = vrot.lane.b32.xlu0 %v373, 96
    %v422 = vpop.permute.xlu0 %421
    %423 = vrot.lane.b32.xlu0 %v375, 96
    %v424 = vpop.permute.xlu0 %423
    %427 = vrot.lane.b32.xlu0 %v373, 64
    %v428 = vpop.permute.xlu0 %427
    %429 = vrot.lane.b32.xlu0 %v375, 64
    %v430 = vpop.permute.xlu0 %429
    %433 = vrot.lane.b32.xlu0 %v373, 32
    %v434 = vpop.permute.xlu0 %433
    %435 = vrot.lane.b32.xlu0 %v375, 32
    %v436 = vpop.permute.xlu0 %435
    %v439 = vpack.c.bf16 %v373, %v373
    %v440 = vpack.c.bf16 %v375, %v375
    %v441 = vpack.c.bf16 %v422, %v422
    %v442 = vpack.c.bf16 %v424, %v424
    %v443 = vpack.c.bf16 %v428, %v428
    %v444 = vpack.c.bf16 %v430, %v430
    %v445 = vpack.c.bf16 %v434, %v434
    %v446 = vpack.c.bf16 %v436, %v436
    %449 = vrot.lane.b32.xlu0 %v387, 96
    %v450 = vpop.permute.xlu0 %449
    %451 = vrot.lane.b32.xlu0 %v389, 96
    %v452 = vpop.permute.xlu0 %451
    %455 = vrot.lane.b32.xlu0 %v387, 64
    %v456 = vpop.permute.xlu0 %455
    %457 = vrot.lane.b32.xlu0 %v389, 64
    %v458 = vpop.permute.xlu0 %457
    %461 = vrot.lane.b32.xlu0 %v387, 32
    %v462 = vpop.permute.xlu0 %461
    %463 = vrot.lane.b32.xlu0 %v389, 32
    %v464 = vpop.permute.xlu0 %463
    %v467 = vpack.c.bf16 %v387, %v387
    %v468 = vpack.c.bf16 %v389, %v389
    %v469 = vpack.c.bf16 %v450, %v450
    %v470 = vpack.c.bf16 %v452, %v452
    %v471 = vpack.c.bf16 %v456, %v456
    %v472 = vpack.c.bf16 %v458, %v458
    %v473 = vpack.c.bf16 %v462, %v462
    %v474 = vpack.c.bf16 %v464, %v464
    %vm475 = vcmask 261120
    %v477 = vsel %vm475, %v411, 0
    %v480 = vsel %vm475, %v439, 0
    %482 = vmatpush.bf16.xpose.msra.mxu0 0
    %483 = vmatpush.bf16.xpose.msra.mxu0 0
    %484 = vmatpush.bf16.xpose.msra.mxu0 0
    %485 = vmatpush.bf16.xpose.msra.mxu0 0
    %486 = vmatpush.bf16.xpose.msra.mxu0 0
    %487 = vmatpush.bf16.xpose.msra.mxu0 0
    %488 = vmatpush.bf16.xpose.msra.mxu0 0
    %489 = vmatpush.bf16.xpose.msra.mxu0 %v480
    %490 = vmatmul.bf16.gmra.mxu0 %v477
    %v491 = vpop.f32.mrf.mxu0
    %v492 = vadd.f32 %v172, %v491
    %v493 = vpop.f32.mrf.mxu0
    %494 = vdwg.mxu0
    %v496 = vsel %vm475, %v412, 0
    %v499 = vsel %vm475, %v440, 0
    %501 = vmatpush.bf16.xpose.msra.mxu0 0
    %502 = vmatpush.bf16.xpose.msra.mxu0 0
    %503 = vmatpush.bf16.xpose.msra.mxu0 0
    %504 = vmatpush.bf16.xpose.msra.mxu0 0
    %505 = vmatpush.bf16.xpose.msra.mxu0 0
    %506 = vmatpush.bf16.xpose.msra.mxu0 0
    %507 = vmatpush.bf16.xpose.msra.mxu0 0
    %508 = vmatpush.bf16.xpose.msra.mxu0 %v499
    %509 = vmatmul.bf16.gmra.mxu0 %v496
    %v510 = vpop.f32.mrf.mxu0
    %v511 = vadd.f32 %v173, %v510
    %v512 = vpop.f32.mrf.mxu0
    %513 = vdwg.mxu0
    %v515 = vsel %vm475, %v413, 0
    %v518 = vsel %vm475, %v441, 0
    %520 = vmatpush.bf16.xpose.msra.mxu0 0
    %521 = vmatpush.bf16.xpose.msra.mxu0 0
    %522 = vmatpush.bf16.xpose.msra.mxu0 0
    %523 = vmatpush.bf16.xpose.msra.mxu0 0
    %524 = vmatpush.bf16.xpose.msra.mxu0 0
    %525 = vmatpush.bf16.xpose.msra.mxu0 0
    %526 = vmatpush.bf16.xpose.msra.mxu0 0
    %527 = vmatpush.bf16.xpose.msra.mxu0 %v518
    %528 = vmatmul.bf16.gmra.mxu0 %v515
    %v529 = vpop.f32.mrf.mxu0
    %v530 = vadd.f32 %v174, %v529
    %v531 = vpop.f32.mrf.mxu0
    %532 = vdwg.mxu0
    %v534 = vsel %vm475, %v414, 0
    %v537 = vsel %vm475, %v442, 0
    %539 = vmatpush.bf16.xpose.msra.mxu0 0
    %540 = vmatpush.bf16.xpose.msra.mxu0 0
    %541 = vmatpush.bf16.xpose.msra.mxu0 0
    %542 = vmatpush.bf16.xpose.msra.mxu0 0
    %543 = vmatpush.bf16.xpose.msra.mxu0 0
    %544 = vmatpush.bf16.xpose.msra.mxu0 0
    %545 = vmatpush.bf16.xpose.msra.mxu0 0
    %546 = vmatpush.bf16.xpose.msra.mxu0 %v537
    %547 = vmatmul.bf16.gmra.mxu0 %v534
    %v548 = vpop.f32.mrf.mxu0
    %v549 = vadd.f32 %v175, %v548
    %v550 = vpop.f32.mrf.mxu0
    %551 = vdwg.mxu0
    %v553 = vsel %vm475, %v415, 0
    %v556 = vsel %vm475, %v443, 0
    %558 = vmatpush.bf16.xpose.msra.mxu0 0
    %559 = vmatpush.bf16.xpose.msra.mxu0 0
    %560 = vmatpush.bf16.xpose.msra.mxu0 0
    %561 = vmatpush.bf16.xpose.msra.mxu0 0
    %562 = vmatpush.bf16.xpose.msra.mxu0 0
    %563 = vmatpush.bf16.xpose.msra.mxu0 0
    %564 = vmatpush.bf16.xpose.msra.mxu0 0
    %565 = vmatpush.bf16.xpose.msra.mxu0 %v556
    %566 = vmatmul.bf16.gmra.mxu0 %v553
    %v567 = vpop.f32.mrf.mxu0
    %v568 = vadd.f32 %v176, %v567
    %v569 = vpop.f32.mrf.mxu0
    %570 = vdwg.mxu0
    %v572 = vsel %vm475, %v416, 0
    %v575 = vsel %vm475, %v444, 0
    %577 = vmatpush.bf16.xpose.msra.mxu0 0
    %578 = vmatpush.bf16.xpose.msra.mxu0 0
    %579 = vmatpush.bf16.xpose.msra.mxu0 0
    %580 = vmatpush.bf16.xpose.msra.mxu0 0
    %581 = vmatpush.bf16.xpose.msra.mxu0 0
    %582 = vmatpush.bf16.xpose.msra.mxu0 0
    %583 = vmatpush.bf16.xpose.msra.mxu0 0
    %584 = vmatpush.bf16.xpose.msra.mxu0 %v575
    %585 = vmatmul.bf16.gmra.mxu0 %v572
    %v586 = vpop.f32.mrf.mxu0
    %v587 = vadd.f32 %v177, %v586
    %v588 = vpop.f32.mrf.mxu0
    %589 = vdwg.mxu0
    %v591 = vsel %vm475, %v417, 0
    %v594 = vsel %vm475, %v445, 0
    %596 = vmatpush.bf16.xpose.msra.mxu0 0
    %597 = vmatpush.bf16.xpose.msra.mxu0 0
    %598 = vmatpush.bf16.xpose.msra.mxu0 0
    %599 = vmatpush.bf16.xpose.msra.mxu0 0
    %600 = vmatpush.bf16.xpose.msra.mxu0 0
    %601 = vmatpush.bf16.xpose.msra.mxu0 0
    %602 = vmatpush.bf16.xpose.msra.mxu0 0
    %603 = vmatpush.bf16.xpose.msra.mxu0 %v594
    %604 = vmatmul.bf16.gmra.mxu0 %v591
    %v605 = vpop.f32.mrf.mxu0
    %v606 = vadd.f32 %v178, %v605
    %v607 = vpop.f32.mrf.mxu0
    %608 = vdwg.mxu0
    %v610 = vsel %vm475, %v418, 0
    %v613 = vsel %vm475, %v446, 0
    %615 = vmatpush.bf16.xpose.msra.mxu0 0
    %616 = vmatpush.bf16.xpose.msra.mxu0 0
    %617 = vmatpush.bf16.xpose.msra.mxu0 0
    %618 = vmatpush.bf16.xpose.msra.mxu0 0
    %619 = vmatpush.bf16.xpose.msra.mxu0 0
    %620 = vmatpush.bf16.xpose.msra.mxu0 0
    %621 = vmatpush.bf16.xpose.msra.mxu0 0
    %622 = vmatpush.bf16.xpose.msra.mxu0 %v613
    %623 = vmatmul.bf16.gmra.mxu0 %v610
    %v624 = vpop.f32.mrf.mxu0
    %v625 = vadd.f32 %v179, %v624
    %v626 = vpop.f32.mrf.mxu0
    %627 = vdwg.mxu0
    %vm628 = vcmask 64512
    %v629 = vsel %vm628, %v492, -inf
    %630 = vmax.xlane.f32.xlu0 %v629
    %v631 = vpop.xlane.xlu0 %630
    %v632 = vsel %vm628, %v511, -inf
    %633 = vmax.xlane.f32.xlu0 %v632
    %v634 = vpop.xlane.xlu0 %633
    %v635 = vsel %vm628, %v530, -inf
    %636 = vmax.xlane.f32.xlu0 %v635
    %v637 = vpop.xlane.xlu0 %636
    %v638 = vsel %vm628, %v549, -inf
    %639 = vmax.xlane.f32.xlu0 %v638
    %v640 = vpop.xlane.xlu0 %639
    %v641 = vsel %vm628, %v568, -inf
    %642 = vmax.xlane.f32.xlu0 %v641
    %v643 = vpop.xlane.xlu0 %642
    %v644 = vsel %vm628, %v587, -inf
    %645 = vmax.xlane.f32.xlu0 %v644
    %v646 = vpop.xlane.xlu0 %645
    %v647 = vsel %vm628, %v606, -inf
    %648 = vmax.xlane.f32.xlu0 %v647
    %v649 = vpop.xlane.xlu0 %648
    %v650 = vsel %vm628, %v625, -inf
    %651 = vmax.xlane.f32.xlu0 %v650
    %v652 = vpop.xlane.xlu0 %651
    %v653 = vsub.f32 %v492, %v631
    %v654 = vsub.f32 %v511, %v634
    %v655 = vsub.f32 %v530, %v637
    %v656 = vsub.f32 %v549, %v640
    %v657 = vsub.f32 %v568, %v643
    %v658 = vsub.f32 %v587, %v646
    %v659 = vsub.f32 %v606, %v649
    %v660 = vsub.f32 %v625, %v652
    %v661 = vmul.f32 %v653, 1.442695
    %v662 = vpow.pop %v661
    %v663 = vmul.f32 %v654, 1.442695
    %v664 = vpow.pop %v663
    %v665 = vmul.f32 %v655, 1.442695
    %v666 = vpow.pop %v665
    %v667 = vmul.f32 %v656, 1.442695
    %v668 = vpow.pop %v667
    %v669 = vmul.f32 %v657, 1.442695
    %v670 = vpow.pop %v669
    %v671 = vmul.f32 %v658, 1.442695
    %v672 = vpow.pop %v671
    %v673 = vmul.f32 %v659, 1.442695
    %v674 = vpow.pop %v673
    %v675 = vmul.f32 %v660, 1.442695
    %v676 = vpow.pop %v675
    %v677 = vsel %vm628, %v662, 0.0
    %678 = vadd.xlane.f32.xlu0 %v677
    %v679 = vpop.xlane.xlu0 %678
    %v680 = vsel %vm628, %v664, 0.0
    %681 = vadd.xlane.f32.xlu0 %v680
    %v682 = vpop.xlane.xlu0 %681
    %v683 = vsel %vm628, %v666, 0.0
    %684 = vadd.xlane.f32.xlu0 %v683
    %v685 = vpop.xlane.xlu0 %684
    %v686 = vsel %vm628, %v668, 0.0
    %687 = vadd.xlane.f32.xlu0 %v686
    %v688 = vpop.xlane.xlu0 %687
    %v689 = vsel %vm628, %v670, 0.0
    %690 = vadd.xlane.f32.xlu0 %v689
    %v691 = vpop.xlane.xlu0 %690
    %v692 = vsel %vm628, %v672, 0.0
    %693 = vadd.xlane.f32.xlu0 %v692
    %v694 = vpop.xlane.xlu0 %693
    %v695 = vsel %vm628, %v674, 0.0
    %696 = vadd.xlane.f32.xlu0 %v695
    %v697 = vpop.xlane.xlu0 %696
    %v698 = vsel %vm628, %v676, 0.0
    %699 = vadd.xlane.f32.xlu0 %v698
    %v700 = vpop.xlane.xlu0 %699
    %v701 = vrcp.pop %v679
    %v702 = vrcp.pop %v682
    %v703 = vrcp.pop %v685
    %v704 = vrcp.pop %v688
    %v705 = vrcp.pop %v691
    %v706 = vrcp.pop %v694
    %v707 = vrcp.pop %v697
    %v708 = vrcp.pop %v700
    %v709 = vmul.f32 %v662, %v701
    %v710 = vmul.f32 %v664, %v702
    %v711 = vmul.f32 %v666, %v703
    %v712 = vmul.f32 %v668, %v704
    %v713 = vmul.f32 %v670, %v705
    %v714 = vmul.f32 %v672, %v706
    %v715 = vmul.f32 %v674, %v707
    %v716 = vmul.f32 %v676, %v708
    %v717 = vpack.c.bf16 %v709, %v709
    %v718 = vpack.c.bf16 %v710, %v710
    %v719 = vpack.c.bf16 %v711, %v711
    %v720 = vpack.c.bf16 %v712, %v712
    %v721 = vpack.c.bf16 %v713, %v713
    %v722 = vpack.c.bf16 %v714, %v714
    %v723 = vpack.c.bf16 %v715, %v715
    %v724 = vpack.c.bf16 %v716, %v716
    %v726 = vsel %vm628, %v717, 0
    %vm728 = vcmask 1043456
    %v730 = vsel %vm728, %v467, 0
    %732 = vmatpush.bf16.msra.mxu0 0
    %733 = vmatpush.bf16.msra.mxu0 0
    %734 = vmatpush.bf16.msra.mxu0 0
    %735 = vmatpush.bf16.msra.mxu0 0
    %736 = vmatpush.bf16.msra.mxu0 0
    %737 = vmatpush.bf16.msra.mxu0 0
    %738 = vmatpush.bf16.msra.mxu0 0
    %739 = vmatpush.bf16.msra.mxu0 %v730
    %740 = vmatmul.bf16.gmra.mxu0 %v726
    %v741 = vpop.f32.mrf.mxu0
    %v742 = vadd.f32 0.0, %v741
    %v743 = vpop.f32.mrf.mxu0
    %744 = vdwg.mxu0
    %v746 = vsel %vm628, %v718, 0
    %v749 = vsel %vm728, %v468, 0
    %751 = vmatpush.bf16.msra.mxu0 0
    %752 = vmatpush.bf16.msra.mxu0 0
    %753 = vmatpush.bf16.msra.mxu0 0
    %754 = vmatpush.bf16.msra.mxu0 0
    %755 = vmatpush.bf16.msra.mxu0 0
    %756 = vmatpush.bf16.msra.mxu0 0
    %757 = vmatpush.bf16.msra.mxu0 0
    %758 = vmatpush.bf16.msra.mxu0 %v749
    %759 = vmatmul.bf16.gmra.mxu0 %v746
    %v760 = vpop.f32.mrf.mxu0
    %v761 = vadd.f32 0.0, %v760
    %v762 = vpop.f32.mrf.mxu0
    %763 = vdwg.mxu0
    %v765 = vsel %vm628, %v719, 0
    %v768 = vsel %vm728, %v469, 0
    %770 = vmatpush.bf16.msra.mxu0 0
    %771 = vmatpush.bf16.msra.mxu0 0
    %772 = vmatpush.bf16.msra.mxu0 0
    %773 = vmatpush.bf16.msra.mxu0 0
    %774 = vmatpush.bf16.msra.mxu0 0
    %775 = vmatpush.bf16.msra.mxu0 0
    %776 = vmatpush.bf16.msra.mxu0 0
    %777 = vmatpush.bf16.msra.mxu0 %v768
    %778 = vmatmul.bf16.gmra.mxu0 %v765
    %v779 = vpop.f32.mrf.mxu0
    %v780 = vadd.f32 0.0, %v779
    %v781 = vpop.f32.mrf.mxu0
    %782 = vdwg.mxu0
    %v784 = vsel %vm628, %v720, 0
    %v787 = vsel %vm728, %v470, 0
    %789 = vmatpush.bf16.msra.mxu0 0
    %790 = vmatpush.bf16.msra.mxu0 0
    %791 = vmatpush.bf16.msra.mxu0 0
    %792 = vmatpush.bf16.msra.mxu0 0
    %793 = vmatpush.bf16.msra.mxu0 0
    %794 = vmatpush.bf16.msra.mxu0 0
    %795 = vmatpush.bf16.msra.mxu0 0
    %796 = vmatpush.bf16.msra.mxu0 %v787
    %797 = vmatmul.bf16.gmra.mxu0 %v784
    %v798 = vpop.f32.mrf.mxu0
    %v799 = vadd.f32 0.0, %v798
    %v800 = vpop.f32.mrf.mxu0
    %801 = vdwg.mxu0
    %v803 = vsel %vm628, %v721, 0
    %v806 = vsel %vm728, %v471, 0
    %808 = vmatpush.bf16.msra.mxu0 0
    %809 = vmatpush.bf16.msra.mxu0 0
    %810 = vmatpush.bf16.msra.mxu0 0
    %811 = vmatpush.bf16.msra.mxu0 0
    %812 = vmatpush.bf16.msra.mxu0 0
    %813 = vmatpush.bf16.msra.mxu0 0
    %814 = vmatpush.bf16.msra.mxu0 0
    %815 = vmatpush.bf16.msra.mxu0 %v806
    %816 = vmatmul.bf16.gmra.mxu0 %v803
    %v817 = vpop.f32.mrf.mxu0
    %v818 = vadd.f32 0.0, %v817
    %v819 = vpop.f32.mrf.mxu0
    %820 = vdwg.mxu0
    %v822 = vsel %vm628, %v722, 0
    %v825 = vsel %vm728, %v472, 0
    %827 = vmatpush.bf16.msra.mxu0 0
    %828 = vmatpush.bf16.msra.mxu0 0
    %829 = vmatpush.bf16.msra.mxu0 0
    %830 = vmatpush.bf16.msra.mxu0 0
    %831 = vmatpush.bf16.msra.mxu0 0
    %832 = vmatpush.bf16.msra.mxu0 0
    %833 = vmatpush.bf16.msra.mxu0 0
    %834 = vmatpush.bf16.msra.mxu0 %v825
    %835 = vmatmul.bf16.gmra.mxu0 %v822
    %v836 = vpop.f32.mrf.mxu0
    %v837 = vadd.f32 0.0, %v836
    %v838 = vpop.f32.mrf.mxu0
    %839 = vdwg.mxu0
    %v841 = vsel %vm628, %v723, 0
    %v844 = vsel %vm728, %v473, 0
    %846 = vmatpush.bf16.msra.mxu0 0
    %847 = vmatpush.bf16.msra.mxu0 0
    %848 = vmatpush.bf16.msra.mxu0 0
    %849 = vmatpush.bf16.msra.mxu0 0
    %850 = vmatpush.bf16.msra.mxu0 0
    %851 = vmatpush.bf16.msra.mxu0 0
    %852 = vmatpush.bf16.msra.mxu0 0
    %853 = vmatpush.bf16.msra.mxu0 %v844
    %854 = vmatmul.bf16.gmra.mxu0 %v841
    %v855 = vpop.f32.mrf.mxu0
    %v856 = vadd.f32 0.0, %v855
    %v857 = vpop.f32.mrf.mxu0
    %858 = vdwg.mxu0
    %v860 = vsel %vm628, %v724, 0
    %v863 = vsel %vm728, %v474, 0
    %865 = vmatpush.bf16.msra.mxu0 0
    %866 = vmatpush.bf16.msra.mxu0 0
    %867 = vmatpush.bf16.msra.mxu0 0
    %868 = vmatpush.bf16.msra.mxu0 0
    %869 = vmatpush.bf16.msra.mxu0 0
    %870 = vmatpush.bf16.msra.mxu0 0
    %871 = vmatpush.bf16.msra.mxu0 0
    %872 = vmatpush.bf16.msra.mxu0 %v863
    %873 = vmatmul.bf16.gmra.mxu0 %v860
    %v874 = vpop.f32.mrf.mxu0
    %v875 = vadd.f32 0.0, %v874
    %v876 = vpop.f32.mrf.mxu0
    %877 = vdwg.mxu0
    %880 = vrot.lane.b32.xlu0 %v780, 32
    %v881 = vpop.permute.xlu0 %880
    %882 = vrot.lane.b32.xlu0 %v799, 32
    %v883 = vpop.permute.xlu0 %882
    %888 = vrot.lane.b32.xlu0 %v818, 64
    %v889 = vpop.permute.xlu0 %888
    %890 = vrot.lane.b32.xlu0 %v837, 64
    %v891 = vpop.permute.xlu0 %890
    %896 = vrot.lane.b32.xlu0 %v856, 96
    %v897 = vpop.permute.xlu0 %896
    %898 = vrot.lane.b32.xlu0 %v875, 96
    %v899 = vpop.permute.xlu0 %898
    %v902 = vsel %vm475, %v742, %v881
    %v903 = vsel %vm475, %v761, %v883
    %vm904 = vcmask 523264
    %v905 = vsel %vm904, %v902, %v889
    %v906 = vsel %vm904, %v903, %v891
    %vm907 = vcmask 785408
    %v908 = vsel %vm907, %v905, %v897
    %v909 = vsel %vm907, %v906, %v899
    %v910 = vpack.c.bf16 %v909, %v908
    %v911 = vld [vmem:[%s6] sm:$0xf]
    %v912 = vld [vmem:[%s6 + $0x4] sm:$0xf]
    %v913 = vld [vmem:[%s6 + $0x8] sm:$0xf]
    %v914 = vld [vmem:[%s6 + $0xc] sm:$0xf]
    %v915 = vld [vmem:[%s6 + $0x10] sm:$0xf]
    %v916 = vld [vmem:[%s6 + $0x14] sm:$0xf]
    %v917 = vld [vmem:[%s6 + $0x18] sm:$0xf]
    %v918 = vld [vmem:[%s6 + $0x1c] sm:$0xf]
    %v919 = vld [vmem:[%s6 + $0x20] sm:$0xf]
    %v920 = vld [vmem:[%s6 + $0x24] sm:$0xf]
    %v921 = vld [vmem:[%s6 + $0x28] sm:$0xf]
    %v922 = vld [vmem:[%s6 + $0x2c] sm:$0xf]
    %v923 = vld [vmem:[%s6 + $0x30] sm:$0xf]
    %v924 = vld [vmem:[%s6 + $0x34] sm:$0xf]
    %v925 = vld [vmem:[%s6 + $0x38] sm:$0xf]
    %v926 = vld [vmem:[%s6 + $0x3c] sm:$0xf]
    %v927 = vld [vmem:[%s7] sm:$0x1]
    %v929 = vperm.slane %v927, 0
    %v947 = vunpack.c.l.b16 %v911
    %v948 = vunpack.c.l.b16 %v912
    %v949 = vunpack.c.l.b16 %v913
    %v950 = vunpack.c.l.b16 %v914
    %v951 = vunpack.c.l.b16 %v915
    %v952 = vunpack.c.l.b16 %v916
    %v953 = vunpack.c.l.b16 %v917
    %v954 = vunpack.c.l.b16 %v918
    %v955 = vunpack.c.l.b16 %v919
    %v956 = vunpack.c.l.b16 %v920
    %v957 = vunpack.c.l.b16 %v921
    %v958 = vunpack.c.l.b16 %v922
    %v959 = vunpack.c.l.b16 %v923
    %v960 = vunpack.c.l.b16 %v924
    %v961 = vunpack.c.l.b16 %v925
    %v962 = vunpack.c.l.b16 %v926
    %v963 = vpack.c.b16 %v948, %v947
    %v964 = vpack.c.b16 %v950, %v949
    %v965 = vpack.c.b16 %v952, %v951
    %v966 = vpack.c.b16 %v954, %v953
    %v967 = vpack.c.b16 %v956, %v955
    %v968 = vpack.c.b16 %v958, %v957
    %v969 = vpack.c.b16 %v960, %v959
    %v970 = vpack.c.b16 %v962, %v961
    %979 = vmatpush.bf16.msra.mxu0 %v970
    %980 = vmatpush.bf16.msra.mxu0 %v969
    %981 = vmatpush.bf16.msra.mxu0 %v968
    %982 = vmatpush.bf16.msra.mxu0 %v967
    %983 = vmatpush.bf16.msra.mxu0 %v966
    %984 = vmatpush.bf16.msra.mxu0 %v965
    %985 = vmatpush.bf16.msra.mxu0 %v964
    %986 = vmatpush.bf16.msra.mxu0 %v963
    %987 = vmatmul.bf16.gmra.mxu0 %v910
    %v988 = vpop.f32.mrf.mxu0
    %v989 = vadd.f32 %v929, %v988
    %v990 = vpop.f32.mrf.mxu0
    %v991 = vadd.f32 %v929, %v990
    %992 = vdwg.mxu0
    %v993 = vadd.f32 %v170, %v989
    %v994 = vadd.f32 %v171, %v991
    %v995 = vld [vmem:[%s8] sm:$0x1]
    %v996 = vld [vmem:[%s9] sm:$0x1]
    %997 = vadd.xlane.f32.xlu0 %v993
    %v998 = vpop.xlane.xlu0 %997
    %999 = vadd.xlane.f32.xlu0 %v994
    %v1000 = vpop.xlane.xlu0 %999
    %v1001 = vmul.f32 %v998, %v121
    %v1002 = vmul.f32 %v1000, %v121
    %v1003 = vmul.f32 %v993, %v993
    %v1004 = vmul.f32 %v994, %v994
    %1005 = vadd.xlane.f32.xlu0 %v1003
    %v1006 = vpop.xlane.xlu0 %1005
    %1007 = vadd.xlane.f32.xlu0 %v1004
    %v1008 = vpop.xlane.xlu0 %1007
    %v1009 = vmul.f32 %v1006, %v121
    %v1010 = vmul.f32 %v1008, %v121
    %v1011 = vmul.f32 %v1001, %v1001
    %v1012 = vmul.f32 %v1002, %v1002
    %v1013 = vsub.f32 %v1009, %v1011
    %v1014 = vsub.f32 %v1010, %v1012
    %v1015 = vsub.f32 %v993, %v1001
    %v1016 = vsub.f32 %v994, %v1002
    %v1017 = vadd.f32 %v1013, 1e-12
    %v1018 = vadd.f32 %v1014, 1e-12
    %v1019 = vrsqrt.pop %v1017
    %v1020 = vmul.f32 %v1019, %v1017
    %v1021 = vmul.f32 %v1020, %v1019
    %v1022 = vmul.f32 0.5, %v1021
    %v1023 = vsub.f32 1.5, %v1022
    %v1024 = vmul.f32 %v1019, %v1023
    %vm1025 = vweird.f32 %v1017
    %vm1026 = vweird.f32 %v1019
    %vm1027 = vmor %vm1025, %vm1026
    %v1028 = vsel %vm1027, %v1019, %v1024
    %v1029 = vrsqrt.pop %v1018
    %v1030 = vmul.f32 %v1029, %v1018
    %v1031 = vmul.f32 %v1030, %v1029
    %v1032 = vmul.f32 0.5, %v1031
    %v1033 = vsub.f32 1.5, %v1032
    %v1034 = vmul.f32 %v1029, %v1033
    %vm1035 = vweird.f32 %v1018
    %vm1036 = vweird.f32 %v1029
    %vm1037 = vmor %vm1035, %vm1036
    %v1038 = vsel %vm1037, %v1029, %v1034
    %v1039 = vmul.f32 %v1015, %v1028
    %v1040 = vmul.f32 %v1016, %v1038
    %v1042 = vperm.slane %v995, 0
    %v1044 = vmul.f32 %v1039, %v1042
    %v1045 = vmul.f32 %v1040, %v1042
    %v1047 = vperm.slane %v996, 0
    %v1049 = vadd.f32 %v1044, %v1047
    %v1050 = vadd.f32 %v1045, %v1047
    %v1051 = vpack.c.bf16 %v1050, %v1049
    %v1052 = vld [vmem:[#allocation4] sm:$0xff]
    %v1053 = vld [vmem:[#allocation4 + $0x8] sm:$0xff]
    %v1054 = vld [vmem:[#allocation4 + $0x10] sm:$0xff]
    %v1055 = vld [vmem:[#allocation4 + $0x18] sm:$0xff]
    %v1056 = vld [vmem:[#allocation4 + $0x20] sm:$0xff]
    %v1057 = vld [vmem:[#allocation4 + $0x28] sm:$0xff]
    %v1058 = vld [vmem:[#allocation4 + $0x30] sm:$0xff]
    %v1059 = vld [vmem:[#allocation4 + $0x38] sm:$0xff]
    %v1060 = vld [vmem:[#allocation4 + $0x40] sm:$0xff]
    %v1061 = vld [vmem:[#allocation4 + $0x48] sm:$0xff]
    %v1062 = vld [vmem:[#allocation4 + $0x50] sm:$0xff]
    %v1063 = vld [vmem:[#allocation4 + $0x58] sm:$0xff]
    %v1064 = vld [vmem:[#allocation4 + $0x60] sm:$0xff]
    %v1065 = vld [vmem:[#allocation4 + $0x68] sm:$0xff]
    %v1066 = vld [vmem:[#allocation4 + $0x70] sm:$0xff]
    %v1067 = vld [vmem:[#allocation4 + $0x78] sm:$0xff]
    %v1068 = vld [vmem:[#allocation4 + $0x80] sm:$0xff]
    %v1069 = vld [vmem:[#allocation4 + $0x88] sm:$0xff]
    %v1070 = vld [vmem:[#allocation4 + $0x90] sm:$0xff]
    %v1071 = vld [vmem:[#allocation4 + $0x98] sm:$0xff]
    %v1072 = vld [vmem:[#allocation4 + $0xa0] sm:$0xff]
    %v1073 = vld [vmem:[#allocation4 + $0xa8] sm:$0xff]
    %v1074 = vld [vmem:[#allocation4 + $0xb0] sm:$0xff]
    %v1075 = vld [vmem:[#allocation4 + $0xb8] sm:$0xff]
    %v1076 = vld [vmem:[#allocation4 + $0xc0] sm:$0xff]
    %v1077 = vld [vmem:[#allocation4 + $0xc8] sm:$0xff]
    %v1078 = vld [vmem:[#allocation4 + $0xd0] sm:$0xff]
    %v1079 = vld [vmem:[#allocation4 + $0xd8] sm:$0xff]
    %v1080 = vld [vmem:[#allocation4 + $0xe0] sm:$0xff]
    %v1081 = vld [vmem:[#allocation4 + $0xe8] sm:$0xff]
    %v1082 = vld [vmem:[#allocation4 + $0xf0] sm:$0xff]
    %v1083 = vld [vmem:[#allocation4 + $0xf8] sm:$0xff]
    %v1084 = vld [vmem:[%s11] sm:$0xf]
    %v1086 = vperm.slane %v1084, 0
    %v1087 = vperm.slane %v1084, 1
    %v1088 = vperm.slane %v1084, 2
    %v1089 = vperm.slane %v1084, 3
    %v1126 = vunpack.c.l.b16 %v1052
    %v1127 = vunpack.c.h.b16 %v1052
    %v1128 = vunpack.c.l.b16 %v1053
    %v1129 = vunpack.c.h.b16 %v1053
    %v1130 = vunpack.c.l.b16 %v1054
    %v1131 = vunpack.c.h.b16 %v1054
    %v1132 = vunpack.c.l.b16 %v1055
    %v1133 = vunpack.c.h.b16 %v1055
    %v1134 = vunpack.c.l.b16 %v1056
    %v1135 = vunpack.c.h.b16 %v1056
    %v1136 = vunpack.c.l.b16 %v1057
    %v1137 = vunpack.c.h.b16 %v1057
    %v1138 = vunpack.c.l.b16 %v1058
    %v1139 = vunpack.c.h.b16 %v1058
    %v1140 = vunpack.c.l.b16 %v1059
    %v1141 = vunpack.c.h.b16 %v1059
    %v1142 = vunpack.c.l.b16 %v1060
    %v1143 = vunpack.c.h.b16 %v1060
    %v1144 = vunpack.c.l.b16 %v1061
    %v1145 = vunpack.c.h.b16 %v1061
    %v1146 = vunpack.c.l.b16 %v1062
    %v1147 = vunpack.c.h.b16 %v1062
    %v1148 = vunpack.c.l.b16 %v1063
    %v1149 = vunpack.c.h.b16 %v1063
    %v1150 = vunpack.c.l.b16 %v1064
    %v1151 = vunpack.c.h.b16 %v1064
    %v1152 = vunpack.c.l.b16 %v1065
    %v1153 = vunpack.c.h.b16 %v1065
    %v1154 = vunpack.c.l.b16 %v1066
    %v1155 = vunpack.c.h.b16 %v1066
    %v1156 = vunpack.c.l.b16 %v1067
    %v1157 = vunpack.c.h.b16 %v1067
    %v1158 = vunpack.c.l.b16 %v1068
    %v1159 = vunpack.c.h.b16 %v1068
    %v1160 = vunpack.c.l.b16 %v1069
    %v1161 = vunpack.c.h.b16 %v1069
    %v1162 = vunpack.c.l.b16 %v1070
    %v1163 = vunpack.c.h.b16 %v1070
    %v1164 = vunpack.c.l.b16 %v1071
    %v1165 = vunpack.c.h.b16 %v1071
    %v1166 = vunpack.c.l.b16 %v1072
    %v1167 = vunpack.c.h.b16 %v1072
    %v1168 = vunpack.c.l.b16 %v1073
    %v1169 = vunpack.c.h.b16 %v1073
    %v1170 = vunpack.c.l.b16 %v1074
    %v1171 = vunpack.c.h.b16 %v1074
    %v1172 = vunpack.c.l.b16 %v1075
    %v1173 = vunpack.c.h.b16 %v1075
    %v1174 = vunpack.c.l.b16 %v1076
    %v1175 = vunpack.c.h.b16 %v1076
    %v1176 = vunpack.c.l.b16 %v1077
    %v1177 = vunpack.c.h.b16 %v1077
    %v1178 = vunpack.c.l.b16 %v1078
    %v1179 = vunpack.c.h.b16 %v1078
    %v1180 = vunpack.c.l.b16 %v1079
    %v1181 = vunpack.c.h.b16 %v1079
    %v1182 = vunpack.c.l.b16 %v1080
    %v1183 = vunpack.c.h.b16 %v1080
    %v1184 = vunpack.c.l.b16 %v1081
    %v1185 = vunpack.c.h.b16 %v1081
    %v1186 = vunpack.c.l.b16 %v1082
    %v1187 = vunpack.c.h.b16 %v1082
    %v1188 = vunpack.c.l.b16 %v1083
    %v1189 = vunpack.c.h.b16 %v1083
    %v1190 = vpack.c.b16 %v1130, %v1126
    %v1191 = vpack.c.b16 %v1131, %v1127
    %v1192 = vpack.c.b16 %v1132, %v1128
    %v1193 = vpack.c.b16 %v1133, %v1129
    %v1194 = vpack.c.b16 %v1138, %v1134
    %v1195 = vpack.c.b16 %v1139, %v1135
    %v1196 = vpack.c.b16 %v1140, %v1136
    %v1197 = vpack.c.b16 %v1141, %v1137
    %v1198 = vpack.c.b16 %v1146, %v1142
    %v1199 = vpack.c.b16 %v1147, %v1143
    %v1200 = vpack.c.b16 %v1148, %v1144
    %v1201 = vpack.c.b16 %v1149, %v1145
    %v1202 = vpack.c.b16 %v1154, %v1150
    %v1203 = vpack.c.b16 %v1155, %v1151
    %v1204 = vpack.c.b16 %v1156, %v1152
    %v1205 = vpack.c.b16 %v1157, %v1153
    %v1206 = vpack.c.b16 %v1162, %v1158
    %v1207 = vpack.c.b16 %v1163, %v1159
    %v1208 = vpack.c.b16 %v1164, %v1160
    %v1209 = vpack.c.b16 %v1165, %v1161
    %v1210 = vpack.c.b16 %v1170, %v1166
    %v1211 = vpack.c.b16 %v1171, %v1167
    %v1212 = vpack.c.b16 %v1172, %v1168
    %v1213 = vpack.c.b16 %v1173, %v1169
    %v1214 = vpack.c.b16 %v1178, %v1174
    %v1215 = vpack.c.b16 %v1179, %v1175
    %v1216 = vpack.c.b16 %v1180, %v1176
    %v1217 = vpack.c.b16 %v1181, %v1177
    %v1218 = vpack.c.b16 %v1186, %v1182
    %v1219 = vpack.c.b16 %v1187, %v1183
    %v1220 = vpack.c.b16 %v1188, %v1184
    %v1221 = vpack.c.b16 %v1189, %v1185
    %1254 = vmatpush.bf16.msra.mxu0 %v1218
    %1255 = vmatpush.bf16.msra.mxu0 %v1214
    %1256 = vmatpush.bf16.msra.mxu0 %v1210
    %1257 = vmatpush.bf16.msra.mxu0 %v1206
    %1258 = vmatpush.bf16.msra.mxu0 %v1202
    %1259 = vmatpush.bf16.msra.mxu0 %v1198
    %1260 = vmatpush.bf16.msra.mxu0 %v1194
    %1261 = vmatpush.bf16.msra.mxu0 %v1190
    %1262 = vmatmul.bf16.gmra.mxu0 %v1051
    %v1263 = vpop.f32.mrf.mxu0
    %v1264 = vadd.f32 %v1086, %v1263
    %v1265 = vpop.f32.mrf.mxu0
    %v1266 = vadd.f32 %v1086, %v1265
    %1267 = vdwg.mxu0
    %1268 = vmatpush.bf16.msra.mxu0 %v1219
    %1269 = vmatpush.bf16.msra.mxu0 %v1215
    %1270 = vmatpush.bf16.msra.mxu0 %v1211
    %1271 = vmatpush.bf16.msra.mxu0 %v1207
    %1272 = vmatpush.bf16.msra.mxu0 %v1203
    %1273 = vmatpush.bf16.msra.mxu0 %v1199
    %1274 = vmatpush.bf16.msra.mxu0 %v1195
    %1275 = vmatpush.bf16.msra.mxu0 %v1191
    %1276 = vmatmul.bf16.gmra.mxu0 %v1051
    %v1277 = vpop.f32.mrf.mxu0
    %v1278 = vadd.f32 %v1087, %v1277
    %v1279 = vpop.f32.mrf.mxu0
    %v1280 = vadd.f32 %v1087, %v1279
    %1281 = vdwg.mxu0
    %1282 = vmatpush.bf16.msra.mxu0 %v1220
    %1283 = vmatpush.bf16.msra.mxu0 %v1216
    %1284 = vmatpush.bf16.msra.mxu0 %v1212
    %1285 = vmatpush.bf16.msra.mxu0 %v1208
    %1286 = vmatpush.bf16.msra.mxu0 %v1204
    %1287 = vmatpush.bf16.msra.mxu0 %v1200
    %1288 = vmatpush.bf16.msra.mxu0 %v1196
    %1289 = vmatpush.bf16.msra.mxu0 %v1192
    %1290 = vmatmul.bf16.gmra.mxu0 %v1051
    %v1291 = vpop.f32.mrf.mxu0
    %v1292 = vadd.f32 %v1088, %v1291
    %v1293 = vpop.f32.mrf.mxu0
    %v1294 = vadd.f32 %v1088, %v1293
    %1295 = vdwg.mxu0
    %1296 = vmatpush.bf16.msra.mxu0 %v1221
    %1297 = vmatpush.bf16.msra.mxu0 %v1217
    %1298 = vmatpush.bf16.msra.mxu0 %v1213
    %1299 = vmatpush.bf16.msra.mxu0 %v1209
    %1300 = vmatpush.bf16.msra.mxu0 %v1205
    %1301 = vmatpush.bf16.msra.mxu0 %v1201
    %1302 = vmatpush.bf16.msra.mxu0 %v1197
    %1303 = vmatpush.bf16.msra.mxu0 %v1193
    %1304 = vmatmul.bf16.gmra.mxu0 %v1051
    %v1305 = vpop.f32.mrf.mxu0
    %v1306 = vadd.f32 %v1089, %v1305
    %v1307 = vpop.f32.mrf.mxu0
    %v1308 = vadd.f32 %v1089, %v1307
    %1309 = vdwg.mxu0
    %v1310 = vmul.f32 %v1264, 0.5
    %v1311 = vmul.f32 %v1278, 0.5
    %v1312 = vmul.f32 %v1292, 0.5
    %v1313 = vmul.f32 %v1306, 0.5
    %v1314 = vmul.f32 %v1266, 0.5
    %v1315 = vmul.f32 %v1280, 0.5
    %v1316 = vmul.f32 %v1294, 0.5
    %v1317 = vmul.f32 %v1308, 0.5
    %v1318 = vmul.f32 %v1264, 0.70710677
    %v1319 = vmul.f32 %v1278, 0.70710677
    %v1320 = vmul.f32 %v1292, 0.70710677
    %v1321 = vmul.f32 %v1306, 0.70710677
    %v1322 = vmul.f32 %v1266, 0.70710677
    %v1323 = vmul.f32 %v1280, 0.70710677
    %v1324 = vmul.f32 %v1294, 0.70710677
    %v1325 = vmul.f32 %v1308, 0.70710677
    %v1326 = vmul.f32 %v1318, %v1318
    %v1327 = vmin.f32 16.0, %v1326
    %v1328 = vmul.f32 %v1327, 2.1237322e-06
    %v1329 = vadd.f32 %v1328, 0.00028619796
    %v1330 = vmul.f32 %v1327, %v1329
    %v1331 = vadd.f32 %v1330, 0.0036580483
    %v1332 = vmul.f32 %v1327, %v1331
    %v1333 = vadd.f32 %v1332, 0.05243302
    %v1334 = vmul.f32 %v1327, %v1333
    %v1335 = vadd.f32 %v1334, 0.18741608
    %v1336 = vmul.f32 %v1327, %v1335
    %v1337 = vadd.f32 %v1336, 1.1283791
    %v1338 = vmul.f32 %v1318, %v1337
    %v1339 = vmul.f32 %v1327, 3.8918573e-05
    %v1340 = vadd.f32 %v1339, 0.001143296
    %v1341 = vmul.f32 %v1327, %v1340
    %v1342 = vadd.f32 %v1341, 0.014752088
    %v1343 = vmul.f32 %v1327, %v1342
    %v1344 = vadd.f32 %v1343, 0.112945676
    %v1345 = vmul.f32 %v1327, %v1344
    %v1346 = vadd.f32 %v1345, 0.4994258
    %v1347 = vmul.f32 %v1327, %v1346
    %v1348 = vadd.f32 %v1347, 1.0
    %v1349 = vrcp.pop %v1348
    %v1350 = vmul.f32 %v1348, %v1349
    %v1351 = vsub.f32 1.0, %v1350
    %v1352 = vmul.f32 %v1349, %v1351
    %v1353 = vadd.f32 %v1349, %v1352
    %vm1354 = vweird.f32 %v1348
    %vm1355 = vweird.f32 %v1349
    %vm1356 = vmor %vm1354, %vm1355
    %v1357 = vsel %vm1356, %v1349, %v1353
    %v1358 = vand.u32 2147483647, %v1348
    %vm1359 = vcmp.eq.f32.partialorder %v1358, 8.507059e+37
    %v1360 = vand.u32 %v1348, 2147483648
    %v1361 = vor.u32 1.1754944e-38, %v1360
    %v1362 = vsel %vm1359, %v1361, %v1357
    %v1363 = vmul.f32 %v1338, %v1362
    %v1364 = vmin.f32 %v1363, 1.0
    %v1365 = vmax.f32 %v1364, -1.0
    %v1366 = vmul.f32 %v1319, %v1319
    %v1367 = vmin.f32 16.0, %v1366
    %v1368 = vmul.f32 %v1367, 2.1237322e-06
    %v1369 = vadd.f32 %v1368, 0.00028619796
    %v1370 = vmul.f32 %v1367, %v1369
    %v1371 = vadd.f32 %v1370, 0.0036580483
    %v1372 = vmul.f32 %v1367, %v1371
    %v1373 = vadd.f32 %v1372, 0.05243302
    %v1374 = vmul.f32 %v1367, %v1373
    %v1375 = vadd.f32 %v1374, 0.18741608
    %v1376 = vmul.f32 %v1367, %v1375
    %v1377 = vadd.f32 %v1376, 1.1283791
    %v1378 = vmul.f32 %v1319, %v1377
    %v1379 = vmul.f32 %v1367, 3.8918573e-05
    %v1380 = vadd.f32 %v1379, 0.001143296
    %v1381 = vmul.f32 %v1367, %v1380
    %v1382 = vadd.f32 %v1381, 0.014752088
    %v1383 = vmul.f32 %v1367, %v1382
    %v1384 = vadd.f32 %v1383, 0.112945676
    %v1385 = vmul.f32 %v1367, %v1384
    %v1386 = vadd.f32 %v1385, 0.4994258
    %v1387 = vmul.f32 %v1367, %v1386
    %v1388 = vadd.f32 %v1387, 1.0
    %v1389 = vrcp.pop %v1388
    %v1390 = vmul.f32 %v1388, %v1389
    %v1391 = vsub.f32 1.0, %v1390
    %v1392 = vmul.f32 %v1389, %v1391
    %v1393 = vadd.f32 %v1389, %v1392
    %vm1394 = vweird.f32 %v1388
    %vm1395 = vweird.f32 %v1389
    %vm1396 = vmor %vm1394, %vm1395
    %v1397 = vsel %vm1396, %v1389, %v1393
    %v1398 = vand.u32 2147483647, %v1388
    %vm1399 = vcmp.eq.f32.partialorder %v1398, 8.507059e+37
    %v1400 = vand.u32 %v1388, 2147483648
    %v1401 = vor.u32 1.1754944e-38, %v1400
    %v1402 = vsel %vm1399, %v1401, %v1397
    %v1403 = vmul.f32 %v1378, %v1402
    %v1404 = vmin.f32 %v1403, 1.0
    %v1405 = vmax.f32 %v1404, -1.0
    %v1406 = vmul.f32 %v1320, %v1320
    %v1407 = vmin.f32 16.0, %v1406
    %v1408 = vmul.f32 %v1407, 2.1237322e-06
    %v1409 = vadd.f32 %v1408, 0.00028619796
    %v1410 = vmul.f32 %v1407, %v1409
    %v1411 = vadd.f32 %v1410, 0.0036580483
    %v1412 = vmul.f32 %v1407, %v1411
    %v1413 = vadd.f32 %v1412, 0.05243302
    %v1414 = vmul.f32 %v1407, %v1413
    %v1415 = vadd.f32 %v1414, 0.18741608
    %v1416 = vmul.f32 %v1407, %v1415
    %v1417 = vadd.f32 %v1416, 1.1283791
    %v1418 = vmul.f32 %v1320, %v1417
    %v1419 = vmul.f32 %v1407, 3.8918573e-05
    %v1420 = vadd.f32 %v1419, 0.001143296
    %v1421 = vmul.f32 %v1407, %v1420
    %v1422 = vadd.f32 %v1421, 0.014752088
    %v1423 = vmul.f32 %v1407, %v1422
    %v1424 = vadd.f32 %v1423, 0.112945676
    %v1425 = vmul.f32 %v1407, %v1424
    %v1426 = vadd.f32 %v1425, 0.4994258
    %v1427 = vmul.f32 %v1407, %v1426
    %v1428 = vadd.f32 %v1427, 1.0
    %v1429 = vrcp.pop %v1428
    %v1430 = vmul.f32 %v1428, %v1429
    %v1431 = vsub.f32 1.0, %v1430
    %v1432 = vmul.f32 %v1429, %v1431
    %v1433 = vadd.f32 %v1429, %v1432
    %vm1434 = vweird.f32 %v1428
    %vm1435 = vweird.f32 %v1429
    %vm1436 = vmor %vm1434, %vm1435
    %v1437 = vsel %vm1436, %v1429, %v1433
    %v1438 = vand.u32 2147483647, %v1428
    %vm1439 = vcmp.eq.f32.partialorder %v1438, 8.507059e+37
    %v1440 = vand.u32 %v1428, 2147483648
    %v1441 = vor.u32 1.1754944e-38, %v1440
    %v1442 = vsel %vm1439, %v1441, %v1437
    %v1443 = vmul.f32 %v1418, %v1442
    %v1444 = vmin.f32 %v1443, 1.0
    %v1445 = vmax.f32 %v1444, -1.0
    %v1446 = vmul.f32 %v1321, %v1321
    %v1447 = vmin.f32 16.0, %v1446
    %v1448 = vmul.f32 %v1447, 2.1237322e-06
    %v1449 = vadd.f32 %v1448, 0.00028619796
    %v1450 = vmul.f32 %v1447, %v1449
    %v1451 = vadd.f32 %v1450, 0.0036580483
    %v1452 = vmul.f32 %v1447, %v1451
    %v1453 = vadd.f32 %v1452, 0.05243302
    %v1454 = vmul.f32 %v1447, %v1453
    %v1455 = vadd.f32 %v1454, 0.18741608
    %v1456 = vmul.f32 %v1447, %v1455
    %v1457 = vadd.f32 %v1456, 1.1283791
    %v1458 = vmul.f32 %v1321, %v1457
    %v1459 = vmul.f32 %v1447, 3.8918573e-05
    %v1460 = vadd.f32 %v1459, 0.001143296
    %v1461 = vmul.f32 %v1447, %v1460
    %v1462 = vadd.f32 %v1461, 0.014752088
    %v1463 = vmul.f32 %v1447, %v1462
    %v1464 = vadd.f32 %v1463, 0.112945676
    %v1465 = vmul.f32 %v1447, %v1464
    %v1466 = vadd.f32 %v1465, 0.4994258
    %v1467 = vmul.f32 %v1447, %v1466
    %v1468 = vadd.f32 %v1467, 1.0
    %v1469 = vrcp.pop %v1468
    %v1470 = vmul.f32 %v1468, %v1469
    %v1471 = vsub.f32 1.0, %v1470
    %v1472 = vmul.f32 %v1469, %v1471
    %v1473 = vadd.f32 %v1469, %v1472
    %vm1474 = vweird.f32 %v1468
    %vm1475 = vweird.f32 %v1469
    %vm1476 = vmor %vm1474, %vm1475
    %v1477 = vsel %vm1476, %v1469, %v1473
    %v1478 = vand.u32 2147483647, %v1468
    %vm1479 = vcmp.eq.f32.partialorder %v1478, 8.507059e+37
    %v1480 = vand.u32 %v1468, 2147483648
    %v1481 = vor.u32 1.1754944e-38, %v1480
    %v1482 = vsel %vm1479, %v1481, %v1477
    %v1483 = vmul.f32 %v1458, %v1482
    %v1484 = vmin.f32 %v1483, 1.0
    %v1485 = vmax.f32 %v1484, -1.0
    %v1486 = vmul.f32 %v1322, %v1322
    %v1487 = vmin.f32 16.0, %v1486
    %v1488 = vmul.f32 %v1487, 2.1237322e-06
    %v1489 = vadd.f32 %v1488, 0.00028619796
    %v1490 = vmul.f32 %v1487, %v1489
    %v1491 = vadd.f32 %v1490, 0.0036580483
    %v1492 = vmul.f32 %v1487, %v1491
    %v1493 = vadd.f32 %v1492, 0.05243302
    %v1494 = vmul.f32 %v1487, %v1493
    %v1495 = vadd.f32 %v1494, 0.18741608
    %v1496 = vmul.f32 %v1487, %v1495
    %v1497 = vadd.f32 %v1496, 1.1283791
    %v1498 = vmul.f32 %v1322, %v1497
    %v1499 = vmul.f32 %v1487, 3.8918573e-05
    %v1500 = vadd.f32 %v1499, 0.001143296
    %v1501 = vmul.f32 %v1487, %v1500
    %v1502 = vadd.f32 %v1501, 0.014752088
    %v1503 = vmul.f32 %v1487, %v1502
    %v1504 = vadd.f32 %v1503, 0.112945676
    %v1505 = vmul.f32 %v1487, %v1504
    %v1506 = vadd.f32 %v1505, 0.4994258
    %v1507 = vmul.f32 %v1487, %v1506
    %v1508 = vadd.f32 %v1507, 1.0
    %v1509 = vrcp.pop %v1508
    %v1510 = vmul.f32 %v1508, %v1509
    %v1511 = vsub.f32 1.0, %v1510
    %v1512 = vmul.f32 %v1509, %v1511
    %v1513 = vadd.f32 %v1509, %v1512
    %vm1514 = vweird.f32 %v1508
    %vm1515 = vweird.f32 %v1509
    %vm1516 = vmor %vm1514, %vm1515
    %v1517 = vsel %vm1516, %v1509, %v1513
    %v1518 = vand.u32 2147483647, %v1508
    %vm1519 = vcmp.eq.f32.partialorder %v1518, 8.507059e+37
    %v1520 = vand.u32 %v1508, 2147483648
    %v1521 = vor.u32 1.1754944e-38, %v1520
    %v1522 = vsel %vm1519, %v1521, %v1517
    %v1523 = vmul.f32 %v1498, %v1522
    %v1524 = vmin.f32 %v1523, 1.0
    %v1525 = vmax.f32 %v1524, -1.0
    %v1526 = vmul.f32 %v1323, %v1323
    %v1527 = vmin.f32 16.0, %v1526
    %v1528 = vmul.f32 %v1527, 2.1237322e-06
    %v1529 = vadd.f32 %v1528, 0.00028619796
    %v1530 = vmul.f32 %v1527, %v1529
    %v1531 = vadd.f32 %v1530, 0.0036580483
    %v1532 = vmul.f32 %v1527, %v1531
    %v1533 = vadd.f32 %v1532, 0.05243302
    %v1534 = vmul.f32 %v1527, %v1533
    %v1535 = vadd.f32 %v1534, 0.18741608
    %v1536 = vmul.f32 %v1527, %v1535
    %v1537 = vadd.f32 %v1536, 1.1283791
    %v1538 = vmul.f32 %v1323, %v1537
    %v1539 = vmul.f32 %v1527, 3.8918573e-05
    %v1540 = vadd.f32 %v1539, 0.001143296
    %v1541 = vmul.f32 %v1527, %v1540
    %v1542 = vadd.f32 %v1541, 0.014752088
    %v1543 = vmul.f32 %v1527, %v1542
    %v1544 = vadd.f32 %v1543, 0.112945676
    %v1545 = vmul.f32 %v1527, %v1544
    %v1546 = vadd.f32 %v1545, 0.4994258
    %v1547 = vmul.f32 %v1527, %v1546
    %v1548 = vadd.f32 %v1547, 1.0
    %v1549 = vrcp.pop %v1548
    %v1550 = vmul.f32 %v1548, %v1549
    %v1551 = vsub.f32 1.0, %v1550
    %v1552 = vmul.f32 %v1549, %v1551
    %v1553 = vadd.f32 %v1549, %v1552
    %vm1554 = vweird.f32 %v1548
    %vm1555 = vweird.f32 %v1549
    %vm1556 = vmor %vm1554, %vm1555
    %v1557 = vsel %vm1556, %v1549, %v1553
    %v1558 = vand.u32 2147483647, %v1548
    %vm1559 = vcmp.eq.f32.partialorder %v1558, 8.507059e+37
    %v1560 = vand.u32 %v1548, 2147483648
    %v1561 = vor.u32 1.1754944e-38, %v1560
    %v1562 = vsel %vm1559, %v1561, %v1557
    %v1563 = vmul.f32 %v1538, %v1562
    %v1564 = vmin.f32 %v1563, 1.0
    %v1565 = vmax.f32 %v1564, -1.0
    %v1566 = vmul.f32 %v1324, %v1324
    %v1567 = vmin.f32 16.0, %v1566
    %v1568 = vmul.f32 %v1567, 2.1237322e-06
    %v1569 = vadd.f32 %v1568, 0.00028619796
    %v1570 = vmul.f32 %v1567, %v1569
    %v1571 = vadd.f32 %v1570, 0.0036580483
    %v1572 = vmul.f32 %v1567, %v1571
    %v1573 = vadd.f32 %v1572, 0.05243302
    %v1574 = vmul.f32 %v1567, %v1573
    %v1575 = vadd.f32 %v1574, 0.18741608
    %v1576 = vmul.f32 %v1567, %v1575
    %v1577 = vadd.f32 %v1576, 1.1283791
    %v1578 = vmul.f32 %v1324, %v1577
    %v1579 = vmul.f32 %v1567, 3.8918573e-05
    %v1580 = vadd.f32 %v1579, 0.001143296
    %v1581 = vmul.f32 %v1567, %v1580
    %v1582 = vadd.f32 %v1581, 0.014752088
    %v1583 = vmul.f32 %v1567, %v1582
    %v1584 = vadd.f32 %v1583, 0.112945676
    %v1585 = vmul.f32 %v1567, %v1584
    %v1586 = vadd.f32 %v1585, 0.4994258
    %v1587 = vmul.f32 %v1567, %v1586
    %v1588 = vadd.f32 %v1587, 1.0
    %v1589 = vrcp.pop %v1588
    %v1590 = vmul.f32 %v1588, %v1589
    %v1591 = vsub.f32 1.0, %v1590
    %v1592 = vmul.f32 %v1589, %v1591
    %v1593 = vadd.f32 %v1589, %v1592
    %vm1594 = vweird.f32 %v1588
    %vm1595 = vweird.f32 %v1589
    %vm1596 = vmor %vm1594, %vm1595
    %v1597 = vsel %vm1596, %v1589, %v1593
    %v1598 = vand.u32 2147483647, %v1588
    %vm1599 = vcmp.eq.f32.partialorder %v1598, 8.507059e+37
    %v1600 = vand.u32 %v1588, 2147483648
    %v1601 = vor.u32 1.1754944e-38, %v1600
    %v1602 = vsel %vm1599, %v1601, %v1597
    %v1603 = vmul.f32 %v1578, %v1602
    %v1604 = vmin.f32 %v1603, 1.0
    %v1605 = vmax.f32 %v1604, -1.0
    %v1606 = vmul.f32 %v1325, %v1325
    %v1607 = vmin.f32 16.0, %v1606
    %v1608 = vmul.f32 %v1607, 2.1237322e-06
    %v1609 = vadd.f32 %v1608, 0.00028619796
    %v1610 = vmul.f32 %v1607, %v1609
    %v1611 = vadd.f32 %v1610, 0.0036580483
    %v1612 = vmul.f32 %v1607, %v1611
    %v1613 = vadd.f32 %v1612, 0.05243302
    %v1614 = vmul.f32 %v1607, %v1613
    %v1615 = vadd.f32 %v1614, 0.18741608
    %v1616 = vmul.f32 %v1607, %v1615
    %v1617 = vadd.f32 %v1616, 1.1283791
    %v1618 = vmul.f32 %v1325, %v1617
    %v1619 = vmul.f32 %v1607, 3.8918573e-05
    %v1620 = vadd.f32 %v1619, 0.001143296
    %v1621 = vmul.f32 %v1607, %v1620
    %v1622 = vadd.f32 %v1621, 0.014752088
    %v1623 = vmul.f32 %v1607, %v1622
    %v1624 = vadd.f32 %v1623, 0.112945676
    %v1625 = vmul.f32 %v1607, %v1624
    %v1626 = vadd.f32 %v1625, 0.4994258
    %v1627 = vmul.f32 %v1607, %v1626
    %v1628 = vadd.f32 %v1627, 1.0
    %v1629 = vrcp.pop %v1628
    %v1630 = vmul.f32 %v1628, %v1629
    %v1631 = vsub.f32 1.0, %v1630
    %v1632 = vmul.f32 %v1629, %v1631
    %v1633 = vadd.f32 %v1629, %v1632
    %vm1634 = vweird.f32 %v1628
    %vm1635 = vweird.f32 %v1629
    %vm1636 = vmor %vm1634, %vm1635
    %v1637 = vsel %vm1636, %v1629, %v1633
    %v1638 = vand.u32 2147483647, %v1628
    %vm1639 = vcmp.eq.f32.partialorder %v1638, 8.507059e+37
    %v1640 = vand.u32 %v1628, 2147483648
    %v1641 = vor.u32 1.1754944e-38, %v1640
    %v1642 = vsel %vm1639, %v1641, %v1637
    %v1643 = vmul.f32 %v1618, %v1642
    %v1644 = vmin.f32 %v1643, 1.0
    %v1645 = vmax.f32 %v1644, -1.0
    %v1646 = vadd.f32 %v1365, 1.0
    %v1647 = vadd.f32 %v1405, 1.0
    %v1648 = vadd.f32 %v1445, 1.0
    %v1649 = vadd.f32 %v1485, 1.0
    %v1650 = vadd.f32 %v1525, 1.0
    %v1651 = vadd.f32 %v1565, 1.0
    %v1652 = vadd.f32 %v1605, 1.0
    %v1653 = vadd.f32 %v1645, 1.0
    %v1654 = vmul.f32 %v1310, %v1646
    %v1655 = vmul.f32 %v1311, %v1647
    %v1656 = vmul.f32 %v1312, %v1648
    %v1657 = vmul.f32 %v1313, %v1649
    %v1658 = vmul.f32 %v1314, %v1650
    %v1659 = vmul.f32 %v1315, %v1651
    %v1660 = vmul.f32 %v1316, %v1652
    %v1661 = vmul.f32 %v1317, %v1653
    %v1662 = vpack.c.bf16 %v1658, %v1654
    %v1663 = vpack.c.bf16 %v1659, %v1655
    %v1664 = vpack.c.bf16 %v1660, %v1656
    %v1665 = vpack.c.bf16 %v1661, %v1657
    %v1666 = vld [vmem:[#allocation6] sm:$0xf]
    %v1667 = vld [vmem:[#allocation6 + $0x4] sm:$0xf]
    %v1668 = vld [vmem:[#allocation6 + $0x8] sm:$0xf]
    %v1669 = vld [vmem:[#allocation6 + $0xc] sm:$0xf]
    %v1670 = vld [vmem:[#allocation6 + $0x10] sm:$0xf]
    %v1671 = vld [vmem:[#allocation6 + $0x14] sm:$0xf]
    %v1672 = vld [vmem:[#allocation6 + $0x18] sm:$0xf]
    %v1673 = vld [vmem:[#allocation6 + $0x1c] sm:$0xf]
    %v1674 = vld [vmem:[#allocation6 + $0x20] sm:$0xf]
    %v1675 = vld [vmem:[#allocation6 + $0x24] sm:$0xf]
    %v1676 = vld [vmem:[#allocation6 + $0x28] sm:$0xf]
    %v1677 = vld [vmem:[#allocation6 + $0x2c] sm:$0xf]
    %v1678 = vld [vmem:[#allocation6 + $0x30] sm:$0xf]
    %v1679 = vld [vmem:[#allocation6 + $0x34] sm:$0xf]
    %v1680 = vld [vmem:[#allocation6 + $0x38] sm:$0xf]
    %v1681 = vld [vmem:[#allocation6 + $0x3c] sm:$0xf]
    %v1682 = vld [vmem:[#allocation6 + $0x40] sm:$0xf]
    %v1683 = vld [vmem:[#allocation6 + $0x44] sm:$0xf]
    %v1684 = vld [vmem:[#allocation6 + $0x48] sm:$0xf]
    %v1685 = vld [vmem:[#allocation6 + $0x4c] sm:$0xf]
    %v1686 = vld [vmem:[#allocation6 + $0x50] sm:$0xf]
    %v1687 = vld [vmem:[#allocation6 + $0x54] sm:$0xf]
    %v1688 = vld [vmem:[#allocation6 + $0x58] sm:$0xf]
    %v1689 = vld [vmem:[#allocation6 + $0x5c] sm:$0xf]
    %v1690 = vld [vmem:[#allocation6 + $0x60] sm:$0xf]
    %v1691 = vld [vmem:[#allocation6 + $0x64] sm:$0xf]
    %v1692 = vld [vmem:[#allocation6 + $0x68] sm:$0xf]
    %v1693 = vld [vmem:[#allocation6 + $0x6c] sm:$0xf]
    %v1694 = vld [vmem:[#allocation6 + $0x70] sm:$0xf]
    %v1695 = vld [vmem:[#allocation6 + $0x74] sm:$0xf]
    %v1696 = vld [vmem:[#allocation6 + $0x78] sm:$0xf]
    %v1697 = vld [vmem:[#allocation6 + $0x7c] sm:$0xf]
    %v1698 = vld [vmem:[#allocation6 + $0x80] sm:$0xf]
    %v1699 = vld [vmem:[#allocation6 + $0x84] sm:$0xf]
    %v1700 = vld [vmem:[#allocation6 + $0x88] sm:$0xf]
    %v1701 = vld [vmem:[#allocation6 + $0x8c] sm:$0xf]
    %v1702 = vld [vmem:[#allocation6 + $0x90] sm:$0xf]
    %v1703 = vld [vmem:[#allocation6 + $0x94] sm:$0xf]
    %v1704 = vld [vmem:[#allocation6 + $0x98] sm:$0xf]
    %v1705 = vld [vmem:[#allocation6 + $0x9c] sm:$0xf]
    %v1706 = vld [vmem:[#allocation6 + $0xa0] sm:$0xf]
    %v1707 = vld [vmem:[#allocation6 + $0xa4] sm:$0xf]
    %v1708 = vld [vmem:[#allocation6 + $0xa8] sm:$0xf]
    %v1709 = vld [vmem:[#allocation6 + $0xac] sm:$0xf]
    %v1710 = vld [vmem:[#allocation6 + $0xb0] sm:$0xf]
    %v1711 = vld [vmem:[#allocation6 + $0xb4] sm:$0xf]
    %v1712 = vld [vmem:[#allocation6 + $0xb8] sm:$0xf]
    %v1713 = vld [vmem:[#allocation6 + $0xbc] sm:$0xf]
    %v1714 = vld [vmem:[#allocation6 + $0xc0] sm:$0xf]
    %v1715 = vld [vmem:[#allocation6 + $0xc4] sm:$0xf]
    %v1716 = vld [vmem:[#allocation6 + $0xc8] sm:$0xf]
    %v1717 = vld [vmem:[#allocation6 + $0xcc] sm:$0xf]
    %v1718 = vld [vmem:[#allocation6 + $0xd0] sm:$0xf]
    %v1719 = vld [vmem:[#allocation6 + $0xd4] sm:$0xf]
    %v1720 = vld [vmem:[#allocation6 + $0xd8] sm:$0xf]
    %v1721 = vld [vmem:[#allocation6 + $0xdc] sm:$0xf]
    %v1722 = vld [vmem:[#allocation6 + $0xe0] sm:$0xf]
    %v1723 = vld [vmem:[#allocation6 + $0xe4] sm:$0xf]
    %v1724 = vld [vmem:[#allocation6 + $0xe8] sm:$0xf]
    %v1725 = vld [vmem:[#allocation6 + $0xec] sm:$0xf]
    %v1726 = vld [vmem:[#allocation6 + $0xf0] sm:$0xf]
    %v1727 = vld [vmem:[#allocation6 + $0xf4] sm:$0xf]
    %v1728 = vld [vmem:[#allocation6 + $0xf8] sm:$0xf]
    %v1729 = vld [vmem:[#allocation6 + $0xfc] sm:$0xf]
    %v1730 = vld [vmem:[%s13] sm:$0x1]
    %v1732 = vperm.slane %v1730, 0
    %v1798 = vunpack.c.l.b16 %v1666
    %v1799 = vunpack.c.l.b16 %v1667
    %v1800 = vunpack.c.l.b16 %v1668
    %v1801 = vunpack.c.l.b16 %v1669
    %v1802 = vunpack.c.l.b16 %v1670
    %v1803 = vunpack.c.l.b16 %v1671
    %v1804 = vunpack.c.l.b16 %v1672
    %v1805 = vunpack.c.l.b16 %v1673
    %v1806 = vunpack.c.l.b16 %v1674
    %v1807 = vunpack.c.l.b16 %v1675
    %v1808 = vunpack.c.l.b16 %v1676
    %v1809 = vunpack.c.l.b16 %v1677
    %v1810 = vunpack.c.l.b16 %v1678
    %v1811 = vunpack.c.l.b16 %v1679
    %v1812 = vunpack.c.l.b16 %v1680
    %v1813 = vunpack.c.l.b16 %v1681
    %v1814 = vunpack.c.l.b16 %v1682
    %v1815 = vunpack.c.l.b16 %v1683
    %v1816 = vunpack.c.l.b16 %v1684
    %v1817 = vunpack.c.l.b16 %v1685
    %v1818 = vunpack.c.l.b16 %v1686
    %v1819 = vunpack.c.l.b16 %v1687
    %v1820 = vunpack.c.l.b16 %v1688
    %v1821 = vunpack.c.l.b16 %v1689
    %v1822 = vunpack.c.l.b16 %v1690
    %v1823 = vunpack.c.l.b16 %v1691
    %v1824 = vunpack.c.l.b16 %v1692
    %v1825 = vunpack.c.l.b16 %v1693
    %v1826 = vunpack.c.l.b16 %v1694
    %v1827 = vunpack.c.l.b16 %v1695
    %v1828 = vunpack.c.l.b16 %v1696
    %v1829 = vunpack.c.l.b16 %v1697
    %v1830 = vunpack.c.l.b16 %v1698
    %v1831 = vunpack.c.l.b16 %v1699
    %v1832 = vunpack.c.l.b16 %v1700
    %v1833 = vunpack.c.l.b16 %v1701
    %v1834 = vunpack.c.l.b16 %v1702
    %v1835 = vunpack.c.l.b16 %v1703
    %v1836 = vunpack.c.l.b16 %v1704
    %v1837 = vunpack.c.l.b16 %v1705
    %v1838 = vunpack.c.l.b16 %v1706
    %v1839 = vunpack.c.l.b16 %v1707
    %v1840 = vunpack.c.l.b16 %v1708
    %v1841 = vunpack.c.l.b16 %v1709
    %v1842 = vunpack.c.l.b16 %v1710
    %v1843 = vunpack.c.l.b16 %v1711
    %v1844 = vunpack.c.l.b16 %v1712
    %v1845 = vunpack.c.l.b16 %v1713
    %v1846 = vunpack.c.l.b16 %v1714
    %v1847 = vunpack.c.l.b16 %v1715
    %v1848 = vunpack.c.l.b16 %v1716
    %v1849 = vunpack.c.l.b16 %v1717
    %v1850 = vunpack.c.l.b16 %v1718
    %v1851 = vunpack.c.l.b16 %v1719
    %v1852 = vunpack.c.l.b16 %v1720
    %v1853 = vunpack.c.l.b16 %v1721
    %v1854 = vunpack.c.l.b16 %v1722
    %v1855 = vunpack.c.l.b16 %v1723
    %v1856 = vunpack.c.l.b16 %v1724
    %v1857 = vunpack.c.l.b16 %v1725
    %v1858 = vunpack.c.l.b16 %v1726
    %v1859 = vunpack.c.l.b16 %v1727
    %v1860 = vunpack.c.l.b16 %v1728
    %v1861 = vunpack.c.l.b16 %v1729
    %v1862 = vpack.c.b16 %v1799, %v1798
    %v1863 = vpack.c.b16 %v1801, %v1800
    %v1864 = vpack.c.b16 %v1803, %v1802
    %v1865 = vpack.c.b16 %v1805, %v1804
    %v1866 = vpack.c.b16 %v1807, %v1806
    %v1867 = vpack.c.b16 %v1809, %v1808
    %v1868 = vpack.c.b16 %v1811, %v1810
    %v1869 = vpack.c.b16 %v1813, %v1812
    %v1870 = vpack.c.b16 %v1815, %v1814
    %v1871 = vpack.c.b16 %v1817, %v1816
    %v1872 = vpack.c.b16 %v1819, %v1818
    %v1873 = vpack.c.b16 %v1821, %v1820
    %v1874 = vpack.c.b16 %v1823, %v1822
    %v1875 = vpack.c.b16 %v1825, %v1824
    %v1876 = vpack.c.b16 %v1827, %v1826
    %v1877 = vpack.c.b16 %v1829, %v1828
    %v1878 = vpack.c.b16 %v1831, %v1830
    %v1879 = vpack.c.b16 %v1833, %v1832
    %v1880 = vpack.c.b16 %v1835, %v1834
    %v1881 = vpack.c.b16 %v1837, %v1836
    %v1882 = vpack.c.b16 %v1839, %v1838
    %v1883 = vpack.c.b16 %v1841, %v1840
    %v1884 = vpack.c.b16 %v1843, %v1842
    %v1885 = vpack.c.b16 %v1845, %v1844
    %v1886 = vpack.c.b16 %v1847, %v1846
    %v1887 = vpack.c.b16 %v1849, %v1848
    %v1888 = vpack.c.b16 %v1851, %v1850
    %v1889 = vpack.c.b16 %v1853, %v1852
    %v1890 = vpack.c.b16 %v1855, %v1854
    %v1891 = vpack.c.b16 %v1857, %v1856
    %v1892 = vpack.c.b16 %v1859, %v1858
    %v1893 = vpack.c.b16 %v1861, %v1860
    %1926 = vmatpush.bf16.msra.mxu0 %v1869
    %1927 = vmatpush.bf16.msra.mxu0 %v1868
    %1928 = vmatpush.bf16.msra.mxu0 %v1867
    %1929 = vmatpush.bf16.msra.mxu0 %v1866
    %1930 = vmatpush.bf16.msra.mxu0 %v1865
    %1931 = vmatpush.bf16.msra.mxu0 %v1864
    %1932 = vmatpush.bf16.msra.mxu0 %v1863
    %1933 = vmatpush.bf16.msra.mxu0 %v1862
    %1934 = vmatmul.bf16.gmra.mxu0 %v1662
    %v1935 = vpop.f32.mrf.mxu0
    %v1936 = vadd.f32 %v1732, %v1935
    %v1937 = vpop.f32.mrf.mxu0
    %v1938 = vadd.f32 %v1732, %v1937
    %1939 = vdwg.mxu0
    %1940 = vmatpush.bf16.msra.mxu0 %v1877
    %1941 = vmatpush.bf16.msra.mxu0 %v1876
    %1942 = vmatpush.bf16.msra.mxu0 %v1875
    %1943 = vmatpush.bf16.msra.mxu0 %v1874
    %1944 = vmatpush.bf16.msra.mxu0 %v1873
    %1945 = vmatpush.bf16.msra.mxu0 %v1872
    %1946 = vmatpush.bf16.msra.mxu0 %v1871
    %1947 = vmatpush.bf16.msra.mxu0 %v1870
    %1948 = vmatmul.bf16.gmra.mxu0 %v1663
    %v1949 = vpop.f32.mrf.mxu0
    %v1950 = vadd.f32 %v1936, %v1949
    %v1951 = vpop.f32.mrf.mxu0
    %v1952 = vadd.f32 %v1938, %v1951
    %1953 = vdwg.mxu0
    %1954 = vmatpush.bf16.msra.mxu0 %v1885
    %1955 = vmatpush.bf16.msra.mxu0 %v1884
    %1956 = vmatpush.bf16.msra.mxu0 %v1883
    %1957 = vmatpush.bf16.msra.mxu0 %v1882
    %1958 = vmatpush.bf16.msra.mxu0 %v1881
    %1959 = vmatpush.bf16.msra.mxu0 %v1880
    %1960 = vmatpush.bf16.msra.mxu0 %v1879
    %1961 = vmatpush.bf16.msra.mxu0 %v1878
    %1962 = vmatmul.bf16.gmra.mxu0 %v1664
    %v1963 = vpop.f32.mrf.mxu0
    %v1964 = vadd.f32 %v1950, %v1963
    %v1965 = vpop.f32.mrf.mxu0
    %v1966 = vadd.f32 %v1952, %v1965
    %1967 = vdwg.mxu0
    %1968 = vmatpush.bf16.msra.mxu0 %v1893
    %1969 = vmatpush.bf16.msra.mxu0 %v1892
    %1970 = vmatpush.bf16.msra.mxu0 %v1891
    %1971 = vmatpush.bf16.msra.mxu0 %v1890
    %1972 = vmatpush.bf16.msra.mxu0 %v1889
    %1973 = vmatpush.bf16.msra.mxu0 %v1888
    %1974 = vmatpush.bf16.msra.mxu0 %v1887
    %1975 = vmatpush.bf16.msra.mxu0 %v1886
    %1976 = vmatmul.bf16.gmra.mxu0 %v1665
    %v1977 = vpop.f32.mrf.mxu0
    %v1978 = vadd.f32 %v1964, %v1977
    %v1979 = vpop.f32.mrf.mxu0
    %v1980 = vadd.f32 %v1966, %v1979
    %1981 = vdwg.mxu0
    %v1982 = vadd.f32 %v1049, %v1978
    %v1983 = vadd.f32 %v1050, %v1980
    %v1984 = vld [vmem:[%s14] sm:$0x1]
    %v1985 = vld [vmem:[%s15] sm:$0x1]
    %1986 = vadd.xlane.f32.xlu0 %v1982
    %v1987 = vpop.xlane.xlu0 %1986
    %1988 = vadd.xlane.f32.xlu0 %v1983
    %v1989 = vpop.xlane.xlu0 %1988
    %v1990 = vmul.f32 %v1987, %v121
    %v1991 = vmul.f32 %v1989, %v121
    %v1992 = vmul.f32 %v1982, %v1982
    %v1993 = vmul.f32 %v1983, %v1983
    %1994 = vadd.xlane.f32.xlu0 %v1992
    %v1995 = vpop.xlane.xlu0 %1994
    %1996 = vadd.xlane.f32.xlu0 %v1993
    %v1997 = vpop.xlane.xlu0 %1996
    %v1998 = vmul.f32 %v1995, %v121
    %v1999 = vmul.f32 %v1997, %v121
    %v2000 = vmul.f32 %v1990, %v1990
    %v2001 = vmul.f32 %v1991, %v1991
    %v2002 = vsub.f32 %v1998, %v2000
    %v2003 = vsub.f32 %v1999, %v2001
    %v2004 = vsub.f32 %v1982, %v1990
    %v2005 = vsub.f32 %v1983, %v1991
    %v2006 = vadd.f32 %v2002, 1e-12
    %v2007 = vadd.f32 %v2003, 1e-12
    %v2008 = vrsqrt.pop %v2006
    %v2009 = vmul.f32 %v2008, %v2006
    %v2010 = vmul.f32 %v2009, %v2008
    %v2011 = vmul.f32 0.5, %v2010
    %v2012 = vsub.f32 1.5, %v2011
    %v2013 = vmul.f32 %v2008, %v2012
    %vm2014 = vweird.f32 %v2006
    %vm2015 = vweird.f32 %v2008
    %vm2016 = vmor %vm2014, %vm2015
    %v2017 = vsel %vm2016, %v2008, %v2013
    %v2018 = vrsqrt.pop %v2007
    %v2019 = vmul.f32 %v2018, %v2007
    %v2020 = vmul.f32 %v2019, %v2018
    %v2021 = vmul.f32 0.5, %v2020
    %v2022 = vsub.f32 1.5, %v2021
    %v2023 = vmul.f32 %v2018, %v2022
    %vm2024 = vweird.f32 %v2007
    %vm2025 = vweird.f32 %v2018
    %vm2026 = vmor %vm2024, %vm2025
    %v2027 = vsel %vm2026, %v2018, %v2023
    %v2028 = vmul.f32 %v2004, %v2017
    %v2029 = vmul.f32 %v2005, %v2027
    %v2031 = vperm.slane %v1984, 0
    %v2033 = vmul.f32 %v2028, %v2031
    %v2034 = vmul.f32 %v2029, %v2031
    %v2036 = vperm.slane %v1985, 0
    %v2038 = vadd.f32 %v2033, %v2036
    %v2039 = vadd.f32 %v2034, %v2036
    %v2040 = vpack.c.bf16 %v2039, %v2038
    %s2041 = scalar_lea.vmem [#allocation2], 192
    %v2042 = vld [vmem:[%s2041] sm:$0xff]
    %v2043 = vld [vmem:[%s2041 + $0x8] sm:$0xf]
    %v2044 = vld [vmem:[%s2041 + $0xc] sm:$0xff]
    %v2045 = vld [vmem:[%s2041 + $0x14] sm:$0xf]
    %v2046 = vld [vmem:[%s2041 + $0x18] sm:$0xff]
    %v2047 = vld [vmem:[%s2041 + $0x20] sm:$0xf]
    %v2048 = vld [vmem:[%s2041 + $0x24] sm:$0xff]
    %v2049 = vld [vmem:[%s2041 + $0x2c] sm:$0xf]
    %v2050 = vld [vmem:[%s2041 + $0x30] sm:$0xff]
    %v2051 = vld [vmem:[%s2041 + $0x38] sm:$0xf]
    %v2052 = vld [vmem:[%s2041 + $0x3c] sm:$0xff]
    %v2053 = vld [vmem:[%s2041 + $0x44] sm:$0xf]
    %v2054 = vld [vmem:[%s2041 + $0x48] sm:$0xff]
    %v2055 = vld [vmem:[%s2041 + $0x50] sm:$0xf]
    %v2056 = vld [vmem:[%s2041 + $0x54] sm:$0xff]
    %v2057 = vld [vmem:[%s2041 + $0x5c] sm:$0xf]
    %v2058 = vld [vmem:[%s2041 + $0x60] sm:$0xff]
    %v2059 = vld [vmem:[%s2041 + $0x68] sm:$0xf]
    %v2060 = vld [vmem:[%s2041 + $0x6c] sm:$0xff]
    %v2061 = vld [vmem:[%s2041 + $0x74] sm:$0xf]
    %v2062 = vld [vmem:[%s2041 + $0x78] sm:$0xff]
    %v2063 = vld [vmem:[%s2041 + $0x80] sm:$0xf]
    %v2064 = vld [vmem:[%s2041 + $0x84] sm:$0xff]
    %v2065 = vld [vmem:[%s2041 + $0x8c] sm:$0xf]
    %v2066 = vld [vmem:[%s2041 + $0x90] sm:$0xff]
    %v2067 = vld [vmem:[%s2041 + $0x98] sm:$0xf]
    %v2068 = vld [vmem:[%s2041 + $0x9c] sm:$0xff]
    %v2069 = vld [vmem:[%s2041 + $0xa4] sm:$0xf]
    %v2070 = vld [vmem:[%s2041 + $0xa8] sm:$0xff]
    %v2071 = vld [vmem:[%s2041 + $0xb0] sm:$0xf]
    %v2072 = vld [vmem:[%s2041 + $0xb4] sm:$0xff]
    %v2073 = vld [vmem:[%s2041 + $0xbc] sm:$0xf]
    %s2074 = scalar_lea.vmem %s5, 3
    %v2075 = vld [vmem:[%s2074] sm:$0x7]
    %v2077 = vperm.slane %v2075, 0
    %v2078 = vperm.slane %v2075, 1
    %v2079 = vperm.slane %v2075, 2
    %v2115 = vunpack.c.l.b16 %v2042
    %v2116 = vunpack.c.h.b16 %v2042
    %v2117 = vunpack.c.l.b16 %v2043
    %v2118 = vunpack.c.l.b16 %v2044
    %v2119 = vunpack.c.h.b16 %v2044
    %v2120 = vunpack.c.l.b16 %v2045
    %v2121 = vunpack.c.l.b16 %v2046
    %v2122 = vunpack.c.h.b16 %v2046
    %v2123 = vunpack.c.l.b16 %v2047
    %v2124 = vunpack.c.l.b16 %v2048
    %v2125 = vunpack.c.h.b16 %v2048
    %v2126 = vunpack.c.l.b16 %v2049
    %v2127 = vunpack.c.l.b16 %v2050
    %v2128 = vunpack.c.h.b16 %v2050
    %v2129 = vunpack.c.l.b16 %v2051
    %v2130 = vunpack.c.l.b16 %v2052
    %v2131 = vunpack.c.h.b16 %v2052
    %v2132 = vunpack.c.l.b16 %v2053
    %v2133 = vunpack.c.l.b16 %v2054
    %v2134 = vunpack.c.h.b16 %v2054
    %v2135 = vunpack.c.l.b16 %v2055
    %v2136 = vunpack.c.l.b16 %v2056
    %v2137 = vunpack.c.h.b16 %v2056
    %v2138 = vunpack.c.l.b16 %v2057
    %v2139 = vunpack.c.l.b16 %v2058
    %v2140 = vunpack.c.h.b16 %v2058
    %v2141 = vunpack.c.l.b16 %v2059
    %v2142 = vunpack.c.l.b16 %v2060
    %v2143 = vunpack.c.h.b16 %v2060
    %v2144 = vunpack.c.l.b16 %v2061
    %v2145 = vunpack.c.l.b16 %v2062
    %v2146 = vunpack.c.h.b16 %v2062
    %v2147 = vunpack.c.l.b16 %v2063
    %v2148 = vunpack.c.l.b16 %v2064
    %v2149 = vunpack.c.h.b16 %v2064
    %v2150 = vunpack.c.l.b16 %v2065
    %v2151 = vunpack.c.l.b16 %v2066
    %v2152 = vunpack.c.h.b16 %v2066
    %v2153 = vunpack.c.l.b16 %v2067
    %v2154 = vunpack.c.l.b16 %v2068
    %v2155 = vunpack.c.h.b16 %v2068
    %v2156 = vunpack.c.l.b16 %v2069
    %v2157 = vunpack.c.l.b16 %v2070
    %v2158 = vunpack.c.h.b16 %v2070
    %v2159 = vunpack.c.l.b16 %v2071
    %v2160 = vunpack.c.l.b16 %v2072
    %v2161 = vunpack.c.h.b16 %v2072
    %v2162 = vunpack.c.l.b16 %v2073
    %v2163 = vpack.c.b16 %v2118, %v2115
    %v2164 = vpack.c.b16 %v2119, %v2116
    %v2165 = vpack.c.b16 %v2120, %v2117
    %v2166 = vpack.c.b16 %v2124, %v2121
    %v2167 = vpack.c.b16 %v2125, %v2122
    %v2168 = vpack.c.b16 %v2126, %v2123
    %v2169 = vpack.c.b16 %v2130, %v2127
    %v2170 = vpack.c.b16 %v2131, %v2128
    %v2171 = vpack.c.b16 %v2132, %v2129
    %v2172 = vpack.c.b16 %v2136, %v2133
    %v2173 = vpack.c.b16 %v2137, %v2134
    %v2174 = vpack.c.b16 %v2138, %v2135
    %v2175 = vpack.c.b16 %v2142, %v2139
    %v2176 = vpack.c.b16 %v2143, %v2140
    %v2177 = vpack.c.b16 %v2144, %v2141
    %v2178 = vpack.c.b16 %v2148, %v2145
    %v2179 = vpack.c.b16 %v2149, %v2146
    %v2180 = vpack.c.b16 %v2150, %v2147
    %v2181 = vpack.c.b16 %v2154, %v2151
    %v2182 = vpack.c.b16 %v2155, %v2152
    %v2183 = vpack.c.b16 %v2156, %v2153
    %v2184 = vpack.c.b16 %v2160, %v2157
    %v2185 = vpack.c.b16 %v2161, %v2158
    %v2186 = vpack.c.b16 %v2162, %v2159
    %2211 = vmatpush.bf16.msra.mxu0 %v2184
    %2212 = vmatpush.bf16.msra.mxu0 %v2181
    %2213 = vmatpush.bf16.msra.mxu0 %v2178
    %2214 = vmatpush.bf16.msra.mxu0 %v2175
    %2215 = vmatpush.bf16.msra.mxu0 %v2172
    %2216 = vmatpush.bf16.msra.mxu0 %v2169
    %2217 = vmatpush.bf16.msra.mxu0 %v2166
    %2218 = vmatpush.bf16.msra.mxu0 %v2163
    %2219 = vmatmul.bf16.gmra.mxu0 %v2040
    %v2220 = vpop.f32.mrf.mxu0
    %v2221 = vadd.f32 %v2077, %v2220
    %v2222 = vpop.f32.mrf.mxu0
    %v2223 = vadd.f32 %v2077, %v2222
    %2224 = vdwg.mxu0
    %2225 = vmatpush.bf16.msra.mxu0 %v2185
    %2226 = vmatpush.bf16.msra.mxu0 %v2182
    %2227 = vmatpush.bf16.msra.mxu0 %v2179
    %2228 = vmatpush.bf16.msra.mxu0 %v2176
    %2229 = vmatpush.bf16.msra.mxu0 %v2173
    %2230 = vmatpush.bf16.msra.mxu0 %v2170
    %2231 = vmatpush.bf16.msra.mxu0 %v2167
    %2232 = vmatpush.bf16.msra.mxu0 %v2164
    %2233 = vmatmul.bf16.gmra.mxu0 %v2040
    %v2234 = vpop.f32.mrf.mxu0
    %v2235 = vadd.f32 %v2078, %v2234
    %v2236 = vpop.f32.mrf.mxu0
    %v2237 = vadd.f32 %v2078, %v2236
    %2238 = vdwg.mxu0
    %2239 = vmatpush.bf16.msra.mxu0 %v2186
    %2240 = vmatpush.bf16.msra.mxu0 %v2183
    %2241 = vmatpush.bf16.msra.mxu0 %v2180
    %2242 = vmatpush.bf16.msra.mxu0 %v2177
    %2243 = vmatpush.bf16.msra.mxu0 %v2174
    %2244 = vmatpush.bf16.msra.mxu0 %v2171
    %2245 = vmatpush.bf16.msra.mxu0 %v2168
    %2246 = vmatpush.bf16.msra.mxu0 %v2165
    %2247 = vmatmul.bf16.gmra.mxu0 %v2040
    %v2248 = vpop.f32.mrf.mxu0
    %v2249 = vadd.f32 %v2079, %v2248
    %v2250 = vpop.f32.mrf.mxu0
    %v2251 = vadd.f32 %v2079, %v2250
    %2252 = vdwg.mxu0
    %2255 = vrot.lane.b32.xlu0 %v2221, 96
    %v2256 = vpop.permute.xlu0 %2255
    %2257 = vrot.lane.b32.xlu0 %v2223, 96
    %v2258 = vpop.permute.xlu0 %2257
    %2261 = vrot.lane.b32.xlu0 %v2221, 64
    %v2262 = vpop.permute.xlu0 %2261
    %2263 = vrot.lane.b32.xlu0 %v2223, 64
    %v2264 = vpop.permute.xlu0 %2263
    %2267 = vrot.lane.b32.xlu0 %v2221, 32
    %v2268 = vpop.permute.xlu0 %2267
    %2269 = vrot.lane.b32.xlu0 %v2223, 32
    %v2270 = vpop.permute.xlu0 %2269
    %v2273 = vpack.c.bf16 %v2221, %v2221
    %v2274 = vpack.c.bf16 %v2223, %v2223
    %v2275 = vpack.c.bf16 %v2256, %v2256
    %v2276 = vpack.c.bf16 %v2258, %v2258
    %v2277 = vpack.c.bf16 %v2262, %v2262
    %v2278 = vpack.c.bf16 %v2264, %v2264
    %v2279 = vpack.c.bf16 %v2268, %v2268
    %v2280 = vpack.c.bf16 %v2270, %v2270
    %2283 = vrot.lane.b32.xlu0 %v2235, 96
    %v2284 = vpop.permute.xlu0 %2283
    %2285 = vrot.lane.b32.xlu0 %v2237, 96
    %v2286 = vpop.permute.xlu0 %2285
    %2289 = vrot.lane.b32.xlu0 %v2235, 64
    %v2290 = vpop.permute.xlu0 %2289
    %2291 = vrot.lane.b32.xlu0 %v2237, 64
    %v2292 = vpop.permute.xlu0 %2291
    %2295 = vrot.lane.b32.xlu0 %v2235, 32
    %v2296 = vpop.permute.xlu0 %2295
    %2297 = vrot.lane.b32.xlu0 %v2237, 32
    %v2298 = vpop.permute.xlu0 %2297
    %v2301 = vpack.c.bf16 %v2235, %v2235
    %v2302 = vpack.c.bf16 %v2237, %v2237
    %v2303 = vpack.c.bf16 %v2284, %v2284
    %v2304 = vpack.c.bf16 %v2286, %v2286
    %v2305 = vpack.c.bf16 %v2290, %v2290
    %v2306 = vpack.c.bf16 %v2292, %v2292
    %v2307 = vpack.c.bf16 %v2296, %v2296
    %v2308 = vpack.c.bf16 %v2298, %v2298
    %2311 = vrot.lane.b32.xlu0 %v2249, 96
    %v2312 = vpop.permute.xlu0 %2311
    %2313 = vrot.lane.b32.xlu0 %v2251, 96
    %v2314 = vpop.permute.xlu0 %2313
    %2317 = vrot.lane.b32.xlu0 %v2249, 64
    %v2318 = vpop.permute.xlu0 %2317
    %2319 = vrot.lane.b32.xlu0 %v2251, 64
    %v2320 = vpop.permute.xlu0 %2319
    %2323 = vrot.lane.b32.xlu0 %v2249, 32
    %v2324 = vpop.permute.xlu0 %2323
    %2325 = vrot.lane.b32.xlu0 %v2251, 32
    %v2326 = vpop.permute.xlu0 %2325
    %v2329 = vpack.c.bf16 %v2249, %v2249
    %v2330 = vpack.c.bf16 %v2251, %v2251
    %v2331 = vpack.c.bf16 %v2312, %v2312
    %v2332 = vpack.c.bf16 %v2314, %v2314
    %v2333 = vpack.c.bf16 %v2318, %v2318
    %v2334 = vpack.c.bf16 %v2320, %v2320
    %v2335 = vpack.c.bf16 %v2324, %v2324
    %v2336 = vpack.c.bf16 %v2326, %v2326
    %v2338 = vsel %vm475, %v2273, 0
    %v2341 = vsel %vm475, %v2301, 0
    %2343 = vmatpush.bf16.xpose.msra.mxu0 0
    %2344 = vmatpush.bf16.xpose.msra.mxu0 0
    %2345 = vmatpush.bf16.xpose.msra.mxu0 0
    %2346 = vmatpush.bf16.xpose.msra.mxu0 0
    %2347 = vmatpush.bf16.xpose.msra.mxu0 0
    %2348 = vmatpush.bf16.xpose.msra.mxu0 0
    %2349 = vmatpush.bf16.xpose.msra.mxu0 0
    %2350 = vmatpush.bf16.xpose.msra.mxu0 %v2341
    %2351 = vmatmul.bf16.gmra.mxu0 %v2338
    %v2352 = vpop.f32.mrf.mxu0
    %v2353 = vadd.f32 %v172, %v2352
    %v2354 = vpop.f32.mrf.mxu0
    %2355 = vdwg.mxu0
    %v2357 = vsel %vm475, %v2274, 0
    %v2360 = vsel %vm475, %v2302, 0
    %2362 = vmatpush.bf16.xpose.msra.mxu0 0
    %2363 = vmatpush.bf16.xpose.msra.mxu0 0
    %2364 = vmatpush.bf16.xpose.msra.mxu0 0
    %2365 = vmatpush.bf16.xpose.msra.mxu0 0
    %2366 = vmatpush.bf16.xpose.msra.mxu0 0
    %2367 = vmatpush.bf16.xpose.msra.mxu0 0
    %2368 = vmatpush.bf16.xpose.msra.mxu0 0
    %2369 = vmatpush.bf16.xpose.msra.mxu0 %v2360
    %2370 = vmatmul.bf16.gmra.mxu0 %v2357
    %v2371 = vpop.f32.mrf.mxu0
    %v2372 = vadd.f32 %v173, %v2371
    %v2373 = vpop.f32.mrf.mxu0
    %2374 = vdwg.mxu0
    %v2376 = vsel %vm475, %v2275, 0
    %v2379 = vsel %vm475, %v2303, 0
    %2381 = vmatpush.bf16.xpose.msra.mxu0 0
    %2382 = vmatpush.bf16.xpose.msra.mxu0 0
    %2383 = vmatpush.bf16.xpose.msra.mxu0 0
    %2384 = vmatpush.bf16.xpose.msra.mxu0 0
    %2385 = vmatpush.bf16.xpose.msra.mxu0 0
    %2386 = vmatpush.bf16.xpose.msra.mxu0 0
    %2387 = vmatpush.bf16.xpose.msra.mxu0 0
    %2388 = vmatpush.bf16.xpose.msra.mxu0 %v2379
    %2389 = vmatmul.bf16.gmra.mxu0 %v2376
    %v2390 = vpop.f32.mrf.mxu0
    %v2391 = vadd.f32 %v174, %v2390
    %v2392 = vpop.f32.mrf.mxu0
    %2393 = vdwg.mxu0
    %v2395 = vsel %vm475, %v2276, 0
    %v2398 = vsel %vm475, %v2304, 0
    %2400 = vmatpush.bf16.xpose.msra.mxu0 0
    %2401 = vmatpush.bf16.xpose.msra.mxu0 0
    %2402 = vmatpush.bf16.xpose.msra.mxu0 0
    %2403 = vmatpush.bf16.xpose.msra.mxu0 0
    %2404 = vmatpush.bf16.xpose.msra.mxu0 0
    %2405 = vmatpush.bf16.xpose.msra.mxu0 0
    %2406 = vmatpush.bf16.xpose.msra.mxu0 0
    %2407 = vmatpush.bf16.xpose.msra.mxu0 %v2398
    %2408 = vmatmul.bf16.gmra.mxu0 %v2395
    %v2409 = vpop.f32.mrf.mxu0
    %v2410 = vadd.f32 %v175, %v2409
    %v2411 = vpop.f32.mrf.mxu0
    %2412 = vdwg.mxu0
    %v2414 = vsel %vm475, %v2277, 0
    %v2417 = vsel %vm475, %v2305, 0
    %2419 = vmatpush.bf16.xpose.msra.mxu0 0
    %2420 = vmatpush.bf16.xpose.msra.mxu0 0
    %2421 = vmatpush.bf16.xpose.msra.mxu0 0
    %2422 = vmatpush.bf16.xpose.msra.mxu0 0
    %2423 = vmatpush.bf16.xpose.msra.mxu0 0
    %2424 = vmatpush.bf16.xpose.msra.mxu0 0
    %2425 = vmatpush.bf16.xpose.msra.mxu0 0
    %2426 = vmatpush.bf16.xpose.msra.mxu0 %v2417
    %2427 = vmatmul.bf16.gmra.mxu0 %v2414
    %v2428 = vpop.f32.mrf.mxu0
    %v2429 = vadd.f32 %v176, %v2428
    %v2430 = vpop.f32.mrf.mxu0
    %2431 = vdwg.mxu0
    %v2433 = vsel %vm475, %v2278, 0
    %v2436 = vsel %vm475, %v2306, 0
    %2438 = vmatpush.bf16.xpose.msra.mxu0 0
    %2439 = vmatpush.bf16.xpose.msra.mxu0 0
    %2440 = vmatpush.bf16.xpose.msra.mxu0 0
    %2441 = vmatpush.bf16.xpose.msra.mxu0 0
    %2442 = vmatpush.bf16.xpose.msra.mxu0 0
    %2443 = vmatpush.bf16.xpose.msra.mxu0 0
    %2444 = vmatpush.bf16.xpose.msra.mxu0 0
    %2445 = vmatpush.bf16.xpose.msra.mxu0 %v2436
    %2446 = vmatmul.bf16.gmra.mxu0 %v2433
    %v2447 = vpop.f32.mrf.mxu0
    %v2448 = vadd.f32 %v177, %v2447
    %v2449 = vpop.f32.mrf.mxu0
    %2450 = vdwg.mxu0
    %v2452 = vsel %vm475, %v2279, 0
    %v2455 = vsel %vm475, %v2307, 0
    %2457 = vmatpush.bf16.xpose.msra.mxu0 0
    %2458 = vmatpush.bf16.xpose.msra.mxu0 0
    %2459 = vmatpush.bf16.xpose.msra.mxu0 0
    %2460 = vmatpush.bf16.xpose.msra.mxu0 0
    %2461 = vmatpush.bf16.xpose.msra.mxu0 0
    %2462 = vmatpush.bf16.xpose.msra.mxu0 0
    %2463 = vmatpush.bf16.xpose.msra.mxu0 0
    %2464 = vmatpush.bf16.xpose.msra.mxu0 %v2455
    %2465 = vmatmul.bf16.gmra.mxu0 %v2452
    %v2466 = vpop.f32.mrf.mxu0
    %v2467 = vadd.f32 %v178, %v2466
    %v2468 = vpop.f32.mrf.mxu0
    %2469 = vdwg.mxu0
    %v2471 = vsel %vm475, %v2280, 0
    %v2474 = vsel %vm475, %v2308, 0
    %2476 = vmatpush.bf16.xpose.msra.mxu0 0
    %2477 = vmatpush.bf16.xpose.msra.mxu0 0
    %2478 = vmatpush.bf16.xpose.msra.mxu0 0
    %2479 = vmatpush.bf16.xpose.msra.mxu0 0
    %2480 = vmatpush.bf16.xpose.msra.mxu0 0
    %2481 = vmatpush.bf16.xpose.msra.mxu0 0
    %2482 = vmatpush.bf16.xpose.msra.mxu0 0
    %2483 = vmatpush.bf16.xpose.msra.mxu0 %v2474
    %2484 = vmatmul.bf16.gmra.mxu0 %v2471
    %v2485 = vpop.f32.mrf.mxu0
    %v2486 = vadd.f32 %v179, %v2485
    %v2487 = vpop.f32.mrf.mxu0
    %2488 = vdwg.mxu0
    %v2489 = vsel %vm628, %v2353, -inf
    %2490 = vmax.xlane.f32.xlu0 %v2489
    %v2491 = vpop.xlane.xlu0 %2490
    %v2492 = vsel %vm628, %v2372, -inf
    %2493 = vmax.xlane.f32.xlu0 %v2492
    %v2494 = vpop.xlane.xlu0 %2493
    %v2495 = vsel %vm628, %v2391, -inf
    %2496 = vmax.xlane.f32.xlu0 %v2495
    %v2497 = vpop.xlane.xlu0 %2496
    %v2498 = vsel %vm628, %v2410, -inf
    %2499 = vmax.xlane.f32.xlu0 %v2498
    %v2500 = vpop.xlane.xlu0 %2499
    %v2501 = vsel %vm628, %v2429, -inf
    %2502 = vmax.xlane.f32.xlu0 %v2501
    %v2503 = vpop.xlane.xlu0 %2502
    %v2504 = vsel %vm628, %v2448, -inf
    %2505 = vmax.xlane.f32.xlu0 %v2504
    %v2506 = vpop.xlane.xlu0 %2505
    %v2507 = vsel %vm628, %v2467, -inf
    %2508 = vmax.xlane.f32.xlu0 %v2507
    %v2509 = vpop.xlane.xlu0 %2508
    %v2510 = vsel %vm628, %v2486, -inf
    %2511 = vmax.xlane.f32.xlu0 %v2510
    %v2512 = vpop.xlane.xlu0 %2511
    %v2513 = vsub.f32 %v2353, %v2491
    %v2514 = vsub.f32 %v2372, %v2494
    %v2515 = vsub.f32 %v2391, %v2497
    %v2516 = vsub.f32 %v2410, %v2500
    %v2517 = vsub.f32 %v2429, %v2503
    %v2518 = vsub.f32 %v2448, %v2506
    %v2519 = vsub.f32 %v2467, %v2509
    %v2520 = vsub.f32 %v2486, %v2512
    %v2521 = vmul.f32 %v2513, 1.442695
    %v2522 = vpow.pop %v2521
    %v2523 = vmul.f32 %v2514, 1.442695
    %v2524 = vpow.pop %v2523
    %v2525 = vmul.f32 %v2515, 1.442695
    %v2526 = vpow.pop %v2525
    %v2527 = vmul.f32 %v2516, 1.442695
    %v2528 = vpow.pop %v2527
    %v2529 = vmul.f32 %v2517, 1.442695
    %v2530 = vpow.pop %v2529
    %v2531 = vmul.f32 %v2518, 1.442695
    %v2532 = vpow.pop %v2531
    %v2533 = vmul.f32 %v2519, 1.442695
    %v2534 = vpow.pop %v2533
    %v2535 = vmul.f32 %v2520, 1.442695
    %v2536 = vpow.pop %v2535
    %v2537 = vsel %vm628, %v2522, 0.0
    %2538 = vadd.xlane.f32.xlu0 %v2537
    %v2539 = vpop.xlane.xlu0 %2538
    %v2540 = vsel %vm628, %v2524, 0.0
    %2541 = vadd.xlane.f32.xlu0 %v2540
    %v2542 = vpop.xlane.xlu0 %2541
    %v2543 = vsel %vm628, %v2526, 0.0
    %2544 = vadd.xlane.f32.xlu0 %v2543
    %v2545 = vpop.xlane.xlu0 %2544
    %v2546 = vsel %vm628, %v2528, 0.0
    %2547 = vadd.xlane.f32.xlu0 %v2546
    %v2548 = vpop.xlane.xlu0 %2547
    %v2549 = vsel %vm628, %v2530, 0.0
    %2550 = vadd.xlane.f32.xlu0 %v2549
    %v2551 = vpop.xlane.xlu0 %2550
    %v2552 = vsel %vm628, %v2532, 0.0
    %2553 = vadd.xlane.f32.xlu0 %v2552
    %v2554 = vpop.xlane.xlu0 %2553
    %v2555 = vsel %vm628, %v2534, 0.0
    %2556 = vadd.xlane.f32.xlu0 %v2555
    %v2557 = vpop.xlane.xlu0 %2556
    %v2558 = vsel %vm628, %v2536, 0.0
    %2559 = vadd.xlane.f32.xlu0 %v2558
    %v2560 = vpop.xlane.xlu0 %2559
    %v2561 = vrcp.pop %v2539
    %v2562 = vrcp.pop %v2542
    %v2563 = vrcp.pop %v2545
    %v2564 = vrcp.pop %v2548
    %v2565 = vrcp.pop %v2551
    %v2566 = vrcp.pop %v2554
    %v2567 = vrcp.pop %v2557
    %v2568 = vrcp.pop %v2560
    %v2569 = vmul.f32 %v2522, %v2561
    %v2570 = vmul.f32 %v2524, %v2562
    %v2571 = vmul.f32 %v2526, %v2563
    %v2572 = vmul.f32 %v2528, %v2564
    %v2573 = vmul.f32 %v2530, %v2565
    %v2574 = vmul.f32 %v2532, %v2566
    %v2575 = vmul.f32 %v2534, %v2567
    %v2576 = vmul.f32 %v2536, %v2568
    %v2577 = vpack.c.bf16 %v2569, %v2569
    %v2578 = vpack.c.bf16 %v2570, %v2570
    %v2579 = vpack.c.bf16 %v2571, %v2571
    %v2580 = vpack.c.bf16 %v2572, %v2572
    %v2581 = vpack.c.bf16 %v2573, %v2573
    %v2582 = vpack.c.bf16 %v2574, %v2574
    %v2583 = vpack.c.bf16 %v2575, %v2575
    %v2584 = vpack.c.bf16 %v2576, %v2576
    %v2586 = vsel %vm628, %v2577, 0
    %v2589 = vsel %vm728, %v2329, 0
    %2591 = vmatpush.bf16.msra.mxu0 0
    %2592 = vmatpush.bf16.msra.mxu0 0
    %2593 = vmatpush.bf16.msra.mxu0 0
    %2594 = vmatpush.bf16.msra.mxu0 0
    %2595 = vmatpush.bf16.msra.mxu0 0
    %2596 = vmatpush.bf16.msra.mxu0 0
    %2597 = vmatpush.bf16.msra.mxu0 0
    %2598 = vmatpush.bf16.msra.mxu0 %v2589
    %2599 = vmatmul.bf16.gmra.mxu0 %v2586
    %v2600 = vpop.f32.mrf.mxu0
    %v2601 = vadd.f32 0.0, %v2600
    %v2602 = vpop.f32.mrf.mxu0
    %2603 = vdwg.mxu0
    %v2605 = vsel %vm628, %v2578, 0
    %v2608 = vsel %vm728, %v2330, 0
    %2610 = vmatpush.bf16.msra.mxu0 0
    %2611 = vmatpush.bf16.msra.mxu0 0
    %2612 = vmatpush.bf16.msra.mxu0 0
    %2613 = vmatpush.bf16.msra.mxu0 0
    %2614 = vmatpush.bf16.msra.mxu0 0
    %2615 = vmatpush.bf16.msra.mxu0 0
    %2616 = vmatpush.bf16.msra.mxu0 0
    %2617 = vmatpush.bf16.msra.mxu0 %v2608
    %2618 = vmatmul.bf16.gmra.mxu0 %v2605
    %v2619 = vpop.f32.mrf.mxu0
    %v2620 = vadd.f32 0.0, %v2619
    %v2621 = vpop.f32.mrf.mxu0
    %2622 = vdwg.mxu0
    %v2624 = vsel %vm628, %v2579, 0
    %v2627 = vsel %vm728, %v2331, 0
    %2629 = vmatpush.bf16.msra.mxu0 0
    %2630 = vmatpush.bf16.msra.mxu0 0
    %2631 = vmatpush.bf16.msra.mxu0 0
    %2632 = vmatpush.bf16.msra.mxu0 0
    %2633 = vmatpush.bf16.msra.mxu0 0
    %2634 = vmatpush.bf16.msra.mxu0 0
    %2635 = vmatpush.bf16.msra.mxu0 0
    %2636 = vmatpush.bf16.msra.mxu0 %v2627
    %2637 = vmatmul.bf16.gmra.mxu0 %v2624
    %v2638 = vpop.f32.mrf.mxu0
    %v2639 = vadd.f32 0.0, %v2638
    %v2640 = vpop.f32.mrf.mxu0
    %2641 = vdwg.mxu0
    %v2643 = vsel %vm628, %v2580, 0
    %v2646 = vsel %vm728, %v2332, 0
    %2648 = vmatpush.bf16.msra.mxu0 0
    %2649 = vmatpush.bf16.msra.mxu0 0
    %2650 = vmatpush.bf16.msra.mxu0 0
    %2651 = vmatpush.bf16.msra.mxu0 0
    %2652 = vmatpush.bf16.msra.mxu0 0
    %2653 = vmatpush.bf16.msra.mxu0 0
    %2654 = vmatpush.bf16.msra.mxu0 0
    %2655 = vmatpush.bf16.msra.mxu0 %v2646
    %2656 = vmatmul.bf16.gmra.mxu0 %v2643
    %v2657 = vpop.f32.mrf.mxu0
    %v2658 = vadd.f32 0.0, %v2657
    %v2659 = vpop.f32.mrf.mxu0
    %2660 = vdwg.mxu0
    %v2662 = vsel %vm628, %v2581, 0
    %v2665 = vsel %vm728, %v2333, 0
    %2667 = vmatpush.bf16.msra.mxu0 0
    %2668 = vmatpush.bf16.msra.mxu0 0
    %2669 = vmatpush.bf16.msra.mxu0 0
    %2670 = vmatpush.bf16.msra.mxu0 0
    %2671 = vmatpush.bf16.msra.mxu0 0
    %2672 = vmatpush.bf16.msra.mxu0 0
    %2673 = vmatpush.bf16.msra.mxu0 0
    %2674 = vmatpush.bf16.msra.mxu0 %v2665
    %2675 = vmatmul.bf16.gmra.mxu0 %v2662
    %v2676 = vpop.f32.mrf.mxu0
    %v2677 = vadd.f32 0.0, %v2676
    %v2678 = vpop.f32.mrf.mxu0
    %2679 = vdwg.mxu0
    %v2681 = vsel %vm628, %v2582, 0
    %v2684 = vsel %vm728, %v2334, 0
    %2686 = vmatpush.bf16.msra.mxu0 0
    %2687 = vmatpush.bf16.msra.mxu0 0
    %2688 = vmatpush.bf16.msra.mxu0 0
    %2689 = vmatpush.bf16.msra.mxu0 0
    %2690 = vmatpush.bf16.msra.mxu0 0
    %2691 = vmatpush.bf16.msra.mxu0 0
    %2692 = vmatpush.bf16.msra.mxu0 0
    %2693 = vmatpush.bf16.msra.mxu0 %v2684
    %2694 = vmatmul.bf16.gmra.mxu0 %v2681
    %v2695 = vpop.f32.mrf.mxu0
    %v2696 = vadd.f32 0.0, %v2695
    %v2697 = vpop.f32.mrf.mxu0
    %2698 = vdwg.mxu0
    %v2700 = vsel %vm628, %v2583, 0
    %v2703 = vsel %vm728, %v2335, 0
    %2705 = vmatpush.bf16.msra.mxu0 0
    %2706 = vmatpush.bf16.msra.mxu0 0
    %2707 = vmatpush.bf16.msra.mxu0 0
    %2708 = vmatpush.bf16.msra.mxu0 0
    %2709 = vmatpush.bf16.msra.mxu0 0
    %2710 = vmatpush.bf16.msra.mxu0 0
    %2711 = vmatpush.bf16.msra.mxu0 0
    %2712 = vmatpush.bf16.msra.mxu0 %v2703
    %2713 = vmatmul.bf16.gmra.mxu0 %v2700
    %v2714 = vpop.f32.mrf.mxu0
    %v2715 = vadd.f32 0.0, %v2714
    %v2716 = vpop.f32.mrf.mxu0
    %2717 = vdwg.mxu0
    %v2719 = vsel %vm628, %v2584, 0
    %v2722 = vsel %vm728, %v2336, 0
    %2724 = vmatpush.bf16.msra.mxu0 0
    %2725 = vmatpush.bf16.msra.mxu0 0
    %2726 = vmatpush.bf16.msra.mxu0 0
    %2727 = vmatpush.bf16.msra.mxu0 0
    %2728 = vmatpush.bf16.msra.mxu0 0
    %2729 = vmatpush.bf16.msra.mxu0 0
    %2730 = vmatpush.bf16.msra.mxu0 0
    %2731 = vmatpush.bf16.msra.mxu0 %v2722
    %2732 = vmatmul.bf16.gmra.mxu0 %v2719
    %v2733 = vpop.f32.mrf.mxu0
    %v2734 = vadd.f32 0.0, %v2733
    %v2735 = vpop.f32.mrf.mxu0
    %2736 = vdwg.mxu0
    %2739 = vrot.lane.b32.xlu0 %v2639, 32
    %v2740 = vpop.permute.xlu0 %2739
    %2741 = vrot.lane.b32.xlu0 %v2658, 32
    %v2742 = vpop.permute.xlu0 %2741
    %2747 = vrot.lane.b32.xlu0 %v2677, 64
    %v2748 = vpop.permute.xlu0 %2747
    %2749 = vrot.lane.b32.xlu0 %v2696, 64
    %v2750 = vpop.permute.xlu0 %2749
    %2755 = vrot.lane.b32.xlu0 %v2715, 96
    %v2756 = vpop.permute.xlu0 %2755
    %2757 = vrot.lane.b32.xlu0 %v2734, 96
    %v2758 = vpop.permute.xlu0 %2757
    %v2761 = vsel %vm475, %v2601, %v2740
    %v2762 = vsel %vm475, %v2620, %v2742
    %v2763 = vsel %vm904, %v2761, %v2748
    %v2764 = vsel %vm904, %v2762, %v2750
    %v2765 = vsel %vm907, %v2763, %v2756
    %v2766 = vsel %vm907, %v2764, %v2758
    %v2767 = vpack.c.bf16 %v2766, %v2765
    %s2768 = scalar_lea.vmem %s6, 64
    %v2769 = vld [vmem:[%s2768] sm:$0xf]
    %v2770 = vld [vmem:[%s2768 + $0x4] sm:$0xf]
    %v2771 = vld [vmem:[%s2768 + $0x8] sm:$0xf]
    %v2772 = vld [vmem:[%s2768 + $0xc] sm:$0xf]
    %v2773 = vld [vmem:[%s2768 + $0x10] sm:$0xf]
    %v2774 = vld [vmem:[%s2768 + $0x14] sm:$0xf]
    %v2775 = vld [vmem:[%s2768 + $0x18] sm:$0xf]
    %v2776 = vld [vmem:[%s2768 + $0x1c] sm:$0xf]
    %v2777 = vld [vmem:[%s2768 + $0x20] sm:$0xf]
    %v2778 = vld [vmem:[%s2768 + $0x24] sm:$0xf]
    %v2779 = vld [vmem:[%s2768 + $0x28] sm:$0xf]
    %v2780 = vld [vmem:[%s2768 + $0x2c] sm:$0xf]
    %v2781 = vld [vmem:[%s2768 + $0x30] sm:$0xf]
    %v2782 = vld [vmem:[%s2768 + $0x34] sm:$0xf]
    %v2783 = vld [vmem:[%s2768 + $0x38] sm:$0xf]
    %v2784 = vld [vmem:[%s2768 + $0x3c] sm:$0xf]
    %s2785 = scalar_lea.vmem %s7, 1
    %v2786 = vld [vmem:[%s2785] sm:$0x1]
    %v2788 = vperm.slane %v2786, 0
    %v2806 = vunpack.c.l.b16 %v2769
    %v2807 = vunpack.c.l.b16 %v2770
    %v2808 = vunpack.c.l.b16 %v2771
    %v2809 = vunpack.c.l.b16 %v2772
    %v2810 = vunpack.c.l.b16 %v2773
    %v2811 = vunpack.c.l.b16 %v2774
    %v2812 = vunpack.c.l.b16 %v2775
    %v2813 = vunpack.c.l.b16 %v2776
    %v2814 = vunpack.c.l.b16 %v2777
    %v2815 = vunpack.c.l.b16 %v2778
    %v2816 = vunpack.c.l.b16 %v2779
    %v2817 = vunpack.c.l.b16 %v2780
    %v2818 = vunpack.c.l.b16 %v2781
    %v2819 = vunpack.c.l.b16 %v2782
    %v2820 = vunpack.c.l.b16 %v2783
    %v2821 = vunpack.c.l.b16 %v2784
    %v2822 = vpack.c.b16 %v2807, %v2806
    %v2823 = vpack.c.b16 %v2809, %v2808
    %v2824 = vpack.c.b16 %v2811, %v2810
    %v2825 = vpack.c.b16 %v2813, %v2812
    %v2826 = vpack.c.b16 %v2815, %v2814
    %v2827 = vpack.c.b16 %v2817, %v2816
    %v2828 = vpack.c.b16 %v2819, %v2818
    %v2829 = vpack.c.b16 %v2821, %v2820
    %2838 = vmatpush.bf16.msra.mxu0 %v2829
    %2839 = vmatpush.bf16.msra.mxu0 %v2828
    %2840 = vmatpush.bf16.msra.mxu0 %v2827
    %2841 = vmatpush.bf16.msra.mxu0 %v2826
    %2842 = vmatpush.bf16.msra.mxu0 %v2825
    %2843 = vmatpush.bf16.msra.mxu0 %v2824
    %2844 = vmatpush.bf16.msra.mxu0 %v2823
    %2845 = vmatpush.bf16.msra.mxu0 %v2822
    %2846 = vmatmul.bf16.gmra.mxu0 %v2767
    %v2847 = vpop.f32.mrf.mxu0
    %v2848 = vadd.f32 %v2788, %v2847
    %v2849 = vpop.f32.mrf.mxu0
    %v2850 = vadd.f32 %v2788, %v2849
    %2851 = vdwg.mxu0
    %v2852 = vadd.f32 %v2038, %v2848
    %v2853 = vadd.f32 %v2039, %v2850
    %s2854 = scalar_lea.vmem %s8, 1
    %v2855 = vld [vmem:[%s2854] sm:$0x1]
    %s2856 = scalar_lea.vmem %s9, 1
    %v2857 = vld [vmem:[%s2856] sm:$0x1]
    %2858 = vadd.xlane.f32.xlu0 %v2852
    %v2859 = vpop.xlane.xlu0 %2858
    %2860 = vadd.xlane.f32.xlu0 %v2853
    %v2861 = vpop.xlane.xlu0 %2860
    %v2862 = vmul.f32 %v2859, %v121
    %v2863 = vmul.f32 %v2861, %v121
    %v2864 = vmul.f32 %v2852, %v2852
    %v2865 = vmul.f32 %v2853, %v2853
    %2866 = vadd.xlane.f32.xlu0 %v2864
    %v2867 = vpop.xlane.xlu0 %2866
    %2868 = vadd.xlane.f32.xlu0 %v2865
    %v2869 = vpop.xlane.xlu0 %2868
    %v2870 = vmul.f32 %v2867, %v121
    %v2871 = vmul.f32 %v2869, %v121
    %v2872 = vmul.f32 %v2862, %v2862
    %v2873 = vmul.f32 %v2863, %v2863
    %v2874 = vsub.f32 %v2870, %v2872
    %v2875 = vsub.f32 %v2871, %v2873
    %v2876 = vsub.f32 %v2852, %v2862
    %v2877 = vsub.f32 %v2853, %v2863
    %v2878 = vadd.f32 %v2874, 1e-12
    %v2879 = vadd.f32 %v2875, 1e-12
    %v2880 = vrsqrt.pop %v2878
    %v2881 = vmul.f32 %v2880, %v2878
    %v2882 = vmul.f32 %v2881, %v2880
    %v2883 = vmul.f32 0.5, %v2882
    %v2884 = vsub.f32 1.5, %v2883
    %v2885 = vmul.f32 %v2880, %v2884
    %vm2886 = vweird.f32 %v2878
    %vm2887 = vweird.f32 %v2880
    %vm2888 = vmor %vm2886, %vm2887
    %v2889 = vsel %vm2888, %v2880, %v2885
    %v2890 = vrsqrt.pop %v2879
    %v2891 = vmul.f32 %v2890, %v2879
    %v2892 = vmul.f32 %v2891, %v2890
    %v2893 = vmul.f32 0.5, %v2892
    %v2894 = vsub.f32 1.5, %v2893
    %v2895 = vmul.f32 %v2890, %v2894
    %vm2896 = vweird.f32 %v2879
    %vm2897 = vweird.f32 %v2890
    %vm2898 = vmor %vm2896, %vm2897
    %v2899 = vsel %vm2898, %v2890, %v2895
    %v2900 = vmul.f32 %v2876, %v2889
    %v2901 = vmul.f32 %v2877, %v2899
    %v2903 = vperm.slane %v2855, 0
    %v2905 = vmul.f32 %v2900, %v2903
    %v2906 = vmul.f32 %v2901, %v2903
    %v2908 = vperm.slane %v2857, 0
    %v2910 = vadd.f32 %v2905, %v2908
    %v2911 = vadd.f32 %v2906, %v2908
    %v2912 = vpack.c.bf16 %v2911, %v2910
    %s2913 = scalar_lea.vmem [#allocation4], 256
    %v2914 = vld [vmem:[%s2913] sm:$0xff]
    %v2915 = vld [vmem:[%s2913 + $0x8] sm:$0xff]
    %v2916 = vld [vmem:[%s2913 + $0x10] sm:$0xff]
    %v2917 = vld [vmem:[%s2913 + $0x18] sm:$0xff]
    %v2918 = vld [vmem:[%s2913 + $0x20] sm:$0xff]
    %v2919 = vld [vmem:[%s2913 + $0x28] sm:$0xff]
    %v2920 = vld [vmem:[%s2913 + $0x30] sm:$0xff]
    %v2921 = vld [vmem:[%s2913 + $0x38] sm:$0xff]
    %v2922 = vld [vmem:[%s2913 + $0x40] sm:$0xff]
    %v2923 = vld [vmem:[%s2913 + $0x48] sm:$0xff]
    %v2924 = vld [vmem:[%s2913 + $0x50] sm:$0xff]
    %v2925 = vld [vmem:[%s2913 + $0x58] sm:$0xff]
    %v2926 = vld [vmem:[%s2913 + $0x60] sm:$0xff]
    %v2927 = vld [vmem:[%s2913 + $0x68] sm:$0xff]
    %v2928 = vld [vmem:[%s2913 + $0x70] sm:$0xff]
    %v2929 = vld [vmem:[%s2913 + $0x78] sm:$0xff]
    %v2930 = vld [vmem:[%s2913 + $0x80] sm:$0xff]
    %v2931 = vld [vmem:[%s2913 + $0x88] sm:$0xff]
    %v2932 = vld [vmem:[%s2913 + $0x90] sm:$0xff]
    %v2933 = vld [vmem:[%s2913 + $0x98] sm:$0xff]
    %v2934 = vld [vmem:[%s2913 + $0xa0] sm:$0xff]
    %v2935 = vld [vmem:[%s2913 + $0xa8] sm:$0xff]
    %v2936 = vld [vmem:[%s2913 + $0xb0] sm:$0xff]
    %v2937 = vld [vmem:[%s2913 + $0xb8] sm:$0xff]
    %v2938 = vld [vmem:[%s2913 + $0xc0] sm:$0xff]
    %v2939 = vld [vmem:[%s2913 + $0xc8] sm:$0xff]
    %v2940 = vld [vmem:[%s2913 + $0xd0] sm:$0xff]
    %v2941 = vld [vmem:[%s2913 + $0xd8] sm:$0xff]
    %v2942 = vld [vmem:[%s2913 + $0xe0] sm:$0xff]
    %v2943 = vld [vmem:[%s2913 + $0xe8] sm:$0xff]
    %v2944 = vld [vmem:[%s2913 + $0xf0] sm:$0xff]
    %v2945 = vld [vmem:[%s2913 + $0xf8] sm:$0xff]
    %s2946 = scalar_lea.vmem %s11, 4
    %v2947 = vld [vmem:[%s2946] sm:$0xf]
    %v2949 = vperm.slane %v2947, 0
    %v2950 = vperm.slane %v2947, 1
    %v2951 = vperm.slane %v2947, 2
    %v2952 = vperm.slane %v2947, 3
    %v2989 = vunpack.c.l.b16 %v2914
    %v2990 = vunpack.c.h.b16 %v2914
    %v2991 = vunpack.c.l.b16 %v2915
    %v2992 = vunpack.c.h.b16 %v2915
    %v2993 = vunpack.c.l.b16 %v2916
    %v2994 = vunpack.c.h.b16 %v2916
    %v2995 = vunpack.c.l.b16 %v2917
    %v2996 = vunpack.c.h.b16 %v2917
    %v2997 = vunpack.c.l.b16 %v2918
    %v2998 = vunpack.c.h.b16 %v2918
    %v2999 = vunpack.c.l.b16 %v2919
    %v3000 = vunpack.c.h.b16 %v2919
    %v3001 = vunpack.c.l.b16 %v2920
    %v3002 = vunpack.c.h.b16 %v2920
    %v3003 = vunpack.c.l.b16 %v2921
    %v3004 = vunpack.c.h.b16 %v2921
    %v3005 = vunpack.c.l.b16 %v2922
    %v3006 = vunpack.c.h.b16 %v2922
    %v3007 = vunpack.c.l.b16 %v2923
    %v3008 = vunpack.c.h.b16 %v2923
    %v3009 = vunpack.c.l.b16 %v2924
    %v3010 = vunpack.c.h.b16 %v2924
    %v3011 = vunpack.c.l.b16 %v2925
    %v3012 = vunpack.c.h.b16 %v2925
    %v3013 = vunpack.c.l.b16 %v2926
    %v3014 = vunpack.c.h.b16 %v2926
    %v3015 = vunpack.c.l.b16 %v2927
    %v3016 = vunpack.c.h.b16 %v2927
    %v3017 = vunpack.c.l.b16 %v2928
    %v3018 = vunpack.c.h.b16 %v2928
    %v3019 = vunpack.c.l.b16 %v2929
    %v3020 = vunpack.c.h.b16 %v2929
    %v3021 = vunpack.c.l.b16 %v2930
    %v3022 = vunpack.c.h.b16 %v2930
    %v3023 = vunpack.c.l.b16 %v2931
    %v3024 = vunpack.c.h.b16 %v2931
    %v3025 = vunpack.c.l.b16 %v2932
    %v3026 = vunpack.c.h.b16 %v2932
    %v3027 = vunpack.c.l.b16 %v2933
    %v3028 = vunpack.c.h.b16 %v2933
    %v3029 = vunpack.c.l.b16 %v2934
    %v3030 = vunpack.c.h.b16 %v2934
    %v3031 = vunpack.c.l.b16 %v2935
    %v3032 = vunpack.c.h.b16 %v2935
    %v3033 = vunpack.c.l.b16 %v2936
    %v3034 = vunpack.c.h.b16 %v2936
    %v3035 = vunpack.c.l.b16 %v2937
    %v3036 = vunpack.c.h.b16 %v2937
    %v3037 = vunpack.c.l.b16 %v2938
    %v3038 = vunpack.c.h.b16 %v2938
    %v3039 = vunpack.c.l.b16 %v2939
    %v3040 = vunpack.c.h.b16 %v2939
    %v3041 = vunpack.c.l.b16 %v2940
    %v3042 = vunpack.c.h.b16 %v2940
    %v3043 = vunpack.c.l.b16 %v2941
    %v3044 = vunpack.c.h.b16 %v2941
    %v3045 = vunpack.c.l.b16 %v2942
    %v3046 = vunpack.c.h.b16 %v2942
    %v3047 = vunpack.c.l.b16 %v2943
    %v3048 = vunpack.c.h.b16 %v2943
    %v3049 = vunpack.c.l.b16 %v2944
    %v3050 = vunpack.c.h.b16 %v2944
    %v3051 = vunpack.c.l.b16 %v2945
    %v3052 = vunpack.c.h.b16 %v2945
    %v3053 = vpack.c.b16 %v2993, %v2989
    %v3054 = vpack.c.b16 %v2994, %v2990
    %v3055 = vpack.c.b16 %v2995, %v2991
    %v3056 = vpack.c.b16 %v2996, %v2992
    %v3057 = vpack.c.b16 %v3001, %v2997
    %v3058 = vpack.c.b16 %v3002, %v2998
    %v3059 = vpack.c.b16 %v3003, %v2999
    %v3060 = vpack.c.b16 %v3004, %v3000
    %v3061 = vpack.c.b16 %v3009, %v3005
    %v3062 = vpack.c.b16 %v3010, %v3006
    %v3063 = vpack.c.b16 %v3011, %v3007
    %v3064 = vpack.c.b16 %v3012, %v3008
    %v3065 = vpack.c.b16 %v3017, %v3013
    %v3066 = vpack.c.b16 %v3018, %v3014
    %v3067 = vpack.c.b16 %v3019, %v3015
    %v3068 = vpack.c.b16 %v3020, %v3016
    %v3069 = vpack.c.b16 %v3025, %v3021
    %v3070 = vpack.c.b16 %v3026, %v3022
    %v3071 = vpack.c.b16 %v3027, %v3023
    %v3072 = vpack.c.b16 %v3028, %v3024
    %v3073 = vpack.c.b16 %v3033, %v3029
    %v3074 = vpack.c.b16 %v3034, %v3030
    %v3075 = vpack.c.b16 %v3035, %v3031
    %v3076 = vpack.c.b16 %v3036, %v3032
    %v3077 = vpack.c.b16 %v3041, %v3037
    %v3078 = vpack.c.b16 %v3042, %v3038
    %v3079 = vpack.c.b16 %v3043, %v3039
    %v3080 = vpack.c.b16 %v3044, %v3040
    %v3081 = vpack.c.b16 %v3049, %v3045
    %v3082 = vpack.c.b16 %v3050, %v3046
    %v3083 = vpack.c.b16 %v3051, %v3047
    %v3084 = vpack.c.b16 %v3052, %v3048
    %3117 = vmatpush.bf16.msra.mxu0 %v3081
    %3118 = vmatpush.bf16.msra.mxu0 %v3077
    %3119 = vmatpush.bf16.msra.mxu0 %v3073
    %3120 = vmatpush.bf16.msra.mxu0 %v3069
    %3121 = vmatpush.bf16.msra.mxu0 %v3065
    %3122 = vmatpush.bf16.msra.mxu0 %v3061
    %3123 = vmatpush.bf16.msra.mxu0 %v3057
    %3124 = vmatpush.bf16.msra.mxu0 %v3053
    %3125 = vmatmul.bf16.gmra.mxu0 %v2912
    %v3126 = vpop.f32.mrf.mxu0
    %v3127 = vadd.f32 %v2949, %v3126
    %v3128 = vpop.f32.mrf.mxu0
    %v3129 = vadd.f32 %v2949, %v3128
    %3130 = vdwg.mxu0
    %3131 = vmatpush.bf16.msra.mxu0 %v3082
    %3132 = vmatpush.bf16.msra.mxu0 %v3078
    %3133 = vmatpush.bf16.msra.mxu0 %v3074
    %3134 = vmatpush.bf16.msra.mxu0 %v3070
    %3135 = vmatpush.bf16.msra.mxu0 %v3066
    %3136 = vmatpush.bf16.msra.mxu0 %v3062
    %3137 = vmatpush.bf16.msra.mxu0 %v3058
    %3138 = vmatpush.bf16.msra.mxu0 %v3054
    %3139 = vmatmul.bf16.gmra.mxu0 %v2912
    %v3140 = vpop.f32.mrf.mxu0
    %v3141 = vadd.f32 %v2950, %v3140
    %v3142 = vpop.f32.mrf.mxu0
    %v3143 = vadd.f32 %v2950, %v3142
    %3144 = vdwg.mxu0
    %3145 = vmatpush.bf16.msra.mxu0 %v3083
    %3146 = vmatpush.bf16.msra.mxu0 %v3079
    %3147 = vmatpush.bf16.msra.mxu0 %v3075
    %3148 = vmatpush.bf16.msra.mxu0 %v3071
    %3149 = vmatpush.bf16.msra.mxu0 %v3067
    %3150 = vmatpush.bf16.msra.mxu0 %v3063
    %3151 = vmatpush.bf16.msra.mxu0 %v3059
    %3152 = vmatpush.bf16.msra.mxu0 %v3055
    %3153 = vmatmul.bf16.gmra.mxu0 %v2912
    %v3154 = vpop.f32.mrf.mxu0
    %v3155 = vadd.f32 %v2951, %v3154
    %v3156 = vpop.f32.mrf.mxu0
    %v3157 = vadd.f32 %v2951, %v3156
    %3158 = vdwg.mxu0
    %3159 = vmatpush.bf16.msra.mxu0 %v3084
    %3160 = vmatpush.bf16.msra.mxu0 %v3080
    %3161 = vmatpush.bf16.msra.mxu0 %v3076
    %3162 = vmatpush.bf16.msra.mxu0 %v3072
    %3163 = vmatpush.bf16.msra.mxu0 %v3068
    %3164 = vmatpush.bf16.msra.mxu0 %v3064
    %3165 = vmatpush.bf16.msra.mxu0 %v3060
    %3166 = vmatpush.bf16.msra.mxu0 %v3056
    %3167 = vmatmul.bf16.gmra.mxu0 %v2912
    %v3168 = vpop.f32.mrf.mxu0
    %v3169 = vadd.f32 %v2952, %v3168
    %v3170 = vpop.f32.mrf.mxu0
    %v3171 = vadd.f32 %v2952, %v3170
    %3172 = vdwg.mxu0
    %v3173 = vmul.f32 %v3127, 0.5
    %v3174 = vmul.f32 %v3141, 0.5
    %v3175 = vmul.f32 %v3155, 0.5
    %v3176 = vmul.f32 %v3169, 0.5
    %v3177 = vmul.f32 %v3129, 0.5
    %v3178 = vmul.f32 %v3143, 0.5
    %v3179 = vmul.f32 %v3157, 0.5
    %v3180 = vmul.f32 %v3171, 0.5
    %v3181 = vmul.f32 %v3127, 0.70710677
    %v3182 = vmul.f32 %v3141, 0.70710677
    %v3183 = vmul.f32 %v3155, 0.70710677
    %v3184 = vmul.f32 %v3169, 0.70710677
    %v3185 = vmul.f32 %v3129, 0.70710677
    %v3186 = vmul.f32 %v3143, 0.70710677
    %v3187 = vmul.f32 %v3157, 0.70710677
    %v3188 = vmul.f32 %v3171, 0.70710677
    %v3189 = vmul.f32 %v3181, %v3181
    %v3190 = vmin.f32 16.0, %v3189
    %v3191 = vmul.f32 %v3190, 2.1237322e-06
    %v3192 = vadd.f32 %v3191, 0.00028619796
    %v3193 = vmul.f32 %v3190, %v3192
    %v3194 = vadd.f32 %v3193, 0.0036580483
    %v3195 = vmul.f32 %v3190, %v3194
    %v3196 = vadd.f32 %v3195, 0.05243302
    %v3197 = vmul.f32 %v3190, %v3196
    %v3198 = vadd.f32 %v3197, 0.18741608
    %v3199 = vmul.f32 %v3190, %v3198
    %v3200 = vadd.f32 %v3199, 1.1283791
    %v3201 = vmul.f32 %v3181, %v3200
    %v3202 = vmul.f32 %v3190, 3.8918573e-05
    %v3203 = vadd.f32 %v3202, 0.001143296
    %v3204 = vmul.f32 %v3190, %v3203
    %v3205 = vadd.f32 %v3204, 0.014752088
    %v3206 = vmul.f32 %v3190, %v3205
    %v3207 = vadd.f32 %v3206, 0.112945676
    %v3208 = vmul.f32 %v3190, %v3207
    %v3209 = vadd.f32 %v3208, 0.4994258
    %v3210 = vmul.f32 %v3190, %v3209
    %v3211 = vadd.f32 %v3210, 1.0
    %v3212 = vrcp.pop %v3211
    %v3213 = vmul.f32 %v3211, %v3212
    %v3214 = vsub.f32 1.0, %v3213
    %v3215 = vmul.f32 %v3212, %v3214
    %v3216 = vadd.f32 %v3212, %v3215
    %vm3217 = vweird.f32 %v3211
    %vm3218 = vweird.f32 %v3212
    %vm3219 = vmor %vm3217, %vm3218
    %v3220 = vsel %vm3219, %v3212, %v3216
    %v3221 = vand.u32 2147483647, %v3211
    %vm3222 = vcmp.eq.f32.partialorder %v3221, 8.507059e+37
    %v3223 = vand.u32 %v3211, 2147483648
    %v3224 = vor.u32 1.1754944e-38, %v3223
    %v3225 = vsel %vm3222, %v3224, %v3220
    %v3226 = vmul.f32 %v3201, %v3225
    %v3227 = vmin.f32 %v3226, 1.0
    %v3228 = vmax.f32 %v3227, -1.0
    %v3229 = vmul.f32 %v3182, %v3182
    %v3230 = vmin.f32 16.0, %v3229
    %v3231 = vmul.f32 %v3230, 2.1237322e-06
    %v3232 = vadd.f32 %v3231, 0.00028619796
    %v3233 = vmul.f32 %v3230, %v3232
    %v3234 = vadd.f32 %v3233, 0.0036580483
    %v3235 = vmul.f32 %v3230, %v3234
    %v3236 = vadd.f32 %v3235, 0.05243302
    %v3237 = vmul.f32 %v3230, %v3236
    %v3238 = vadd.f32 %v3237, 0.18741608
    %v3239 = vmul.f32 %v3230, %v3238
    %v3240 = vadd.f32 %v3239, 1.1283791
    %v3241 = vmul.f32 %v3182, %v3240
    %v3242 = vmul.f32 %v3230, 3.8918573e-05
    %v3243 = vadd.f32 %v3242, 0.001143296
    %v3244 = vmul.f32 %v3230, %v3243
    %v3245 = vadd.f32 %v3244, 0.014752088
    %v3246 = vmul.f32 %v3230, %v3245
    %v3247 = vadd.f32 %v3246, 0.112945676
    %v3248 = vmul.f32 %v3230, %v3247
    %v3249 = vadd.f32 %v3248, 0.4994258
    %v3250 = vmul.f32 %v3230, %v3249
    %v3251 = vadd.f32 %v3250, 1.0
    %v3252 = vrcp.pop %v3251
    %v3253 = vmul.f32 %v3251, %v3252
    %v3254 = vsub.f32 1.0, %v3253
    %v3255 = vmul.f32 %v3252, %v3254
    %v3256 = vadd.f32 %v3252, %v3255
    %vm3257 = vweird.f32 %v3251
    %vm3258 = vweird.f32 %v3252
    %vm3259 = vmor %vm3257, %vm3258
    %v3260 = vsel %vm3259, %v3252, %v3256
    %v3261 = vand.u32 2147483647, %v3251
    %vm3262 = vcmp.eq.f32.partialorder %v3261, 8.507059e+37
    %v3263 = vand.u32 %v3251, 2147483648
    %v3264 = vor.u32 1.1754944e-38, %v3263
    %v3265 = vsel %vm3262, %v3264, %v3260
    %v3266 = vmul.f32 %v3241, %v3265
    %v3267 = vmin.f32 %v3266, 1.0
    %v3268 = vmax.f32 %v3267, -1.0
    %v3269 = vmul.f32 %v3183, %v3183
    %v3270 = vmin.f32 16.0, %v3269
    %v3271 = vmul.f32 %v3270, 2.1237322e-06
    %v3272 = vadd.f32 %v3271, 0.00028619796
    %v3273 = vmul.f32 %v3270, %v3272
    %v3274 = vadd.f32 %v3273, 0.0036580483
    %v3275 = vmul.f32 %v3270, %v3274
    %v3276 = vadd.f32 %v3275, 0.05243302
    %v3277 = vmul.f32 %v3270, %v3276
    %v3278 = vadd.f32 %v3277, 0.18741608
    %v3279 = vmul.f32 %v3270, %v3278
    %v3280 = vadd.f32 %v3279, 1.1283791
    %v3281 = vmul.f32 %v3183, %v3280
    %v3282 = vmul.f32 %v3270, 3.8918573e-05
    %v3283 = vadd.f32 %v3282, 0.001143296
    %v3284 = vmul.f32 %v3270, %v3283
    %v3285 = vadd.f32 %v3284, 0.014752088
    %v3286 = vmul.f32 %v3270, %v3285
    %v3287 = vadd.f32 %v3286, 0.112945676
    %v3288 = vmul.f32 %v3270, %v3287
    %v3289 = vadd.f32 %v3288, 0.4994258
    %v3290 = vmul.f32 %v3270, %v3289
    %v3291 = vadd.f32 %v3290, 1.0
    %v3292 = vrcp.pop %v3291
    %v3293 = vmul.f32 %v3291, %v3292
    %v3294 = vsub.f32 1.0, %v3293
    %v3295 = vmul.f32 %v3292, %v3294
    %v3296 = vadd.f32 %v3292, %v3295
    %vm3297 = vweird.f32 %v3291
    %vm3298 = vweird.f32 %v3292
    %vm3299 = vmor %vm3297, %vm3298
    %v3300 = vsel %vm3299, %v3292, %v3296
    %v3301 = vand.u32 2147483647, %v3291
    %vm3302 = vcmp.eq.f32.partialorder %v3301, 8.507059e+37
    %v3303 = vand.u32 %v3291, 2147483648
    %v3304 = vor.u32 1.1754944e-38, %v3303
    %v3305 = vsel %vm3302, %v3304, %v3300
    %v3306 = vmul.f32 %v3281, %v3305
    %v3307 = vmin.f32 %v3306, 1.0
    %v3308 = vmax.f32 %v3307, -1.0
    %v3309 = vmul.f32 %v3184, %v3184
    %v3310 = vmin.f32 16.0, %v3309
    %v3311 = vmul.f32 %v3310, 2.1237322e-06
    %v3312 = vadd.f32 %v3311, 0.00028619796
    %v3313 = vmul.f32 %v3310, %v3312
    %v3314 = vadd.f32 %v3313, 0.0036580483
    %v3315 = vmul.f32 %v3310, %v3314
    %v3316 = vadd.f32 %v3315, 0.05243302
    %v3317 = vmul.f32 %v3310, %v3316
    %v3318 = vadd.f32 %v3317, 0.18741608
    %v3319 = vmul.f32 %v3310, %v3318
    %v3320 = vadd.f32 %v3319, 1.1283791
    %v3321 = vmul.f32 %v3184, %v3320
    %v3322 = vmul.f32 %v3310, 3.8918573e-05
    %v3323 = vadd.f32 %v3322, 0.001143296
    %v3324 = vmul.f32 %v3310, %v3323
    %v3325 = vadd.f32 %v3324, 0.014752088
    %v3326 = vmul.f32 %v3310, %v3325
    %v3327 = vadd.f32 %v3326, 0.112945676
    %v3328 = vmul.f32 %v3310, %v3327
    %v3329 = vadd.f32 %v3328, 0.4994258
    %v3330 = vmul.f32 %v3310, %v3329
    %v3331 = vadd.f32 %v3330, 1.0
    %v3332 = vrcp.pop %v3331
    %v3333 = vmul.f32 %v3331, %v3332
    %v3334 = vsub.f32 1.0, %v3333
    %v3335 = vmul.f32 %v3332, %v3334
    %v3336 = vadd.f32 %v3332, %v3335
    %vm3337 = vweird.f32 %v3331
    %vm3338 = vweird.f32 %v3332
    %vm3339 = vmor %vm3337, %vm3338
    %v3340 = vsel %vm3339, %v3332, %v3336
    %v3341 = vand.u32 2147483647, %v3331
    %vm3342 = vcmp.eq.f32.partialorder %v3341, 8.507059e+37
    %v3343 = vand.u32 %v3331, 2147483648
    %v3344 = vor.u32 1.1754944e-38, %v3343
    %v3345 = vsel %vm3342, %v3344, %v3340
    %v3346 = vmul.f32 %v3321, %v3345
    %v3347 = vmin.f32 %v3346, 1.0
    %v3348 = vmax.f32 %v3347, -1.0
    %v3349 = vmul.f32 %v3185, %v3185
    %v3350 = vmin.f32 16.0, %v3349
    %v3351 = vmul.f32 %v3350, 2.1237322e-06
    %v3352 = vadd.f32 %v3351, 0.00028619796
    %v3353 = vmul.f32 %v3350, %v3352
    %v3354 = vadd.f32 %v3353, 0.0036580483
    %v3355 = vmul.f32 %v3350, %v3354
    %v3356 = vadd.f32 %v3355, 0.05243302
    %v3357 = vmul.f32 %v3350, %v3356
    %v3358 = vadd.f32 %v3357, 0.18741608
    %v3359 = vmul.f32 %v3350, %v3358
    %v3360 = vadd.f32 %v3359, 1.1283791
    %v3361 = vmul.f32 %v3185, %v3360
    %v3362 = vmul.f32 %v3350, 3.8918573e-05
    %v3363 = vadd.f32 %v3362, 0.001143296
    %v3364 = vmul.f32 %v3350, %v3363
    %v3365 = vadd.f32 %v3364, 0.014752088
    %v3366 = vmul.f32 %v3350, %v3365
    %v3367 = vadd.f32 %v3366, 0.112945676
    %v3368 = vmul.f32 %v3350, %v3367
    %v3369 = vadd.f32 %v3368, 0.4994258
    %v3370 = vmul.f32 %v3350, %v3369
    %v3371 = vadd.f32 %v3370, 1.0
    %v3372 = vrcp.pop %v3371
    %v3373 = vmul.f32 %v3371, %v3372
    %v3374 = vsub.f32 1.0, %v3373
    %v3375 = vmul.f32 %v3372, %v3374
    %v3376 = vadd.f32 %v3372, %v3375
    %vm3377 = vweird.f32 %v3371
    %vm3378 = vweird.f32 %v3372
    %vm3379 = vmor %vm3377, %vm3378
    %v3380 = vsel %vm3379, %v3372, %v3376
    %v3381 = vand.u32 2147483647, %v3371
    %vm3382 = vcmp.eq.f32.partialorder %v3381, 8.507059e+37
    %v3383 = vand.u32 %v3371, 2147483648
    %v3384 = vor.u32 1.1754944e-38, %v3383
    %v3385 = vsel %vm3382, %v3384, %v3380
    %v3386 = vmul.f32 %v3361, %v3385
    %v3387 = vmin.f32 %v3386, 1.0
    %v3388 = vmax.f32 %v3387, -1.0
    %v3389 = vmul.f32 %v3186, %v3186
    %v3390 = vmin.f32 16.0, %v3389
    %v3391 = vmul.f32 %v3390, 2.1237322e-06
    %v3392 = vadd.f32 %v3391, 0.00028619796
    %v3393 = vmul.f32 %v3390, %v3392
    %v3394 = vadd.f32 %v3393, 0.0036580483
    %v3395 = vmul.f32 %v3390, %v3394
    %v3396 = vadd.f32 %v3395, 0.05243302
    %v3397 = vmul.f32 %v3390, %v3396
    %v3398 = vadd.f32 %v3397, 0.18741608
    %v3399 = vmul.f32 %v3390, %v3398
    %v3400 = vadd.f32 %v3399, 1.1283791
    %v3401 = vmul.f32 %v3186, %v3400
    %v3402 = vmul.f32 %v3390, 3.8918573e-05
    %v3403 = vadd.f32 %v3402, 0.001143296
    %v3404 = vmul.f32 %v3390, %v3403
    %v3405 = vadd.f32 %v3404, 0.014752088
    %v3406 = vmul.f32 %v3390, %v3405
    %v3407 = vadd.f32 %v3406, 0.112945676
    %v3408 = vmul.f32 %v3390, %v3407
    %v3409 = vadd.f32 %v3408, 0.4994258
    %v3410 = vmul.f32 %v3390, %v3409
    %v3411 = vadd.f32 %v3410, 1.0
    %v3412 = vrcp.pop %v3411
    %v3413 = vmul.f32 %v3411, %v3412
    %v3414 = vsub.f32 1.0, %v3413
    %v3415 = vmul.f32 %v3412, %v3414
    %v3416 = vadd.f32 %v3412, %v3415
    %vm3417 = vweird.f32 %v3411
    %vm3418 = vweird.f32 %v3412
    %vm3419 = vmor %vm3417, %vm3418
    %v3420 = vsel %vm3419, %v3412, %v3416
    %v3421 = vand.u32 2147483647, %v3411
    %vm3422 = vcmp.eq.f32.partialorder %v3421, 8.507059e+37
    %v3423 = vand.u32 %v3411, 2147483648
    %v3424 = vor.u32 1.1754944e-38, %v3423
    %v3425 = vsel %vm3422, %v3424, %v3420
    %v3426 = vmul.f32 %v3401, %v3425
    %v3427 = vmin.f32 %v3426, 1.0
    %v3428 = vmax.f32 %v3427, -1.0
    %v3429 = vmul.f32 %v3187, %v3187
    %v3430 = vmin.f32 16.0, %v3429
    %v3431 = vmul.f32 %v3430, 2.1237322e-06
    %v3432 = vadd.f32 %v3431, 0.00028619796
    %v3433 = vmul.f32 %v3430, %v3432
    %v3434 = vadd.f32 %v3433, 0.0036580483
    %v3435 = vmul.f32 %v3430, %v3434
    %v3436 = vadd.f32 %v3435, 0.05243302
    %v3437 = vmul.f32 %v3430, %v3436
    %v3438 = vadd.f32 %v3437, 0.18741608
    %v3439 = vmul.f32 %v3430, %v3438
    %v3440 = vadd.f32 %v3439, 1.1283791
    %v3441 = vmul.f32 %v3187, %v3440
    %v3442 = vmul.f32 %v3430, 3.8918573e-05
    %v3443 = vadd.f32 %v3442, 0.001143296
    %v3444 = vmul.f32 %v3430, %v3443
    %v3445 = vadd.f32 %v3444, 0.014752088
    %v3446 = vmul.f32 %v3430, %v3445
    %v3447 = vadd.f32 %v3446, 0.112945676
    %v3448 = vmul.f32 %v3430, %v3447
    %v3449 = vadd.f32 %v3448, 0.4994258
    %v3450 = vmul.f32 %v3430, %v3449
    %v3451 = vadd.f32 %v3450, 1.0
    %v3452 = vrcp.pop %v3451
    %v3453 = vmul.f32 %v3451, %v3452
    %v3454 = vsub.f32 1.0, %v3453
    %v3455 = vmul.f32 %v3452, %v3454
    %v3456 = vadd.f32 %v3452, %v3455
    %vm3457 = vweird.f32 %v3451
    %vm3458 = vweird.f32 %v3452
    %vm3459 = vmor %vm3457, %vm3458
    %v3460 = vsel %vm3459, %v3452, %v3456
    %v3461 = vand.u32 2147483647, %v3451
    %vm3462 = vcmp.eq.f32.partialorder %v3461, 8.507059e+37
    %v3463 = vand.u32 %v3451, 2147483648
    %v3464 = vor.u32 1.1754944e-38, %v3463
    %v3465 = vsel %vm3462, %v3464, %v3460
    %v3466 = vmul.f32 %v3441, %v3465
    %v3467 = vmin.f32 %v3466, 1.0
    %v3468 = vmax.f32 %v3467, -1.0
    %v3469 = vmul.f32 %v3188, %v3188
    %v3470 = vmin.f32 16.0, %v3469
    %v3471 = vmul.f32 %v3470, 2.1237322e-06
    %v3472 = vadd.f32 %v3471, 0.00028619796
    %v3473 = vmul.f32 %v3470, %v3472
    %v3474 = vadd.f32 %v3473, 0.0036580483
    %v3475 = vmul.f32 %v3470, %v3474
    %v3476 = vadd.f32 %v3475, 0.05243302
    %v3477 = vmul.f32 %v3470, %v3476
    %v3478 = vadd.f32 %v3477, 0.18741608
    %v3479 = vmul.f32 %v3470, %v3478
    %v3480 = vadd.f32 %v3479, 1.1283791
    %v3481 = vmul.f32 %v3188, %v3480
    %v3482 = vmul.f32 %v3470, 3.8918573e-05
    %v3483 = vadd.f32 %v3482, 0.001143296
    %v3484 = vmul.f32 %v3470, %v3483
    %v3485 = vadd.f32 %v3484, 0.014752088
    %v3486 = vmul.f32 %v3470, %v3485
    %v3487 = vadd.f32 %v3486, 0.112945676
    %v3488 = vmul.f32 %v3470, %v3487
    %v3489 = vadd.f32 %v3488, 0.4994258
    %v3490 = vmul.f32 %v3470, %v3489
    %v3491 = vadd.f32 %v3490, 1.0
    %v3492 = vrcp.pop %v3491
    %v3493 = vmul.f32 %v3491, %v3492
    %v3494 = vsub.f32 1.0, %v3493
    %v3495 = vmul.f32 %v3492, %v3494
    %v3496 = vadd.f32 %v3492, %v3495
    %vm3497 = vweird.f32 %v3491
    %vm3498 = vweird.f32 %v3492
    %vm3499 = vmor %vm3497, %vm3498
    %v3500 = vsel %vm3499, %v3492, %v3496
    %v3501 = vand.u32 2147483647, %v3491
    %vm3502 = vcmp.eq.f32.partialorder %v3501, 8.507059e+37
    %v3503 = vand.u32 %v3491, 2147483648
    %v3504 = vor.u32 1.1754944e-38, %v3503
    %v3505 = vsel %vm3502, %v3504, %v3500
    %v3506 = vmul.f32 %v3481, %v3505
    %v3507 = vmin.f32 %v3506, 1.0
    %v3508 = vmax.f32 %v3507, -1.0
    %v3509 = vadd.f32 %v3228, 1.0
    %v3510 = vadd.f32 %v3268, 1.0
    %v3511 = vadd.f32 %v3308, 1.0
    %v3512 = vadd.f32 %v3348, 1.0
    %v3513 = vadd.f32 %v3388, 1.0
    %v3514 = vadd.f32 %v3428, 1.0
    %v3515 = vadd.f32 %v3468, 1.0
    %v3516 = vadd.f32 %v3508, 1.0
    %v3517 = vmul.f32 %v3173, %v3509
    %v3518 = vmul.f32 %v3174, %v3510
    %v3519 = vmul.f32 %v3175, %v3511
    %v3520 = vmul.f32 %v3176, %v3512
    %v3521 = vmul.f32 %v3177, %v3513
    %v3522 = vmul.f32 %v3178, %v3514
    %v3523 = vmul.f32 %v3179, %v3515
    %v3524 = vmul.f32 %v3180, %v3516
    %v3525 = vpack.c.bf16 %v3521, %v3517
    %v3526 = vpack.c.bf16 %v3522, %v3518
    %v3527 = vpack.c.bf16 %v3523, %v3519
    %v3528 = vpack.c.bf16 %v3524, %v3520
    %s3529 = scalar_lea.vmem [#allocation6], 256
    %v3530 = vld [vmem:[%s3529] sm:$0xf]
    %v3531 = vld [vmem:[%s3529 + $0x4] sm:$0xf]
    %v3532 = vld [vmem:[%s3529 + $0x8] sm:$0xf]
    %v3533 = vld [vmem:[%s3529 + $0xc] sm:$0xf]
    %v3534 = vld [vmem:[%s3529 + $0x10] sm:$0xf]
    %v3535 = vld [vmem:[%s3529 + $0x14] sm:$0xf]
    %v3536 = vld [vmem:[%s3529 + $0x18] sm:$0xf]
    %v3537 = vld [vmem:[%s3529 + $0x1c] sm:$0xf]
    %v3538 = vld [vmem:[%s3529 + $0x20] sm:$0xf]
    %v3539 = vld [vmem:[%s3529 + $0x24] sm:$0xf]
    %v3540 = vld [vmem:[%s3529 + $0x28] sm:$0xf]
    %v3541 = vld [vmem:[%s3529 + $0x2c] sm:$0xf]
    %v3542 = vld [vmem:[%s3529 + $0x30] sm:$0xf]
    %v3543 = vld [vmem:[%s3529 + $0x34] sm:$0xf]
    %v3544 = vld [vmem:[%s3529 + $0x38] sm:$0xf]
    %v3545 = vld [vmem:[%s3529 + $0x3c] sm:$0xf]
    %v3546 = vld [vmem:[%s3529 + $0x40] sm:$0xf]
    %v3547 = vld [vmem:[%s3529 + $0x44] sm:$0xf]
    %v3548 = vld [vmem:[%s3529 + $0x48] sm:$0xf]
    %v3549 = vld [vmem:[%s3529 + $0x4c] sm:$0xf]
    %v3550 = vld [vmem:[%s3529 + $0x50] sm:$0xf]
    %v3551 = vld [vmem:[%s3529 + $0x54] sm:$0xf]
    %v3552 = vld [vmem:[%s3529 + $0x58] sm:$0xf]
    %v3553 = vld [vmem:[%s3529 + $0x5c] sm:$0xf]
    %v3554 = vld [vmem:[%s3529 + $0x60] sm:$0xf]
    %v3555 = vld [vmem:[%s3529 + $0x64] sm:$0xf]
    %v3556 = vld [vmem:[%s3529 + $0x68] sm:$0xf]
    %v3557 = vld [vmem:[%s3529 + $0x6c] sm:$0xf]
    %v3558 = vld [vmem:[%s3529 + $0x70] sm:$0xf]
    %v3559 = vld [vmem:[%s3529 + $0x74] sm:$0xf]
    %v3560 = vld [vmem:[%s3529 + $0x78] sm:$0xf]
    %v3561 = vld [vmem:[%s3529 + $0x7c] sm:$0xf]
    %v3562 = vld [vmem:[%s3529 + $0x80] sm:$0xf]
    %v3563 = vld [vmem:[%s3529 + $0x84] sm:$0xf]
    %v3564 = vld [vmem:[%s3529 + $0x88] sm:$0xf]
    %v3565 = vld [vmem:[%s3529 + $0x8c] sm:$0xf]
    %v3566 = vld [vmem:[%s3529 + $0x90] sm:$0xf]
    %v3567 = vld [vmem:[%s3529 + $0x94] sm:$0xf]
    %v3568 = vld [vmem:[%s3529 + $0x98] sm:$0xf]
    %v3569 = vld [vmem:[%s3529 + $0x9c] sm:$0xf]
    %v3570 = vld [vmem:[%s3529 + $0xa0] sm:$0xf]
    %v3571 = vld [vmem:[%s3529 + $0xa4] sm:$0xf]
    %v3572 = vld [vmem:[%s3529 + $0xa8] sm:$0xf]
    %v3573 = vld [vmem:[%s3529 + $0xac] sm:$0xf]
    %v3574 = vld [vmem:[%s3529 + $0xb0] sm:$0xf]
    %v3575 = vld [vmem:[%s3529 + $0xb4] sm:$0xf]
    %v3576 = vld [vmem:[%s3529 + $0xb8] sm:$0xf]
    %v3577 = vld [vmem:[%s3529 + $0xbc] sm:$0xf]
    %v3578 = vld [vmem:[%s3529 + $0xc0] sm:$0xf]
    %v3579 = vld [vmem:[%s3529 + $0xc4] sm:$0xf]
    %v3580 = vld [vmem:[%s3529 + $0xc8] sm:$0xf]
    %v3581 = vld [vmem:[%s3529 + $0xcc] sm:$0xf]
    %v3582 = vld [vmem:[%s3529 + $0xd0] sm:$0xf]
    %v3583 = vld [vmem:[%s3529 + $0xd4] sm:$0xf]
    %v3584 = vld [vmem:[%s3529 + $0xd8] sm:$0xf]
    %v3585 = vld [vmem:[%s3529 + $0xdc] sm:$0xf]
    %v3586 = vld [vmem:[%s3529 + $0xe0] sm:$0xf]
    %v3587 = vld [vmem:[%s3529 + $0xe4] sm:$0xf]
    %v3588 = vld [vmem:[%s3529 + $0xe8] sm:$0xf]
    %v3589 = vld [vmem:[%s3529 + $0xec] sm:$0xf]
    %v3590 = vld [vmem:[%s3529 + $0xf0] sm:$0xf]
    %v3591 = vld [vmem:[%s3529 + $0xf4] sm:$0xf]
    %v3592 = vld [vmem:[%s3529 + $0xf8] sm:$0xf]
    %v3593 = vld [vmem:[%s3529 + $0xfc] sm:$0xf]
    %s3594 = scalar_lea.vmem %s13, 1
    %v3595 = vld [vmem:[%s3594] sm:$0x1]
    %v3597 = vperm.slane %v3595, 0
    %v3663 = vunpack.c.l.b16 %v3530
    %v3664 = vunpack.c.l.b16 %v3531
    %v3665 = vunpack.c.l.b16 %v3532
    %v3666 = vunpack.c.l.b16 %v3533
    %v3667 = vunpack.c.l.b16 %v3534
    %v3668 = vunpack.c.l.b16 %v3535
    %v3669 = vunpack.c.l.b16 %v3536
    %v3670 = vunpack.c.l.b16 %v3537
    %v3671 = vunpack.c.l.b16 %v3538
    %v3672 = vunpack.c.l.b16 %v3539
    %v3673 = vunpack.c.l.b16 %v3540
    %v3674 = vunpack.c.l.b16 %v3541
    %v3675 = vunpack.c.l.b16 %v3542
    %v3676 = vunpack.c.l.b16 %v3543
    %v3677 = vunpack.c.l.b16 %v3544
    %v3678 = vunpack.c.l.b16 %v3545
    %v3679 = vunpack.c.l.b16 %v3546
    %v3680 = vunpack.c.l.b16 %v3547
    %v3681 = vunpack.c.l.b16 %v3548
    %v3682 = vunpack.c.l.b16 %v3549
    %v3683 = vunpack.c.l.b16 %v3550
    %v3684 = vunpack.c.l.b16 %v3551
    %v3685 = vunpack.c.l.b16 %v3552
    %v3686 = vunpack.c.l.b16 %v3553
    %v3687 = vunpack.c.l.b16 %v3554
    %v3688 = vunpack.c.l.b16 %v3555
    %v3689 = vunpack.c.l.b16 %v3556
    %v3690 = vunpack.c.l.b16 %v3557
    %v3691 = vunpack.c.l.b16 %v3558
    %v3692 = vunpack.c.l.b16 %v3559
    %v3693 = vunpack.c.l.b16 %v3560
    %v3694 = vunpack.c.l.b16 %v3561
    %v3695 = vunpack.c.l.b16 %v3562
    %v3696 = vunpack.c.l.b16 %v3563
    %v3697 = vunpack.c.l.b16 %v3564
    %v3698 = vunpack.c.l.b16 %v3565
    %v3699 = vunpack.c.l.b16 %v3566
    %v3700 = vunpack.c.l.b16 %v3567
    %v3701 = vunpack.c.l.b16 %v3568
    %v3702 = vunpack.c.l.b16 %v3569
    %v3703 = vunpack.c.l.b16 %v3570
    %v3704 = vunpack.c.l.b16 %v3571
    %v3705 = vunpack.c.l.b16 %v3572
    %v3706 = vunpack.c.l.b16 %v3573
    %v3707 = vunpack.c.l.b16 %v3574
    %v3708 = vunpack.c.l.b16 %v3575
    %v3709 = vunpack.c.l.b16 %v3576
    %v3710 = vunpack.c.l.b16 %v3577
    %v3711 = vunpack.c.l.b16 %v3578
    %v3712 = vunpack.c.l.b16 %v3579
    %v3713 = vunpack.c.l.b16 %v3580
    %v3714 = vunpack.c.l.b16 %v3581
    %v3715 = vunpack.c.l.b16 %v3582
    %v3716 = vunpack.c.l.b16 %v3583
    %v3717 = vunpack.c.l.b16 %v3584
    %v3718 = vunpack.c.l.b16 %v3585
    %v3719 = vunpack.c.l.b16 %v3586
    %v3720 = vunpack.c.l.b16 %v3587
    %v3721 = vunpack.c.l.b16 %v3588
    %v3722 = vunpack.c.l.b16 %v3589
    %v3723 = vunpack.c.l.b16 %v3590
    %v3724 = vunpack.c.l.b16 %v3591
    %v3725 = vunpack.c.l.b16 %v3592
    %v3726 = vunpack.c.l.b16 %v3593
    %v3727 = vpack.c.b16 %v3664, %v3663
    %v3728 = vpack.c.b16 %v3666, %v3665
    %v3729 = vpack.c.b16 %v3668, %v3667
    %v3730 = vpack.c.b16 %v3670, %v3669
    %v3731 = vpack.c.b16 %v3672, %v3671
    %v3732 = vpack.c.b16 %v3674, %v3673
    %v3733 = vpack.c.b16 %v3676, %v3675
    %v3734 = vpack.c.b16 %v3678, %v3677
    %v3735 = vpack.c.b16 %v3680, %v3679
    %v3736 = vpack.c.b16 %v3682, %v3681
    %v3737 = vpack.c.b16 %v3684, %v3683
    %v3738 = vpack.c.b16 %v3686, %v3685
    %v3739 = vpack.c.b16 %v3688, %v3687
    %v3740 = vpack.c.b16 %v3690, %v3689
    %v3741 = vpack.c.b16 %v3692, %v3691
    %v3742 = vpack.c.b16 %v3694, %v3693
    %v3743 = vpack.c.b16 %v3696, %v3695
    %v3744 = vpack.c.b16 %v3698, %v3697
    %v3745 = vpack.c.b16 %v3700, %v3699
    %v3746 = vpack.c.b16 %v3702, %v3701
    %v3747 = vpack.c.b16 %v3704, %v3703
    %v3748 = vpack.c.b16 %v3706, %v3705
    %v3749 = vpack.c.b16 %v3708, %v3707
    %v3750 = vpack.c.b16 %v3710, %v3709
    %v3751 = vpack.c.b16 %v3712, %v3711
    %v3752 = vpack.c.b16 %v3714, %v3713
    %v3753 = vpack.c.b16 %v3716, %v3715
    %v3754 = vpack.c.b16 %v3718, %v3717
    %v3755 = vpack.c.b16 %v3720, %v3719
    %v3756 = vpack.c.b16 %v3722, %v3721
    %v3757 = vpack.c.b16 %v3724, %v3723
    %v3758 = vpack.c.b16 %v3726, %v3725
    %3791 = vmatpush.bf16.msra.mxu0 %v3734
    %3792 = vmatpush.bf16.msra.mxu0 %v3733
    %3793 = vmatpush.bf16.msra.mxu0 %v3732
    %3794 = vmatpush.bf16.msra.mxu0 %v3731
    %3795 = vmatpush.bf16.msra.mxu0 %v3730
    %3796 = vmatpush.bf16.msra.mxu0 %v3729
    %3797 = vmatpush.bf16.msra.mxu0 %v3728
    %3798 = vmatpush.bf16.msra.mxu0 %v3727
    %3799 = vmatmul.bf16.gmra.mxu0 %v3525
    %v3800 = vpop.f32.mrf.mxu0
    %v3801 = vadd.f32 %v3597, %v3800
    %v3802 = vpop.f32.mrf.mxu0
    %v3803 = vadd.f32 %v3597, %v3802
    %3804 = vdwg.mxu0
    %3805 = vmatpush.bf16.msra.mxu0 %v3742
    %3806 = vmatpush.bf16.msra.mxu0 %v3741
    %3807 = vmatpush.bf16.msra.mxu0 %v3740
    %3808 = vmatpush.bf16.msra.mxu0 %v3739
    %3809 = vmatpush.bf16.msra.mxu0 %v3738
    %3810 = vmatpush.bf16.msra.mxu0 %v3737
    %3811 = vmatpush.bf16.msra.mxu0 %v3736
    %3812 = vmatpush.bf16.msra.mxu0 %v3735
    %3813 = vmatmul.bf16.gmra.mxu0 %v3526
    %v3814 = vpop.f32.mrf.mxu0
    %v3815 = vadd.f32 %v3801, %v3814
    %v3816 = vpop.f32.mrf.mxu0
    %v3817 = vadd.f32 %v3803, %v3816
    %3818 = vdwg.mxu0
    %3819 = vmatpush.bf16.msra.mxu0 %v3750
    %3820 = vmatpush.bf16.msra.mxu0 %v3749
    %3821 = vmatpush.bf16.msra.mxu0 %v3748
    %3822 = vmatpush.bf16.msra.mxu0 %v3747
    %3823 = vmatpush.bf16.msra.mxu0 %v3746
    %3824 = vmatpush.bf16.msra.mxu0 %v3745
    %3825 = vmatpush.bf16.msra.mxu0 %v3744
    %3826 = vmatpush.bf16.msra.mxu0 %v3743
    %3827 = vmatmul.bf16.gmra.mxu0 %v3527
    %v3828 = vpop.f32.mrf.mxu0
    %v3829 = vadd.f32 %v3815, %v3828
    %v3830 = vpop.f32.mrf.mxu0
    %v3831 = vadd.f32 %v3817, %v3830
    %3832 = vdwg.mxu0
    %3833 = vmatpush.bf16.msra.mxu0 %v3758
    %3834 = vmatpush.bf16.msra.mxu0 %v3757
    %3835 = vmatpush.bf16.msra.mxu0 %v3756
    %3836 = vmatpush.bf16.msra.mxu0 %v3755
    %3837 = vmatpush.bf16.msra.mxu0 %v3754
    %3838 = vmatpush.bf16.msra.mxu0 %v3753
    %3839 = vmatpush.bf16.msra.mxu0 %v3752
    %3840 = vmatpush.bf16.msra.mxu0 %v3751
    %3841 = vmatmul.bf16.gmra.mxu0 %v3528
    %v3842 = vpop.f32.mrf.mxu0
    %v3843 = vadd.f32 %v3829, %v3842
    %v3844 = vpop.f32.mrf.mxu0
    %v3845 = vadd.f32 %v3831, %v3844
    %3846 = vdwg.mxu0
    %v3847 = vadd.f32 %v2910, %v3843
    %v3848 = vadd.f32 %v2911, %v3845
    %s3849 = scalar_lea.vmem %s14, 1
    %v3850 = vld [vmem:[%s3849] sm:$0x1]
    %s3851 = scalar_lea.vmem %s15, 1
    %v3852 = vld [vmem:[%s3851] sm:$0x1]
    %3853 = vadd.xlane.f32.xlu0 %v3847
    %v3854 = vpop.xlane.xlu0 %3853
    %3855 = vadd.xlane.f32.xlu0 %v3848
    %v3856 = vpop.xlane.xlu0 %3855
    %v3857 = vmul.f32 %v3854, %v121
    %v3858 = vmul.f32 %v3856, %v121
    %v3859 = vmul.f32 %v3847, %v3847
    %v3860 = vmul.f32 %v3848, %v3848
    %3861 = vadd.xlane.f32.xlu0 %v3859
    %v3862 = vpop.xlane.xlu0 %3861
    %3863 = vadd.xlane.f32.xlu0 %v3860
    %v3864 = vpop.xlane.xlu0 %3863
    %v3865 = vmul.f32 %v3862, %v121
    %v3866 = vmul.f32 %v3864, %v121
    %v3867 = vmul.f32 %v3857, %v3857
    %v3868 = vmul.f32 %v3858, %v3858
    %v3869 = vsub.f32 %v3865, %v3867
    %v3870 = vsub.f32 %v3866, %v3868
    %v3871 = vsub.f32 %v3847, %v3857
    %v3872 = vsub.f32 %v3848, %v3858
    %v3873 = vadd.f32 %v3869, 1e-12
    %v3874 = vadd.f32 %v3870, 1e-12
    %v3875 = vrsqrt.pop %v3873
    %v3876 = vmul.f32 %v3875, %v3873
    %v3877 = vmul.f32 %v3876, %v3875
    %v3878 = vmul.f32 0.5, %v3877
    %v3879 = vsub.f32 1.5, %v3878
    %v3880 = vmul.f32 %v3875, %v3879
    %vm3881 = vweird.f32 %v3873
    %vm3882 = vweird.f32 %v3875
    %vm3883 = vmor %vm3881, %vm3882
    %v3884 = vsel %vm3883, %v3875, %v3880
    %v3885 = vrsqrt.pop %v3874
    %v3886 = vmul.f32 %v3885, %v3874
    %v3887 = vmul.f32 %v3886, %v3885
    %v3888 = vmul.f32 0.5, %v3887
    %v3889 = vsub.f32 1.5, %v3888
    %v3890 = vmul.f32 %v3885, %v3889
    %vm3891 = vweird.f32 %v3874
    %vm3892 = vweird.f32 %v3885
    %vm3893 = vmor %vm3891, %vm3892
    %v3894 = vsel %vm3893, %v3885, %v3890
    %v3895 = vmul.f32 %v3871, %v3884
    %v3896 = vmul.f32 %v3872, %v3894
    %v3898 = vperm.slane %v3850, 0
    %v3900 = vmul.f32 %v3895, %v3898
    %v3901 = vmul.f32 %v3896, %v3898
    %v3903 = vperm.slane %v3852, 0
    %v3905 = vadd.f32 %v3900, %v3903
    %v3906 = vadd.f32 %v3901, %v3903
    %v3907 = vpack.c.bf16 %v3906, %v3905
    %v3908 = vld [vmem:[%s16] sm:$0xf]
    %v3909 = vld [vmem:[%s16 + $0x4] sm:$0xf]
    %v3910 = vld [vmem:[%s16 + $0x8] sm:$0xf]
    %v3911 = vld [vmem:[%s16 + $0xc] sm:$0xf]
    %v3912 = vld [vmem:[%s16 + $0x10] sm:$0xf]
    %v3913 = vld [vmem:[%s16 + $0x14] sm:$0xf]
    %v3914 = vld [vmem:[%s16 + $0x18] sm:$0xf]
    %v3915 = vld [vmem:[%s16 + $0x1c] sm:$0xf]
    %v3916 = vld [vmem:[%s16 + $0x20] sm:$0xf]
    %v3917 = vld [vmem:[%s16 + $0x24] sm:$0xf]
    %v3918 = vld [vmem:[%s16 + $0x28] sm:$0xf]
    %v3919 = vld [vmem:[%s16 + $0x2c] sm:$0xf]
    %v3920 = vld [vmem:[%s16 + $0x30] sm:$0xf]
    %v3921 = vld [vmem:[%s16 + $0x34] sm:$0xf]
    %v3922 = vld [vmem:[%s16 + $0x38] sm:$0xf]
    %v3923 = vld [vmem:[%s16 + $0x3c] sm:$0xf]
    %v3924 = vld [vmem:[%s17] sm:$0x1]
    %v3926 = vperm.slane %v3924, 0
    %v3944 = vunpack.c.l.b16 %v3908
    %v3945 = vunpack.c.l.b16 %v3909
    %v3946 = vunpack.c.l.b16 %v3910
    %v3947 = vunpack.c.l.b16 %v3911
    %v3948 = vunpack.c.l.b16 %v3912
    %v3949 = vunpack.c.l.b16 %v3913
    %v3950 = vunpack.c.l.b16 %v3914
    %v3951 = vunpack.c.l.b16 %v3915
    %v3952 = vunpack.c.l.b16 %v3916
    %v3953 = vunpack.c.l.b16 %v3917
    %v3954 = vunpack.c.l.b16 %v3918
    %v3955 = vunpack.c.l.b16 %v3919
    %v3956 = vunpack.c.l.b16 %v3920
    %v3957 = vunpack.c.l.b16 %v3921
    %v3958 = vunpack.c.l.b16 %v3922
    %v3959 = vunpack.c.l.b16 %v3923
    %v3960 = vpack.c.b16 %v3945, %v3944
    %v3961 = vpack.c.b16 %v3947, %v3946
    %v3962 = vpack.c.b16 %v3949, %v3948
    %v3963 = vpack.c.b16 %v3951, %v3950
    %v3964 = vpack.c.b16 %v3953, %v3952
    %v3965 = vpack.c.b16 %v3955, %v3954
    %v3966 = vpack.c.b16 %v3957, %v3956
    %v3967 = vpack.c.b16 %v3959, %v3958
    %3976 = vmatpush.bf16.msra.mxu0 %v3967
    %3977 = vmatpush.bf16.msra.mxu0 %v3966
    %3978 = vmatpush.bf16.msra.mxu0 %v3965
    %3979 = vmatpush.bf16.msra.mxu0 %v3964
    %3980 = vmatpush.bf16.msra.mxu0 %v3963
    %3981 = vmatpush.bf16.msra.mxu0 %v3962
    %3982 = vmatpush.bf16.msra.mxu0 %v3961
    %3983 = vmatpush.bf16.msra.mxu0 %v3960
    %3984 = vmatmul.bf16.gmra.mxu0 %v3907
    %v3985 = vpop.f32.mrf.mxu0
    %v3986 = vadd.f32 %v3926, %v3985
    %v3987 = vpop.f32.mrf.mxu0
    %v3988 = vadd.f32 %v3926, %v3987
    %3989 = vdwg.mxu0
    %3990 = vst [vmem:[%s18] sm:$0xff] %v3986
    %3991 = vst [vmem:[%s18 + $0x8] sm:$0xff] %v3988
    // Predicated region
    $region86: #{color_shape_forward.1} parent=1 // pred_check
      _
    $region87: #{color_shape_forward.1} parent=1 // pred_check_branch
      %3993 = sbr.rel (0) target = $region89
    $region88: #{color_shape_forward.1} parent=1 // pred_region
      _
    $region89: #{color_shape_forward.1} parent=1 // pred_fallthru
      _
    // Predicated region
    $region90: #{color_shape_forward.1} parent=1 // pred_check
      _
    $region91: #{color_shape_forward.1} parent=1 // pred_check_branch
      %3995 = sbr.rel (0) target = $region93
    $region92: #{color_shape_forward.1} parent=1 // pred_region
      _
    $region93: #{color_shape_forward.1} parent=1 // pred_fallthru
      _
    %3996 = vsyncpa [#allocation3], 1
    %3997 = vsyncpa [#allocation5], 1

</llo_original>
